<compile_context>
chip_gen: v5e
topology: v5e:2x2
jax: 0.10.0
libtpu: 0.0.40
codegen_flags: <defaults>
</compile_context>

<pallas_src>
import functools

import jax
import jax.numpy as jnp
from jax.experimental import pallas as pl
from jax.experimental.pallas import tpu as pltpu


def _round_up(x, m):
    return ((x + m - 1) // m) * m


def _pick_seq_tile(L, cap=512):
    """Largest L-tile (<= cap) that divides L; falls back to L itself."""
    if L <= cap:
        return L
    for t in range(cap, 7, -8):
        if L % t == 0:
            return t
    return L


# ----------------------------------------------------------------------------
# Kernel 1: tiled matmul + bias + optional ReLU (conv lowered to im2col matmul)
# ----------------------------------------------------------------------------
def _matmul_kernel(x_ref, w_ref, b_ref, o_ref, *, activation):
    y = jnp.dot(x_ref[...], w_ref[...], preferred_element_type=jnp.float32)
    y = y + b_ref[...]
    if activation == "relu":
        y = jnp.maximum(y, 0.0)
    o_ref[...] = y.astype(o_ref.dtype)


def pallas_matmul(x, w, b, activation=None, tile_m=512, out_dtype=jnp.float32):
    """y = act(x @ w + b), tiled over M on a 'parallel' grid axis (megacore)."""
    M, K = x.shape
    N = w.shape[1]
    M_pad = _round_up(M, 8)
    tile = min(tile_m, M_pad)
    # make sure v7x's second TensorCore gets work whenever possible
    if M_pad // tile < 2 and M_pad >= 16:
        tile = _round_up(M_pad // 2, 8)
    M_pad = _round_up(M_pad, tile)
    if M_pad != M:
        x = jnp.pad(x, ((0, M_pad - M), (0, 0)))
    kern = functools.partial(_matmul_kernel, activation=activation)
    y = pl.pallas_call(
        kern,
        out_shape=jax.ShapeDtypeStruct((M_pad, N), out_dtype),
        grid=(M_pad // tile,),
        in_specs=[pl.BlockSpec((tile, K), lambda i: (i, 0)),
                  pl.BlockSpec((K, N), lambda i: (0, 0)),     # weight resident
                  pl.BlockSpec((1, N), lambda i: (0, 0))],
        out_specs=pl.BlockSpec((tile, N), lambda i: (i, 0)),
        compiler_params=pltpu.CompilerParams(dimension_semantics=("parallel",)),
    )(x, w, b)
    return y[:M]


def conv_encoder(x, p):
    """3x3 conv, stride 2, pad 1, + ReLU.  x:(B,Cin,H,W) -> (B, Ho*Wo, C_pad) bf16."""
    B, Cin, H, W = x.shape
    Ho, Wo = H // 2, W // 2
    xp = jnp.pad(x, ((0, 0), (0, 0), (1, 1), (1, 1)))
    cols = []
    # TODO(synk): fold the 9-tap im2col into the Pallas kernel (grid over taps)
    # to avoid the HBM round-trip at realistic channel counts.
    for ci in range(Cin):
        for dy in range(3):
            for dx in range(3):
                cols.append(xp[:, ci, dy:dy + H:2, dx:dx + W:2])   # (B,Ho,Wo)
    patches = jnp.stack(cols, axis=-1).reshape(B * Ho * Wo, Cin * 9)
    Kp = p["w"].shape[0]                                          # 128-padded K
    patches = jnp.pad(patches, ((0, 0), (0, Kp - Cin * 9))).astype(jnp.bfloat16)
    y = pallas_matmul(patches, p["w"], p["b"], activation="relu",
                      out_dtype=jnp.bfloat16)                     # (B*Ho*Wo, C_pad)
    return y.reshape(B, Ho * Wo, -1)                              # channel-last


# ----------------------------------------------------------------------------
# Kernel 2: fused encoder head, streamed over L
#   phase 0: mean-pool accumulate -> init-hidden / query projections
#   phase 1: per-tile K/V projection + online-softmax dual cross attention
#            -> context_proj
# ----------------------------------------------------------------------------
def _encode_head_kernel(fp_ref, fh_ref,
                        ipw_ref, ipb_ref, ihw_ref, ihb_ref,
                        wqp_ref, bqp_ref, wqh_ref, bqh_ref,
                        wkvh_ref, bkvh_ref, wkvp_ref, bkvp_ref,
                        cwh_ref, cwc_ref, cb_ref,
                        hid_ref, ctx_ref,
                        pool_scr, q_scr, h0_scr, m_scr, s_scr, acc_scr,
                        *, seq_len, attn_dim, attn_pad, bps, rows_out):
    phase = pl.program_id(0)
    l = pl.program_id(1)
    nl = pl.num_programs(1)
    B = bps
    Ap = attn_pad

    fp = fp_ref[...]                              # (B, tl, Cp) bf16
    fh = fh_ref[...]

    # ---------------- phase 0: mean pool accumulation ----------------------
    @pl.when((phase == 0) & (l == 0))
    def _():
        pool_scr[...] = jnp.zeros_like(pool_scr)

    @pl.when(phase == 0)
    def _():
        sp = jnp.sum(fp.astype(jnp.float32), axis=1)              # (B, Cp)
        sh = jnp.sum(fh.astype(jnp.float32), axis=1)
        pool_scr[...] += jnp.concatenate([sp, sh], axis=0)        # (2B, Cp)

    @pl.when((phase == 0) & (l == nl - 1))
    def _():
        pool = (pool_scr[...] * (1.0 / float(seq_len))).astype(jnp.bfloat16)
        pool_p, pool_h = pool[:B], pool[B:]
        q_p = jnp.dot(pool_p, wqp_ref[...],
                      preferred_element_type=jnp.float32) + bqp_ref[...]
        q_h = jnp.dot(pool_h, wqh_ref[...],
                      preferred_element_type=jnp.float32) + bqh_ref[...]
        q_scr[...] = jnp.concatenate([q_p, q_h], axis=0)          # (2B, Ap)
        h0_p = jnp.dot(pool_p, ipw_ref[...],
                       preferred_element_type=jnp.float32) + ipb_ref[...]
        h0_h = jnp.dot(pool_h, ihw_ref[...],
                       preferred_element_type=jnp.float32) + ihb_ref[...]
        h0_scr[...] = jnp.concatenate([h0_p, h0_h], axis=0)       # (2B, Hp)
        m_scr[...] = jnp.full(m_scr.shape, -1e30, jnp.float32)
        s_scr[...] = jnp.zeros_like(s_scr)
        acc_scr[...] = jnp.zeros_like(acc_scr)

    # ---------------- phase 1: streamed K/V + online softmax ---------------
    @pl.when(phase == 1)
    def _():
        tl, Cp = fp.shape[1], fp.shape[2]
        kv_h = jnp.dot(fh.reshape(B * tl, Cp), wkvh_ref[...],
                       preferred_element_type=jnp.float32) + bkvh_ref[...]
        kv_h = kv_h.reshape(B, tl, 2 * Ap)
        kv_p = jnp.dot(fp.reshape(B * tl, Cp), wkvp_ref[...],
                       preferred_element_type=jnp.float32) + bkvp_ref[...]
        kv_p = kv_p.reshape(B, tl, 2 * Ap)
        # pme queries attend over hme K/V; hme queries attend over pme K/V.
        k = jnp.concatenate([kv_h[:, :, :Ap], kv_p[:, :, :Ap]], axis=0)  # (2B,tl,Ap)
        v = jnp.concatenate([kv_h[:, :, Ap:], kv_p[:, :, Ap:]], axis=0)

        scale = float(attn_dim) ** -0.5
        q3 = q_scr[...].astype(jnp.bfloat16)[:, None, :]                 # (2B,1,Ap)
        s = jnp.einsum("bqd,bkd->bqk", q3, k.astype(jnp.bfloat16),
                       preferred_element_type=jnp.float32)[:, 0, :] * scale  # (2B,tl)

        m_new = jnp.maximum(m_scr[...], jnp.max(s, axis=-1, keepdims=True))
        alpha = jnp.exp(m_scr[...] - m_new)
        p = jnp.exp(s - m_new)
        s_scr[...] = alpha * s_scr[...] + jnp.sum(p, axis=-1, keepdims=True)
        ctx_part = jnp.einsum("bqk,bkd->bqd",
                              p.astype(jnp.bfloat16)[:, None, :],
                              v.astype(jnp.bfloat16),
                              preferred_element_type=jnp.float32)[:, 0, :]
        acc_scr[...] = alpha * acc_scr[...] + ctx_part
        m_scr[...] = m_new

    @pl.when((phase == 1) & (l == nl - 1))
    def _():
        ctx = acc_scr[...] * pl.reciprocal(s_scr[...], approx=True)      # (2B, Ap)
        h0 = h0_scr[...]
        hid = (jnp.dot(h0.astype(jnp.bfloat16), cwh_ref[...],
                       preferred_element_type=jnp.float32)
               + jnp.dot(ctx.astype(jnp.bfloat16), cwc_ref[...],
                         preferred_element_type=jnp.float32)
               + cb_ref[...])
        pad = rows_out - 2 * B
        if pad > 0:                                   # pad decode batch to 8 rows
            hid = jnp.concatenate(
                [hid, jnp.zeros((pad, hid.shape[1]), hid.dtype)], axis=0)
            ctx = jnp.concatenate(
                [ctx, jnp.zeros((pad, ctx.shape[1]), ctx.dtype)], axis=0)
        hid_ref[...] = hid.astype(hid_ref.dtype)
        ctx_ref[...] = ctx.astype(ctx_ref.dtype)


def encode_head(feat_p, feat_h, head, cfg, rows_out):
    B, L, Cp = feat_p.shape
    Hp, Ap = cfg["hidden_p"], cfg["attn_p"]
    tile_l = _pick_seq_tile(L)
    Lt = L // tile_l

    weights = [head["init_p_w"], head["init_p_b"], head["init_h_w"], head["init_h_b"],
               head["wq_p"], head["bq_p"], head["wq_h"], head["bq_h"],
               head["wkv_h"], head["bkv_h"], head["wkv_p"], head["bkv_p"],
               head["ctx_w_h"], head["ctx_w_c"], head["ctx_b"]]
    const2 = lambda p, l: (0, 0)
    feat_spec = pl.BlockSpec((B, tile_l, Cp), lambda p, l: (0, l, 0))
    w_specs = [pl.BlockSpec(w.shape, const2) for w in weights]

    kern = functools.partial(_encode_head_kernel, seq_len=L, attn_dim=cfg["attn"],
                             attn_pad=Ap, bps=B, rows_out=rows_out)
    return pl.pallas_call(
        kern,
        out_shape=(jax.ShapeDtypeStruct((rows_out, Hp), jnp.float32),
                   jax.ShapeDtypeStruct((rows_out, Ap), jnp.float32)),
        grid=(2, Lt),                                 # (phase, L-tile)
        in_specs=[feat_spec, feat_spec] + w_specs,
        out_specs=(pl.BlockSpec((rows_out, Hp), const2),
                   pl.BlockSpec((rows_out, Ap), const2)),
        scratch_shapes=[pltpu.VMEM((2 * B, Cp), jnp.float32),   # pool sums
                        pltpu.VMEM((2 * B, Ap), jnp.float32),   # queries
                        pltpu.VMEM((2 * B, Hp), jnp.float32),   # init hidden
                        pltpu.VMEM((2 * B, 1), jnp.float32),    # online max
                        pltpu.VMEM((2 * B, 1), jnp.float32),    # online denom
                        pltpu.VMEM((2 * B, Ap), jnp.float32)],  # online acc
        compiler_params=pltpu.CompilerParams(
            dimension_semantics=("arbitrary", "arbitrary")),
    )(feat_p, feat_h, *weights)


# ----------------------------------------------------------------------------
# Kernel 3: fully-internalized autoregressive GRU decoder (both streams, one call)
# ----------------------------------------------------------------------------
def _decoder_kernel(hidden0_ref, tok_ref, tf_ref,
                    emb_wih_ref, whh_ref, bih_ref, bhh_ref, fcw_ref, fcb_ref,
                    logits_ref,
                    *, nsteps, vocab, hid_pad):
    rows = hidden0_ref.shape[0]
    Vp = logits_ref.shape[-1]
    Hp = hid_pad
    lane = jax.lax.broadcasted_iota(jnp.int32, (rows, Vp), 1)   # hoisted

    def step(t, carry):
        h, prev_tok = carry                                      # f32 (rows,Hp), i32 (rows,1)
        onehot = (lane == prev_tok).astype(jnp.bfloat16)         # in-kernel one-hot

        # embedding pre-fused into GRU input weights (emb @ w_ih)
        gi = jnp.dot(onehot, emb_wih_ref[...],
                     preferred_element_type=jnp.float32) + bih_ref[...]
        gh = jnp.dot(h.astype(jnp.bfloat16), whh_ref[...],
                     preferred_element_type=jnp.float32) + bhh_ref[...]

        r = jax.nn.sigmoid(gi[:, :Hp] + gh[:, :Hp])              # 128-lane aligned slices
        z = jax.nn.sigmoid(gi[:, Hp:2 * Hp] + gh[:, Hp:2 * Hp])
        n = jnp.tanh(gi[:, 2 * Hp:] + r * gh[:, 2 * Hp:])
        h_new = (1.0 - z) * n + z * h

        logits = jnp.dot(h_new.astype(jnp.bfloat16), fcw_ref[...],
                         preferred_element_type=jnp.float32) + fcb_ref[...]
        logits_ref[t] = logits.astype(logits_ref.dtype)

        # greedy argmax over the unpadded vocab (first-argmax tie break)
        masked = jnp.where(lane < vocab, logits, -1e30)
        mx = jnp.max(masked, axis=-1, keepdims=True)
        amax = jnp.min(jnp.where(masked >= mx, lane, Vp), axis=-1, keepdims=True)

        use_tf = tf_ref[t]                                       # (rows,1) int32
        teach = tok_ref[t + 1]                                   # (rows,1) int32
        next_tok = jnp.where(use_tf > 0, teach, amax)
        return (h_new, next_tok)

    jax.lax.fori_loop(0, nsteps, step, (hidden0_ref[...], tok_ref[0]))


def fused_decode(hidden0, tok_arr, tf_arr, dec, cfg):
    rows, Hp = hidden0.shape
    T = tok_arr.shape[0]
    nsteps = T - 1
    Vp = cfg["vocab_p"]
    kern = functools.partial(_decoder_kernel, nsteps=nsteps,
                             vocab=cfg["vocab"], hid_pad=Hp)
    vmem = pl.BlockSpec(memory_space=pltpu.MemorySpace.VMEM)
    return pl.pallas_call(
        kern,
        out_shape=jax.ShapeDtypeStruct((nsteps, rows, Vp), jnp.float32),
        in_specs=[vmem] * 9,
        out_specs=vmem,
    )(hidden0, tok_arr, tf_arr,
      dec["emb_wih"], dec["w_hh"], dec["b_ih"], dec["b_hh"],
      dec["fc_w"], dec["fc_b"])


# ----------------------------------------------------------------------------
# DLAModel forward
# ----------------------------------------------------------------------------
def dla_forward(params, images_pme, images_hme, tgt_seq_pme, tgt_seq_hme,
                rng_key, *, cfg, teacher_forcing_ratio=0.5):
    B, T = tgt_seq_pme.shape
    vocab, attn = cfg["vocab"], cfg["attn"]
    rows = _round_up(2 * B, 8)                       # padded decode batch

    feat_p = conv_encoder(images_pme, params["enc_pme"])         # (B, L, C_p) bf16
    feat_h = conv_encoder(images_hme, params["enc_hme"])

    hidden0, ctx = encode_head(feat_p, feat_h, params["head"], cfg, rows)
    # rows [0:B] -> pme stream, rows [B:2B] -> hme stream, rest zero padding.

    # int32 token / teacher-forcing arrays (tiny; one-hots built in-kernel)
    tokens = jnp.concatenate([tgt_seq_pme, tgt_seq_hme], axis=0).astype(jnp.int32)
    tokens = jnp.pad(tokens, ((0, rows - 2 * B), (0, 0)))        # (rows, T)
    tok_arr = jnp.transpose(tokens)[:, :, None]                  # (T, rows, 1)

    # one teacher-forcing coin per step per stream (matches reference semantics)
    tf_flags = (jax.random.uniform(rng_key, (2, T - 1))
                < teacher_forcing_ratio).astype(jnp.int32)
    tf_rows = jnp.concatenate(
        [jnp.broadcast_to(tf_flags[0:1], (B, T - 1)),
         jnp.broadcast_to(tf_flags[1:2], (B, T - 1)),
         jnp.zeros((rows - 2 * B, T - 1), jnp.int32)], axis=0)   # (rows, T-1)
    tf_arr = jnp.transpose(tf_rows)[:, :, None]                  # (T-1, rows, 1)

    logits_all = fused_decode(hidden0, tok_arr, tf_arr, params["dec"], cfg)
    logits_all = jnp.transpose(logits_all, (1, 0, 2))[:2 * B, :, :vocab]
    logits_pme, logits_hme = logits_all[:B], logits_all[B:2 * B]
    ctx_p2h = ctx[:B, :attn]
    ctx_h2p = ctx[B:2 * B, :attn]
    return logits_pme, logits_hme, ctx_p2h, ctx_h2p


# ----------------------------------------------------------------------------
# Deterministic parameter init (weights built at logical size, zero-padded to
# lane-dense 128-multiples; matmul weights stored in bf16, biases in f32).
# ----------------------------------------------------------------------------
def init_params(key, cfg, in_ch):
    vocab, emb, enc, attn, hid = (cfg["vocab"], cfg["emb"], cfg["enc"],
                                  cfg["attn"], cfg["hidden"])
    V_p, E_p, C_p, A_p, H_p = (cfg["vocab_p"], cfg["emb_p"], cfg["enc_p"],
                               cfg["attn_p"], cfg["hidden_p"])
    K_p = _round_up(in_ch * 9, 128)
    ks = iter(jax.random.split(key, 64))

    def nrm(shape, scale=0.05):
        return scale * jax.random.normal(next(ks), shape, jnp.float32)

    def pad2(w, rows, cols):
        return jnp.zeros((rows, cols), jnp.float32).at[:w.shape[0], :w.shape[1]].set(w)

    def pad_bias(b, cols):
        return jnp.zeros((1, cols), jnp.float32).at[0, :b.shape[0]].set(b)

    def pad_gru(w, in_dim, in_pad, h, h_pad):
        out = jnp.zeros((in_pad, 3 * h_pad), jnp.float32)
        for g in range(3):
            out = out.at[:in_dim, g * h_pad:g * h_pad + h].set(w[:, g * h:(g + 1) * h])
        return out

    def pad_gru_bias(b, h, h_pad):
        out = jnp.zeros((1, 3 * h_pad), jnp.float32)
        for g in range(3):
            out = out.at[0, g * h_pad:g * h_pad + h].set(b[g * h:(g + 1) * h])
        return out

    def enc_params():
        w = nrm((enc, in_ch, 3, 3))                      # PyTorch conv layout
        w2 = w.reshape(enc, in_ch * 9).T                 # (Cin*9, enc)
        return {"w": pad2(w2, K_p, C_p).astype(jnp.bfloat16),
                "b": pad_bias(jnp.zeros((enc,)), C_p)}

    def kv_pair():                                       # fused [K | V] projection
        wk, wv = nrm((enc, attn)), nrm((enc, attn))
        w = jnp.zeros((C_p, 2 * A_p), jnp.float32)
        w = w.at[:enc, :attn].set(wk)
        w = w.at[:enc, A_p:A_p + attn].set(wv)
        return w.astype(jnp.bfloat16), jnp.zeros((1, 2 * A_p), jnp.float32)

    head = {
        "init_p_w": pad2(nrm((enc, hid)), C_p, H_p).astype(jnp.bfloat16),
        "init_p_b": pad_bias(jnp.zeros((hid,)), H_p),
        "init_h_w": pad2(nrm((enc, hid)), C_p, H_p).astype(jnp.bfloat16),
        "init_h_b": pad_bias(jnp.zeros((hid,)), H_p),
        "wq_p": pad2(nrm((enc, attn)), C_p, A_p).astype(jnp.bfloat16),
        "bq_p": pad_bias(jnp.zeros((attn,)), A_p),
        "wq_h": pad2(nrm((enc, attn)), C_p, A_p).astype(jnp.bfloat16),
        "bq_h": pad_bias(jnp.zeros((attn,)), A_p),
    }
    head["wkv_h"], head["bkv_h"] = kv_pair()
    head["wkv_p"], head["bkv_p"] = kv_pair()
    ctx_w = nrm((hid + attn, hid))                       # shared context_proj
    head["ctx_w_h"] = pad2(ctx_w[:hid], H_p, H_p).astype(jnp.bfloat16)
    head["ctx_w_c"] = pad2(ctx_w[hid:], A_p, H_p).astype(jnp.bfloat16)
    head["ctx_b"] = pad_bias(jnp.zeros((hid,)), H_p)

    emb_tbl = pad2(nrm((vocab, emb)), V_p, E_p)
    w_ih = pad_gru(nrm((emb, 3 * hid)), emb, E_p, hid, H_p)
    dec = {
        # embedding pre-fused into the GRU input weights: (V_p, 3*H_p)
        "emb_wih": jnp.dot(emb_tbl, w_ih).astype(jnp.bfloat16),
        "w_hh": pad_gru(nrm((hid, 3 * hid)), hid, H_p, hid, H_p).astype(jnp.bfloat16),
        "b_ih": pad_gru_bias(jnp.zeros((3 * hid,)), hid, H_p),
        "b_hh": pad_gru_bias(jnp.zeros((3 * hid,)), hid, H_p),
        "fc_w": pad2(nrm((hid, vocab)), H_p, V_p).astype(jnp.bfloat16),
        "fc_b": pad_bias(jnp.zeros((vocab,)), V_p),
    }
    return {"enc_pme": enc_params(), "enc_hme": enc_params(), "head": head, "dec": dec}


# ----------------------------------------------------------------------------
if __name__ == "__main__":
    vocab_size = 20
    emb_dim, enc_dim, attn_dim, hidden_dim = 16, 64, 32, 32
    B, C_in, H, W, T = 2, 1, 16, 16, 6

    cfg = dict(vocab=vocab_size, emb=emb_dim, enc=enc_dim, attn=attn_dim, hidden=hidden_dim,
               vocab_p=_round_up(vocab_size, 128), emb_p=_round_up(emb_dim, 128),
               enc_p=_round_up(enc_dim, 128), attn_p=_round_up(attn_dim, 128),
               hidden_p=_round_up(hidden_dim, 128))

    root = jax.random.PRNGKey(0)
    k_params, k_img1, k_img2, k_seq1, k_seq2, k_tf = jax.random.split(root, 6)

    params = init_params(k_params, cfg, C_in)

    images_pme = jax.random.normal(k_img1, (B, C_in, H, W), jnp.float32)
    images_hme = jax.random.normal(k_img2, (B, C_in, H, W), jnp.float32)
    tgt_seq_pme = jax.random.randint(k_seq1, (B, T), 0, vocab_size, jnp.int32)
    tgt_seq_hme = jax.random.randint(k_seq2, (B, T), 0, vocab_size, jnp.int32)

    fwd = jax.jit(functools.partial(dla_forward, cfg=cfg, teacher_forcing_ratio=0.5))
    logits_pme, logits_hme, ctx_p, ctx_h = fwd(
        params, images_pme, images_hme, tgt_seq_pme, tgt_seq_hme, k_tf)

    jax.block_until_ready((logits_pme, logits_hme, ctx_p, ctx_h))
    assert logits_pme.shape == (B, T - 1, vocab_size)
    assert logits_hme.shape == (B, T - 1, vocab_size)
    assert ctx_p.shape == (B, attn_dim) and ctx_h.shape == (B, attn_dim)
    assert bool(jnp.all(jnp.isfinite(logits_pme))) and bool(jnp.all(jnp.isfinite(logits_hme)))
    print("KERNEL_OK")
</pallas_src>

<mosaic_0001>
module attributes {stable_mosaic.version = 11 : i64} {
  func.func @_matmul_kernel(%arg0: i32, %arg1: memref<64x128xbf16, #tpu.memory_space<vmem>>, %arg2: memref<128x128xbf16, #tpu.memory_space<vmem>>, %arg3: memref<1x128xf32, #tpu.memory_space<vmem>>, %arg4: memref<64x128xbf16, #tpu.memory_space<vmem>>) attributes {dimension_semantics = [#tpu.dimension_semantics<parallel>], iteration_bounds = array<i64: 2>, scalar_prefetch = 0 : i64, scratch_operands = 0 : i64, tpu.core_type = #tpu.core_type<tc>, window_params = [{transform_indices = @transform_0, window_bounds = array<i64: 64, 128>}, {pipeline_mode = #tpu.pipeline_mode<synchronous>, transform_indices = @transform_1, window_bounds = array<i64: 128, 128>}, {pipeline_mode = #tpu.pipeline_mode<synchronous>, transform_indices = @transform_2, window_bounds = array<i64: 1, 128>}, {transform_indices = @transform_3, window_bounds = array<i64: 64, 128>}]} {
    %c0 = arith.constant 0 : index
    %c0_0 = arith.constant 0 : index
    %0 = vector.load %arg1[%c0, %c0_0] : memref<64x128xbf16, #tpu.memory_space<vmem>>, vector<64x128xbf16>
    %c0_1 = arith.constant 0 : index
    %c0_2 = arith.constant 0 : index
    %1 = vector.load %arg2[%c0_1, %c0_2] : memref<128x128xbf16, #tpu.memory_space<vmem>>, vector<128x128xbf16>
    %cst = arith.constant dense<0.000000e+00> : vector<64x128xf32>
    %2 = tpu.matmul %0, %1, %cst {dimension_numbers = #tpu.dot_dimension_numbers<[1], [0], [0], [1], [0, 0, 1, 1], [], []>} : vector<64x128xbf16>, vector<128x128xbf16>, vector<64x128xf32> -> vector<64x128xf32>
    %c0_3 = arith.constant 0 : index
    %c0_4 = arith.constant 0 : index
    %3 = vector.load %arg3[%c0_3, %c0_4] : memref<1x128xf32, #tpu.memory_space<vmem>>, vector<1x128xf32>
    %4 = vector.broadcast %3 : vector<1x128xf32> to vector<64x128xf32>
    %5 = arith.addf %2, %4 : vector<64x128xf32>
    %cst_5 = arith.constant 0.000000e+00 : f32
    %6 = vector.broadcast %cst_5 : f32 to vector<64x128xf32>
    %7 = arith.maximumf %5, %6 : vector<64x128xf32>
    %8 = arith.truncf %7 : vector<64x128xf32> to vector<64x128xbf16>
    %c0_6 = arith.constant 0 : index
    %c0_7 = arith.constant 0 : index
    %9 = vector.load %arg4[%c0_6, %c0_7] : memref<64x128xbf16, #tpu.memory_space<vmem>>, vector<64x128xbf16>
    tpu.vector_store %arg4[%c0_6, %c0_7], %8 {strides = array<i32>} : memref<64x128xbf16, #tpu.memory_space<vmem>>, vector<64x128xbf16>,
    return
  }
  func.func @transform_0(%arg0: i32) -> (i32, i32) {
    %c0_i32 = arith.constant 0 : i32
    %c0_i32_0 = arith.constant 0 : i32
    return %arg0, %c0_i32 : i32, i32
  }
  func.func @transform_1(%arg0: i32) -> (i32, i32) {
    %c0_i32 = arith.constant 0 : i32
    %c0_i32_0 = arith.constant 0 : i32
    %c0_i32_1 = arith.constant 0 : i32
    return %c0_i32, %c0_i32_0 : i32, i32
  }
  func.func @transform_2(%arg0: i32) -> (i32, i32) {
    %c0_i32 = arith.constant 0 : i32
    %c0_i32_0 = arith.constant 0 : i32
    %c0_i32_1 = arith.constant 0 : i32
    return %c0_i32, %c0_i32_0 : i32, i32
  }
  func.func @transform_3(%arg0: i32) -> (i32, i32) {
    %c0_i32 = arith.constant 0 : i32
    %c0_i32_0 = arith.constant 0 : i32
    return %arg0, %c0_i32 : i32, i32
  }
}

module attributes {stable_mosaic.version = 11 : i64} {
  func.func @_encode_head_kernel(%arg0: i32, %arg1: i32, %arg2: memref<2x64x128xbf16, #tpu.memory_space<vmem>>, %arg3: memref<2x64x128xbf16, #tpu.memory_space<vmem>>, %arg4: memref<128x128xbf16, #tpu.memory_space<vmem>>, %arg5: memref<1x128xf32, #tpu.memory_space<vmem>>, %arg6: memref<128x128xbf16, #tpu.memory_space<vmem>>, %arg7: memref<1x128xf32, #tpu.memory_space<vmem>>, %arg8: memref<128x128xbf16, #tpu.memory_space<vmem>>, %arg9: memref<1x128xf32, #tpu.memory_space<vmem>>, %arg10: memref<128x128xbf16, #tpu.memory_space<vmem>>, %arg11: memref<1x128xf32, #tpu.memory_space<vmem>>, %arg12: memref<128x256xbf16, #tpu.memory_space<vmem>>, %arg13: memref<1x256xf32, #tpu.memory_space<vmem>>, %arg14: memref<128x256xbf16, #tpu.memory_space<vmem>>, %arg15: memref<1x256xf32, #tpu.memory_space<vmem>>, %arg16: memref<128x128xbf16, #tpu.memory_space<vmem>>, %arg17: memref<128x128xbf16, #tpu.memory_space<vmem>>, %arg18: memref<1x128xf32, #tpu.memory_space<vmem>>, %arg19: memref<8x128xf32, #tpu.memory_space<vmem>>, %arg20: memref<8x128xf32, #tpu.memory_space<vmem>>, %arg21: memref<4x128xf32, #tpu.memory_space<vmem>>, %arg22: memref<4x128xf32, #tpu.memory_space<vmem>>, %arg23: memref<4x128xf32, #tpu.memory_space<vmem>>, %arg24: memref<4x1xf32, #tpu.memory_space<vmem>>, %arg25: memref<4x1xf32, #tpu.memory_space<vmem>>, %arg26: memref<4x128xf32, #tpu.memory_space<vmem>>) attributes {dimension_semantics = [#tpu.dimension_semantics<arbitrary>, #tpu.dimension_semantics<arbitrary>], iteration_bounds = array<i64: 2, 1>, scalar_prefetch = 0 : i64, scratch_operands = 6 : i64, tpu.core_type = #tpu.core_type<tc>, window_params = [{transform_indices = @transform_0, window_bounds = array<i64: 2, 64, 128>}, {transform_indices = @transform_1, window_bounds = array<i64: 2, 64, 128>}, {pipeline_mode = #tpu.pipeline_mode<synchronous>, transform_indices = @transform_2, window_bounds = array<i64: 128, 128>}, {pipeline_mode = #tpu.pipeline_mode<synchronous>, transform_indices = @transform_3, window_bounds = array<i64: 1, 128>}, {pipeline_mode = #tpu.pipeline_mode<synchronous>, transform_indices = @transform_4, window_bounds = array<i64: 128, 128>}, {pipeline_mode = #tpu.pipeline_mode<synchronous>, transform_indices = @transform_5, window_bounds = array<i64: 1, 128>}, {pipeline_mode = #tpu.pipeline_mode<synchronous>, transform_indices = @transform_6, window_bounds = array<i64: 128, 128>}, {pipeline_mode = #tpu.pipeline_mode<synchronous>, transform_indices = @transform_7, window_bounds = array<i64: 1, 128>}, {pipeline_mode = #tpu.pipeline_mode<synchronous>, transform_indices = @transform_8, window_bounds = array<i64: 128, 128>}, {pipeline_mode = #tpu.pipeline_mode<synchronous>, transform_indices = @transform_9, window_bounds = array<i64: 1, 128>}, {pipeline_mode = #tpu.pipeline_mode<synchronous>, transform_indices = @transform_10, window_bounds = array<i64: 128, 256>}, {pipeline_mode = #tpu.pipeline_mode<synchronous>, transform_indices = @transform_11, window_bounds = array<i64: 1, 256>}, {pipeline_mode = #tpu.pipeline_mode<synchronous>, transform_indices = @transform_12, window_bounds = array<i64: 128, 256>}, {pipeline_mode = #tpu.pipeline_mode<synchronous>, transform_indices = @transform_13, window_bounds = array<i64: 1, 256>}, {pipeline_mode = #tpu.pipeline_mode<synchronous>, transform_indices = @transform_14, window_bounds = array<i64: 128, 128>}, {pipeline_mode = #tpu.pipeline_mode<synchronous>, transform_indices = @transform_15, window_bounds = array<i64: 128, 128>}, {pipeline_mode = #tpu.pipeline_mode<synchronous>, transform_indices = @transform_16, window_bounds = array<i64: 1, 128>}, {pipeline_mode = #tpu.pipeline_mode<synchronous>, transform_indices = @transform_17, window_bounds = array<i64: 8, 128>}, {pipeline_mode = #tpu.pipeline_mode<synchronous>, transform_indices = @transform_18, window_bounds = array<i64: 8, 128>}]} {
    %c0 = arith.constant 0 : index
    %c0_0 = arith.constant 0 : index
    %c0_1 = arith.constant 0 : index
    %0 = vector.load %arg2[%c0, %c0_0, %c0_1] : memref<2x64x128xbf16, #tpu.memory_space<vmem>>, vector<2x64x128xbf16>
    %c0_2 = arith.constant 0 : index
    %c0_3 = arith.constant 0 : index
    %c0_4 = arith.constant 0 : index
    %1 = vector.load %arg3[%c0_2, %c0_3, %c0_4] : memref<2x64x128xbf16, #tpu.memory_space<vmem>>, vector<2x64x128xbf16>
    %c0_i32 = arith.constant 0 : i32
    %2 = arith.cmpi eq, %arg0, %c0_i32 : i32
    %c0_i32_5 = arith.constant 0 : i32
    %3 = arith.cmpi eq, %arg1, %c0_i32_5 : i32
    %4 = arith.andi %2, %3 : i1
    %5 = arith.extui %4 : i1 to i32
    %c0_i32_6 = arith.constant 0 : i32
    %6 = arith.cmpi ne, %5, %c0_i32_6 : i32
    scf.if %6 {
      %cst = arith.constant 0.000000e+00 : f32
      %23 = vector.broadcast %cst : f32 to vector<4x128xf32>
      %c0_16 = arith.constant 0 : index
      %c0_17 = arith.constant 0 : index
      %24 = vector.load %arg21[%c0_16, %c0_17] : memref<4x128xf32, #tpu.memory_space<vmem>>, vector<4x128xf32>
      tpu.vector_store %arg21[%c0_16, %c0_17], %23 {strides = array<i32>} : memref<4x128xf32, #tpu.memory_space<vmem>>, vector<4x128xf32>,
    } else {
    }
    %c0_i32_7 = arith.constant 0 : i32
    %7 = arith.cmpi eq, %arg0, %c0_i32_7 : i32
    %8 = arith.extui %7 : i1 to i32
    %c0_i32_8 = arith.constant 0 : i32
    %9 = arith.cmpi ne, %8, %c0_i32_8 : i32
    scf.if %9 {
      %23 = arith.extf %0 : vector<2x64x128xbf16> to vector<2x64x128xf32>
      %cst = arith.constant dense<0.000000e+00> : vector<2x128xf32>
      %24 = vector.multi_reduction <add>, %23, %cst [1] : vector<2x64x128xf32> to vector<2x128xf32>
      %25 = arith.extf %1 : vector<2x64x128xbf16> to vector<2x64x128xf32>
      %cst_16 = arith.constant dense<0.000000e+00> : vector<2x128xf32>
      %26 = vector.multi_reduction <add>, %25, %cst_16 [1] : vector<2x64x128xf32> to vector<2x128xf32>
      %c0_17 = arith.constant 0 : index
      %c0_18 = arith.constant 0 : index
      %27 = vector.load %arg21[%c0_17, %c0_18] : memref<4x128xf32, #tpu.memory_space<vmem>>, vector<4x128xf32>
      %28 = tpu.concatenate %24, %26 in 0 : vector<2x128xf32>, vector<2x128xf32> -> vector<4x128xf32>
      %29 = arith.addf %27, %28 : vector<4x128xf32>
      %c0_19 = arith.constant 0 : index
      %c0_20 = arith.constant 0 : index
      %30 = vector.load %arg21[%c0_19, %c0_20] : memref<4x128xf32, #tpu.memory_space<vmem>>, vector<4x128xf32>
      tpu.vector_store %arg21[%c0_19, %c0_20], %29 {strides = array<i32>} : memref<4x128xf32, #tpu.memory_space<vmem>>, vector<4x128xf32>,
    } else {
    }
    %c0_i32_9 = arith.constant 0 : i32
    %10 = arith.cmpi eq, %arg0, %c0_i32_9 : i32
    %c0_i32_10 = arith.constant 0 : i32
    %11 = arith.cmpi eq, %arg1, %c0_i32_10 : i32
    %12 = arith.andi %10, %11 : i1
    %13 = arith.extui %12 : i1 to i32
    %c0_i32_11 = arith.constant 0 : i32
    %14 = arith.cmpi ne, %13, %c0_i32_11 : i32
    scf.if %14 {
      %c0_16 = arith.constant 0 : index
      %c0_17 = arith.constant 0 : index
      %23 = vector.load %arg21[%c0_16, %c0_17] : memref<4x128xf32, #tpu.memory_space<vmem>>, vector<4x128xf32>
      %cst = arith.constant 1.562500e-02 : f32
      %24 = vector.broadcast %cst : f32 to vector<4x128xf32>
      %25 = arith.mulf %23, %24 : vector<4x128xf32>
      %26 = arith.truncf %25 : vector<4x128xf32> to vector<4x128xbf16>
      %27 = vector.extract_strided_slice %26 {offsets = [0, 0], sizes = [2, 128], strides = [1, 1]} : vector<4x128xbf16> to vector<2x128xbf16>
      %28 = vector.extract_strided_slice %26 {offsets = [2, 0], sizes = [2, 128], strides = [1, 1]} : vector<4x128xbf16> to vector<2x128xbf16>
      %c0_18 = arith.constant 0 : index
      %c0_19 = arith.constant 0 : index
      %29 = vector.load %arg8[%c0_18, %c0_19] : memref<128x128xbf16, #tpu.memory_space<vmem>>, vector<128x128xbf16>
      %cst_20 = arith.constant dense<0.000000e+00> : vector<2x128xf32>
      %30 = tpu.matmul %27, %29, %cst_20 {dimension_numbers = #tpu.dot_dimension_numbers<[1], [0], [0], [1], [0, 0, 1, 1], [], []>} : vector<2x128xbf16>, vector<128x128xbf16>, vector<2x128xf32> -> vector<2x128xf32>
      %c0_21 = arith.constant 0 : index
      %c0_22 = arith.constant 0 : index
      %31 = vector.load %arg9[%c0_21, %c0_22] : memref<1x128xf32, #tpu.memory_space<vmem>>, vector<1x128xf32>
      %32 = vector.broadcast %31 : vector<1x128xf32> to vector<2x128xf32>
      %33 = arith.addf %30, %32 : vector<2x128xf32>
      %c0_23 = arith.constant 0 : index
      %c0_24 = arith.constant 0 : index
      %34 = vector.load %arg10[%c0_23, %c0_24] : memref<128x128xbf16, #tpu.memory_space<vmem>>, vector<128x128xbf16>
      %cst_25 = arith.constant dense<0.000000e+00> : vector<2x128xf32>
      %35 = tpu.matmul %28, %34, %cst_25 {dimension_numbers = #tpu.dot_dimension_numbers<[1], [0], [0], [1], [0, 0, 1, 1], [], []>} : vector<2x128xbf16>, vector<128x128xbf16>, vector<2x128xf32> -> vector<2x128xf32>
      %c0_26 = arith.constant 0 : index
      %c0_27 = arith.constant 0 : index
      %36 = vector.load %arg11[%c0_26, %c0_27] : memref<1x128xf32, #tpu.memory_space<vmem>>, vector<1x128xf32>
      %37 = vector.broadcast %36 : vector<1x128xf32> to vector<2x128xf32>
      %38 = arith.addf %35, %37 : vector<2x128xf32>
      %39 = tpu.concatenate %33, %38 in 0 : vector<2x128xf32>, vector<2x128xf32> -> vector<4x128xf32>
      %c0_28 = arith.constant 0 : index
      %c0_29 = arith.constant 0 : index
      %40 = vector.load %arg22[%c0_28, %c0_29] : memref<4x128xf32, #tpu.memory_space<vmem>>, vector<4x128xf32>
      tpu.vector_store %arg22[%c0_28, %c0_29], %39 {strides = array<i32>} : memref<4x128xf32, #tpu.memory_space<vmem>>, vector<4x128xf32>,
      %c0_30 = arith.constant 0 : index
      %c0_31 = arith.constant 0 : index
      %41 = vector.load %arg4[%c0_30, %c0_31] : memref<128x128xbf16, #tpu.memory_space<vmem>>, vector<128x128xbf16>
      %cst_32 = arith.constant dense<0.000000e+00> : vector<2x128xf32>
      %42 = tpu.matmul %27, %41, %cst_32 {dimension_numbers = #tpu.dot_dimension_numbers<[1], [0], [0], [1], [0, 0, 1, 1], [], []>} : vector<2x128xbf16>, vector<128x128xbf16>, vector<2x128xf32> -> vector<2x128xf32>
      %c0_33 = arith.constant 0 : index
      %c0_34 = arith.constant 0 : index
      %43 = vector.load %arg5[%c0_33, %c0_34] : memref<1x128xf32, #tpu.memory_space<vmem>>, vector<1x128xf32>
      %44 = vector.broadcast %43 : vector<1x128xf32> to vector<2x128xf32>
      %45 = arith.addf %42, %44 : vector<2x128xf32>
      %c0_35 = arith.constant 0 : index
      %c0_36 = arith.constant 0 : index
      %46 = vector.load %arg6[%c0_35, %c0_36] : memref<128x128xbf16, #tpu.memory_space<vmem>>, vector<128x128xbf16>
      %cst_37 = arith.constant dense<0.000000e+00> : vector<2x128xf32>
      %47 = tpu.matmul %28, %46, %cst_37 {dimension_numbers = #tpu.dot_dimension_numbers<[1], [0], [0], [1], [0, 0, 1, 1], [], []>} : vector<2x128xbf16>, vector<128x128xbf16>, vector<2x128xf32> -> vector<2x128xf32>
      %c0_38 = arith.constant 0 : index
      %c0_39 = arith.constant 0 : index
      %48 = vector.load %arg7[%c0_38, %c0_39] : memref<1x128xf32, #tpu.memory_space<vmem>>, vector<1x128xf32>
      %49 = vector.broadcast %48 : vector<1x128xf32> to vector<2x128xf32>
      %50 = arith.addf %47, %49 : vector<2x128xf32>
      %51 = tpu.concatenate %45, %50 in 0 : vector<2x128xf32>, vector<2x128xf32> -> vector<4x128xf32>
      %c0_40 = arith.constant 0 : index
      %c0_41 = arith.constant 0 : index
      %52 = vector.load %arg23[%c0_40, %c0_41] : memref<4x128xf32, #tpu.memory_space<vmem>>, vector<4x128xf32>
      tpu.vector_store %arg23[%c0_40, %c0_41], %51 {strides = array<i32>} : memref<4x128xf32, #tpu.memory_space<vmem>>, vector<4x128xf32>,
      %cst_42 = arith.constant -1.000000e+30 : f32
      %53 = vector.broadcast %cst_42 : f32 to vector<4x1xf32>
      %c0_43 = arith.constant 0 : index
      %c0_44 = arith.constant 0 : index
      %54 = vector.load %arg24[%c0_43, %c0_44] : memref<4x1xf32, #tpu.memory_space<vmem>>, vector<4x1xf32>
      tpu.vector_store %arg24[%c0_43, %c0_44], %53 {strides = array<i32>} : memref<4x1xf32, #tpu.memory_space<vmem>>, vector<4x1xf32>,
      %cst_45 = arith.constant 0.000000e+00 : f32
      %55 = vector.broadcast %cst_45 : f32 to vector<4x1xf32>
      %c0_46 = arith.constant 0 : index
      %c0_47 = arith.constant 0 : index
      %56 = vector.load %arg25[%c0_46, %c0_47] : memref<4x1xf32, #tpu.memory_space<vmem>>, vector<4x1xf32>
      tpu.vector_store %arg25[%c0_46, %c0_47], %55 {strides = array<i32>} : memref<4x1xf32, #tpu.memory_space<vmem>>, vector<4x1xf32>,
      %cst_48 = arith.constant 0.000000e+00 : f32
      %57 = vector.broadcast %cst_48 : f32 to vector<4x128xf32>
      %c0_49 = arith.constant 0 : index
      %c0_50 = arith.constant 0 : index
      %58 = vector.load %arg26[%c0_49, %c0_50] : memref<4x128xf32, #tpu.memory_space<vmem>>, vector<4x128xf32>
      tpu.vector_store %arg26[%c0_49, %c0_50], %57 {strides = array<i32>} : memref<4x128xf32, #tpu.memory_space<vmem>>, vector<4x128xf32>,
    } else {
    }
    %c1_i32 = arith.constant 1 : i32
    %15 = arith.cmpi eq, %arg0, %c1_i32 : i32
    %16 = arith.extui %15 : i1 to i32
    %c0_i32_12 = arith.constant 0 : i32
    %17 = arith.cmpi ne, %16, %c0_i32_12 : i32
    scf.if %17 {
      %23 = vector.shape_cast %1 : vector<2x64x128xbf16> to vector<128x128xbf16>
      %c0_16 = arith.constant 0 : index
      %c0_17 = arith.constant 0 : index
      %24 = vector.load %arg12[%c0_16, %c0_17] : memref<128x256xbf16, #tpu.memory_space<vmem>>, vector<128x256xbf16>
      %cst = arith.constant dense<0.000000e+00> : vector<128x256xf32>
      %25 = tpu.matmul %23, %24, %cst {dimension_numbers = #tpu.dot_dimension_numbers<[1], [0], [0], [1], [0, 0, 1, 1], [], []>} : vector<128x128xbf16>, vector<128x256xbf16>, vector<128x256xf32> -> vector<128x256xf32>
      %c0_18 = arith.constant 0 : index
      %c0_19 = arith.constant 0 : index
      %26 = vector.load %arg13[%c0_18, %c0_19] : memref<1x256xf32, #tpu.memory_space<vmem>>, vector<1x256xf32>
      %27 = vector.broadcast %26 : vector<1x256xf32> to vector<128x256xf32>
      %28 = arith.addf %25, %27 : vector<128x256xf32>
      %29 = vector.shape_cast %28 : vector<128x256xf32> to vector<2x64x256xf32>
      %30 = vector.shape_cast %0 : vector<2x64x128xbf16> to vector<128x128xbf16>
      %c0_20 = arith.constant 0 : index
      %c0_21 = arith.constant 0 : index
      %31 = vector.load %arg14[%c0_20, %c0_21] : memref<128x256xbf16, #tpu.memory_space<vmem>>, vector<128x256xbf16>
      %cst_22 = arith.constant dense<0.000000e+00> : vector<128x256xf32>
      %32 = tpu.matmul %30, %31, %cst_22 {dimension_numbers = #tpu.dot_dimension_numbers<[1], [0], [0], [1], [0, 0, 1, 1], [], []>} : vector<128x128xbf16>, vector<128x256xbf16>, vector<128x256xf32> -> vector<128x256xf32>
      %c0_23 = arith.constant 0 : index
      %c0_24 = arith.constant 0 : index
      %33 = vector.load %arg15[%c0_23, %c0_24] : memref<1x256xf32, #tpu.memory_space<vmem>>, vector<1x256xf32>
      %34 = vector.broadcast %33 : vector<1x256xf32> to vector<128x256xf32>
      %35 = arith.addf %32, %34 : vector<128x256xf32>
      %36 = vector.shape_cast %35 : vector<128x256xf32> to vector<2x64x256xf32>
      %37 = vector.extract_strided_slice %29 {offsets = [0, 0, 0], sizes = [2, 64, 128], strides = [1, 1, 1]} : vector<2x64x256xf32> to vector<2x64x128xf32>
      %38 = vector.extract_strided_slice %36 {offsets = [0, 0, 0], sizes = [2, 64, 128], strides = [1, 1, 1]} : vector<2x64x256xf32> to vector<2x64x128xf32>
      %39 = tpu.concatenate %37, %38 in 0 : vector<2x64x128xf32>, vector<2x64x128xf32> -> vector<4x64x128xf32>
      %40 = vector.extract_strided_slice %29 {offsets = [0, 0, 128], sizes = [2, 64, 128], strides = [1, 1, 1]} : vector<2x64x256xf32> to vector<2x64x128xf32>
      %41 = vector.extract_strided_slice %36 {offsets = [0, 0, 128], sizes = [2, 64, 128], strides = [1, 1, 1]} : vector<2x64x256xf32> to vector<2x64x128xf32>
      %42 = tpu.concatenate %40, %41 in 0 : vector<2x64x128xf32>, vector<2x64x128xf32> -> vector<4x64x128xf32>
      %c0_25 = arith.constant 0 : index
      %c0_26 = arith.constant 0 : index
      %43 = vector.load %arg22[%c0_25, %c0_26] : memref<4x128xf32, #tpu.memory_space<vmem>>, vector<4x128xf32>
      %44 = arith.truncf %43 : vector<4x128xf32> to vector<4x128xbf16>
      %45 = vector.shape_cast %44 : vector<4x128xbf16> to vector<4x1x128xbf16>
      %46 = arith.truncf %39 : vector<4x64x128xf32> to vector<4x64x128xbf16>
      "tpu.trace_start"() <{level = 10 : i32, message = "bqd,bkd->bqk"}> : () -> ()
      %cst_27 = arith.constant dense<0.000000e+00> : vector<4x1x64xf32>
      %47 = tpu.matmul %45, %46, %cst_27 {dimension_numbers = #tpu.dot_dimension_numbers<[2], [2], [1], [1], [0, 0, 0, 1, 1, 1], [0], [0]>} : vector<4x1x128xbf16>, vector<4x64x128xbf16>, vector<4x1x64xf32> -> vector<4x1x64xf32>
      "tpu.trace_stop"() : () -> ()
      %48 = vector.shape_cast %47 : vector<4x1x64xf32> to vector<4x64xf32>
      %cst_28 = arith.constant 0.176776692 : f32
      %49 = vector.broadcast %cst_28 : f32 to vector<4x64xf32>
      %50 = arith.mulf %48, %49 : vector<4x64xf32>
      %c0_29 = arith.constant 0 : index
      %c0_30 = arith.constant 0 : index
      %51 = vector.load %arg24[%c0_29, %c0_30] : memref<4x1xf32, #tpu.memory_space<vmem>>, vector<4x1xf32>
      %cst_31 = arith.constant dense<0xFF800000> : vector<4xf32>
      %52 = vector.multi_reduction <maximumf>, %50, %cst_31 [1] : vector<4x64xf32> to vector<4xf32>
      %53 = vector.shape_cast %52 : vector<4xf32> to vector<4x1xf32>
      %54 = arith.maximumf %51, %53 : vector<4x1xf32>
      %c0_32 = arith.constant 0 : index
      %c0_33 = arith.constant 0 : index
      %55 = vector.load %arg24[%c0_32, %c0_33] : memref<4x1xf32, #tpu.memory_space<vmem>>, vector<4x1xf32>
      %56 = arith.subf %55, %54 : vector<4x1xf32>
      %57 = math.exp %56 : vector<4x1xf32>
      %58 = vector.broadcast %54 : vector<4x1xf32> to vector<4x64xf32>
      %59 = arith.subf %50, %58 : vector<4x64xf32>
      %60 = math.exp %59 : vector<4x64xf32>
      %c0_34 = arith.constant 0 : index
      %c0_35 = arith.constant 0 : index
      %61 = vector.load %arg25[%c0_34, %c0_35] : memref<4x1xf32, #tpu.memory_space<vmem>>, vector<4x1xf32>
      %62 = arith.mulf %57, %61 : vector<4x1xf32>
      %cst_36 = arith.constant dense<0.000000e+00> : vector<4xf32>
      %63 = vector.multi_reduction <add>, %60, %cst_36 [1] : vector<4x64xf32> to vector<4xf32>
      %64 = vector.shape_cast %63 : vector<4xf32> to vector<4x1xf32>
      %65 = arith.addf %62, %64 : vector<4x1xf32>
      %c0_37 = arith.constant 0 : index
      %c0_38 = arith.constant 0 : index
      %66 = vector.load %arg25[%c0_37, %c0_38] : memref<4x1xf32, #tpu.memory_space<vmem>>, vector<4x1xf32>
      tpu.vector_store %arg25[%c0_37, %c0_38], %65 {strides = array<i32>} : memref<4x1xf32, #tpu.memory_space<vmem>>, vector<4x1xf32>,
      %67 = arith.truncf %60 : vector<4x64xf32> to vector<4x64xbf16>
      %68 = vector.shape_cast %67 : vector<4x64xbf16> to vector<4x1x64xbf16>
      %69 = arith.truncf %42 : vector<4x64x128xf32> to vector<4x64x128xbf16>
      "tpu.trace_start"() <{level = 10 : i32, message = "bqk,bkd->bqd"}> : () -> ()
      %cst_39 = arith.constant dense<0.000000e+00> : vector<4x1x128xf32>
      %70 = tpu.matmul %68, %69, %cst_39 {dimension_numbers = #tpu.dot_dimension_numbers<[2], [1], [1], [2], [0, 0, 0, 1, 1, 2], [0], [0]>} : vector<4x1x64xbf16>, vector<4x64x128xbf16>, vector<4x1x128xf32> -> vector<4x1x128xf32>
      "tpu.trace_stop"() : () -> ()
      %71 = vector.shape_cast %70 : vector<4x1x128xf32> to vector<4x128xf32>
      %c0_40 = arith.constant 0 : index
      %c0_41 = arith.constant 0 : index
      %72 = vector.load %arg26[%c0_40, %c0_41] : memref<4x128xf32, #tpu.memory_space<vmem>>, vector<4x128xf32>
      %73 = vector.broadcast %57 : vector<4x1xf32> to vector<4x128xf32>
      %74 = arith.mulf %73, %72 : vector<4x128xf32>
      %75 = arith.addf %74, %71 : vector<4x128xf32>
      %c0_42 = arith.constant 0 : index
      %c0_43 = arith.constant 0 : index
      %76 = vector.load %arg26[%c0_42, %c0_43] : memref<4x128xf32, #tpu.memory_space<vmem>>, vector<4x128xf32>
      tpu.vector_store %arg26[%c0_42, %c0_43], %75 {strides = array<i32>} : memref<4x128xf32, #tpu.memory_space<vmem>>, vector<4x128xf32>,
      %c0_44 = arith.constant 0 : index
      %c0_45 = arith.constant 0 : index
      %77 = vector.load %arg24[%c0_44, %c0_45] : memref<4x1xf32, #tpu.memory_space<vmem>>, vector<4x1xf32>
      tpu.vector_store %arg24[%c0_44, %c0_45], %54 {strides = array<i32>} : memref<4x1xf32, #tpu.memory_space<vmem>>, vector<4x1xf32>,
    } else {
    }
    %c1_i32_13 = arith.constant 1 : i32
    %18 = arith.cmpi eq, %arg0, %c1_i32_13 : i32
    %c0_i32_14 = arith.constant 0 : i32
    %19 = arith.cmpi eq, %arg1, %c0_i32_14 : i32
    %20 = arith.andi %18, %19 : i1
    %21 = arith.extui %20 : i1 to i32
    %c0_i32_15 = arith.constant 0 : i32
    %22 = arith.cmpi ne, %21, %c0_i32_15 : i32
    scf.if %22 {
      %c0_16 = arith.constant 0 : index
      %c0_17 = arith.constant 0 : index
      %23 = vector.load %arg26[%c0_16, %c0_17] : memref<4x128xf32, #tpu.memory_space<vmem>>, vector<4x128xf32>
      %c0_18 = arith.constant 0 : index
      %c0_19 = arith.constant 0 : index
      %24 = vector.load %arg25[%c0_18, %c0_19] : memref<4x1xf32, #tpu.memory_space<vmem>>, vector<4x1xf32>
      %25 = tpu.reciprocal %24 {approx = true} : vector<4x1xf32> -> vector<4x1xf32>
      %26 = vector.broadcast %25 : vector<4x1xf32> to vector<4x128xf32>
      %27 = arith.mulf %23, %26 : vector<4x128xf32>
      %c0_20 = arith.constant 0 : index
      %c0_21 = arith.constant 0 : index
      %28 = vector.load %arg23[%c0_20, %c0_21] : memref<4x128xf32, #tpu.memory_space<vmem>>, vector<4x128xf32>
      %29 = arith.truncf %28 : vector<4x128xf32> to vector<4x128xbf16>
      %c0_22 = arith.constant 0 : index
      %c0_23 = arith.constant 0 : index
      %30 = vector.load %arg16[%c0_22, %c0_23] : memref<128x128xbf16, #tpu.memory_space<vmem>>, vector<128x128xbf16>
      %cst = arith.constant dense<0.000000e+00> : vector<4x128xf32>
      %31 = tpu.matmul %29, %30, %cst {dimension_numbers = #tpu.dot_dimension_numbers<[1], [0], [0], [1], [0, 0, 1, 1], [], []>} : vector<4x128xbf16>, vector<128x128xbf16>, vector<4x128xf32> -> vector<4x128xf32>
      %32 = arith.truncf %27 : vector<4x128xf32> to vector<4x128xbf16>
      %c0_24 = arith.constant 0 : index
      %c0_25 = arith.constant 0 : index
      %33 = vector.load %arg17[%c0_24, %c0_25] : memref<128x128xbf16, #tpu.memory_space<vmem>>, vector<128x128xbf16>
      %cst_26 = arith.constant dense<0.000000e+00> : vector<4x128xf32>
      %34 = tpu.matmul %32, %33, %cst_26 {dimension_numbers = #tpu.dot_dimension_numbers<[1], [0], [0], [1], [0, 0, 1, 1], [], []>} : vector<4x128xbf16>, vector<128x128xbf16>, vector<4x128xf32> -> vector<4x128xf32>
      %35 = arith.addf %31, %34 : vector<4x128xf32>
      %c0_27 = arith.constant 0 : index
      %c0_28 = arith.constant 0 : index
      %36 = vector.load %arg18[%c0_27, %c0_28] : memref<1x128xf32, #tpu.memory_space<vmem>>, vector<1x128xf32>
      %37 = vector.broadcast %36 : vector<1x128xf32> to vector<4x128xf32>
      %38 = arith.addf %35, %37 : vector<4x128xf32>
      %cst_29 = arith.constant 0.000000e+00 : f32
      %39 = vector.broadcast %cst_29 : f32 to vector<4x128xf32>
      %40 = tpu.concatenate %38, %39 in 0 : vector<4x128xf32>, vector<4x128xf32> -> vector<8x128xf32>
      %cst_30 = arith.constant 0.000000e+00 : f32
      %41 = vector.broadcast %cst_30 : f32 to vector<4x128xf32>
      %42 = tpu.concatenate %27, %41 in 0 : vector<4x128xf32>, vector<4x128xf32> -> vector<8x128xf32>
      %c0_31 = arith.constant 0 : index
      %c0_32 = arith.constant 0 : index
      %43 = vector.load %arg19[%c0_31, %c0_32] : memref<8x128xf32, #tpu.memory_space<vmem>>, vector<8x128xf32>
      tpu.vector_store %arg19[%c0_31, %c0_32], %40 {strides = array<i32>} : memref<8x128xf32, #tpu.memory_space<vmem>>, vector<8x128xf32>,
      %c0_33 = arith.constant 0 : index
      %c0_34 = arith.constant 0 : index
      %44 = vector.load %arg20[%c0_33, %c0_34] : memref<8x128xf32, #tpu.memory_space<vmem>>, vector<8x128xf32>
      tpu.vector_store %arg20[%c0_33, %c0_34], %42 {strides = array<i32>} : memref<8x128xf32, #tpu.memory_space<vmem>>, vector<8x128xf32>,
    } else {
    }
    return
  }
  func.func @transform_0(%arg0: i32, %arg1: i32) -> (i32, i32, i32) {
    %c0_i32 = arith.constant 0 : i32
    %c0_i32_0 = arith.constant 0 : i32
    %c0_i32_1 = arith.constant 0 : i32
    return %c0_i32, %arg1, %c0_i32_0 : i32, i32, i32
  }
  func.func @transform_1(%arg0: i32, %arg1: i32) -> (i32, i32, i32) {
    %c0_i32 = arith.constant 0 : i32
    %c0_i32_0 = arith.constant 0 : i32
    %c0_i32_1 = arith.constant 0 : i32
    return %c0_i32, %arg1, %c0_i32_0 : i32, i32, i32
  }
  func.func @transform_2(%arg0: i32, %arg1: i32) -> (i32, i32) {
    %c0_i32 = arith.constant 0 : i32
    %c0_i32_0 = arith.constant 0 : i32
    %c0_i32_1 = arith.constant 0 : i32
    return %c0_i32, %c0_i32_0 : i32, i32
  }
  func.func @transform_3(%arg0: i32, %arg1: i32) -> (i32, i32) {
    %c0_i32 = arith.constant 0 : i32
    %c0_i32_0 = arith.constant 0 : i32
    %c0_i32_1 = arith.constant 0 : i32
    return %c0_i32, %c0_i32_0 : i32, i32
  }
  func.func @transform_4(%arg0: i32, %arg1: i32) -> (i32, i32) {
    %c0_i32 = arith.constant 0 : i32
    %c0_i32_0 = arith.constant 0 : i32
    %c0_i32_1 = arith.constant 0 : i32
    return %c0_i32, %c0_i32_0 : i32, i32
  }
  func.func @transform_5(%arg0: i32, %arg1: i32) -> (i32, i32) {
    %c0_i32 = arith.constant 0 : i32
    %c0_i32_0 = arith.constant 0 : i32
    %c0_i32_1 = arith.constant 0 : i32
    return %c0_i32, %c0_i32_0 : i32, i32
  }
  func.func @transform_6(%arg0: i32, %arg1: i32) -> (i32, i32) {
    %c0_i32 = arith.constant 0 : i32
    %c0_i32_0 = arith.constant 0 : i32
    %c0_i32_1 = arith.constant 0 : i32
    return %c0_i32, %c0_i32_0 : i32, i32
  }
  func.func @transform_7(%arg0: i32, %arg1: i32) -> (i32, i32) {
    %c0_i32 = arith.constant 0 : i32
    %c0_i32_0 = arith.constant 0 : i32
    %c0_i32_1 = arith.constant 0 : i32
    return %c0_i32, %c0_i32_0 : i32, i32
  }
  func.func @transform_8(%arg0: i32, %arg1: i32) -> (i32, i32) {
    %c0_i32 = arith.constant 0 : i32
    %c0_i32_0 = arith.constant 0 : i32
    %c0_i32_1 = arith.constant 0 : i32
    return %c0_i32, %c0_i32_0 : i32, i32
  }
  func.func @transform_9(%arg0: i32, %arg1: i32) -> (i32, i32) {
    %c0_i32 = arith.constant 0 : i32
    %c0_i32_0 = arith.constant 0 : i32
    %c0_i32_1 = arith.constant 0 : i32
    return %c0_i32, %c0_i32_0 : i32, i32
  }
  func.func @transform_10(%arg0: i32, %arg1: i32) -> (i32, i32) {
    %c0_i32 = arith.constant 0 : i32
    %c0_i32_0 = arith.constant 0 : i32
    %c0_i32_1 = arith.constant 0 : i32
    return %c0_i32, %c0_i32_0 : i32, i32
  }
  func.func @transform_11(%arg0: i32, %arg1: i32) -> (i32, i32) {
    %c0_i32 = arith.constant 0 : i32
    %c0_i32_0 = arith.constant 0 : i32
    %c0_i32_1 = arith.constant 0 : i32
    return %c0_i32, %c0_i32_0 : i32, i32
  }
  func.func @transform_12(%arg0: i32, %arg1: i32) -> (i32, i32) {
    %c0_i32 = arith.constant 0 : i32
    %c0_i32_0 = arith.constant 0 : i32
    %c0_i32_1 = arith.constant 0 : i32
    return %c0_i32, %c0_i32_0 : i32, i32
  }
  func.func @transform_13(%arg0: i32, %arg1: i32) -> (i32, i32) {
    %c0_i32 = arith.constant 0 : i32
    %c0_i32_0 = arith.constant 0 : i32
    %c0_i32_1 = arith.constant 0 : i32
    return %c0_i32, %c0_i32_0 : i32, i32
  }
  func.func @transform_14(%arg0: i32, %arg1: i32) -> (i32, i32) {
    %c0_i32 = arith.constant 0 : i32
    %c0_i32_0 = arith.constant 0 : i32
    %c0_i32_1 = arith.constant 0 : i32
    return %c0_i32, %c0_i32_0 : i32, i32
  }
  func.func @transform_15(%arg0: i32, %arg1: i32) -> (i32, i32) {
    %c0_i32 = arith.constant 0 : i32
    %c0_i32_0 = arith.constant 0 : i32
    %c0_i32_1 = arith.constant 0 : i32
    return %c0_i32, %c0_i32_0 : i32, i32
  }
  func.func @transform_16(%arg0: i32, %arg1: i32) -> (i32, i32) {
    %c0_i32 = arith.constant 0 : i32
    %c0_i32_0 = arith.constant 0 : i32
    %c0_i32_1 = arith.constant 0 : i32
    return %c0_i32, %c0_i32_0 : i32, i32
  }
  func.func @transform_17(%arg0: i32, %arg1: i32) -> (i32, i32) {
    %c0_i32 = arith.constant 0 : i32
    %c0_i32_0 = arith.constant 0 : i32
    %c0_i32_1 = arith.constant 0 : i32
    return %c0_i32, %c0_i32_0 : i32, i32
  }
  func.func @transform_18(%arg0: i32, %arg1: i32) -> (i32, i32) {
    %c0_i32 = arith.constant 0 : i32
    %c0_i32_0 = arith.constant 0 : i32
    %c0_i32_1 = arith.constant 0 : i32
    return %c0_i32, %c0_i32_0 : i32, i32
  }
}

module attributes {stable_mosaic.version = 11 : i64} {
  func.func @_decoder_kernel(%arg0: memref<8x128xf32, #tpu.memory_space<vmem>>, %arg1: memref<6x8x1xi32, #tpu.memory_space<vmem>>, %arg2: memref<5x8x1xi32, #tpu.memory_space<vmem>>, %arg3: memref<128x384xbf16, #tpu.memory_space<vmem>>, %arg4: memref<128x384xbf16, #tpu.memory_space<vmem>>, %arg5: memref<1x384xf32, #tpu.memory_space<vmem>>, %arg6: memref<1x384xf32, #tpu.memory_space<vmem>>, %arg7: memref<128x128xbf16, #tpu.memory_space<vmem>>, %arg8: memref<1x128xf32, #tpu.memory_space<vmem>>, %arg9: memref<5x8x128xf32, #tpu.memory_space<vmem>>) attributes {dimension_semantics = [], scalar_prefetch = 0 : i64, scratch_operands = 0 : i64, tpu.core_type = #tpu.core_type<tc>} {
    %0 = tpu.iota {dimensions = array<i32: 1>} : vector<8x128xi32>
    %c0 = arith.constant 0 : index
    %c0_0 = arith.constant 0 : index
    %1 = vector.load %arg0[%c0, %c0_0] : memref<8x128xf32, #tpu.memory_space<vmem>>, vector<8x128xf32>
    %c0_1 = arith.constant 0 : index
    %c0_2 = arith.constant 0 : index
    %c0_3 = arith.constant 0 : index
    %2 = vector.load %arg1[%c0_1, %c0_2, %c0_3] : memref<6x8x1xi32, #tpu.memory_space<vmem>>, vector<1x8x1xi32>
    %3 = vector.shape_cast %2 : vector<1x8x1xi32> to vector<8x1xi32>
    %c0_i32 = arith.constant 0 : i32
    %c5_i32 = arith.constant 5 : i32
    %4 = arith.addi %c0_i32, %c5_i32 : i32
    %c1_i32 = arith.constant 1 : i32
    %5:2 = scf.for %arg10 = %c0_i32 to %4 step %c1_i32 iter_args(%arg11 = %1, %arg12 = %3) -> (vector<8x128xf32>, vector<8x1xi32>)  : i32 {
      %6 = vector.broadcast %arg12 : vector<8x1xi32> to vector<8x128xi32>
      %7 = arith.cmpi eq, %0, %6 : vector<8x128xi32>
      %8 = arith.extui %7 : vector<8x128xi1> to vector<8x128xi32>
      %9 = arith.sitofp %8 : vector<8x128xi32> to vector<8x128xf32>
      %10 = arith.truncf %9 : vector<8x128xf32> to vector<8x128xbf16>
      %c0_5 = arith.constant 0 : index
      %c0_6 = arith.constant 0 : index
      %11 = vector.load %arg3[%c0_5, %c0_6] : memref<128x384xbf16, #tpu.memory_space<vmem>>, vector<128x384xbf16>
      %cst = arith.constant dense<0.000000e+00> : vector<8x384xf32>
      %12 = tpu.matmul %10, %11, %cst {dimension_numbers = #tpu.dot_dimension_numbers<[1], [0], [0], [1], [0, 0, 1, 1], [], []>} : vector<8x128xbf16>, vector<128x384xbf16>, vector<8x384xf32> -> vector<8x384xf32>
      %c0_7 = arith.constant 0 : index
      %c0_8 = arith.constant 0 : index
      %13 = vector.load %arg5[%c0_7, %c0_8] : memref<1x384xf32, #tpu.memory_space<vmem>>, vector<1x384xf32>
      %14 = vector.broadcast %13 : vector<1x384xf32> to vector<8x384xf32>
      %15 = arith.addf %12, %14 : vector<8x384xf32>
      %16 = arith.truncf %arg11 : vector<8x128xf32> to vector<8x128xbf16>
      %c0_9 = arith.constant 0 : index
      %c0_10 = arith.constant 0 : index
      %17 = vector.load %arg4[%c0_9, %c0_10] : memref<128x384xbf16, #tpu.memory_space<vmem>>, vector<128x384xbf16>
      %cst_11 = arith.constant dense<0.000000e+00> : vector<8x384xf32>
      %18 = tpu.matmul %16, %17, %cst_11 {dimension_numbers = #tpu.dot_dimension_numbers<[1], [0], [0], [1], [0, 0, 1, 1], [], []>} : vector<8x128xbf16>, vector<128x384xbf16>, vector<8x384xf32> -> vector<8x384xf32>
      %c0_12 = arith.constant 0 : index
      %c0_13 = arith.constant 0 : index
      %19 = vector.load %arg6[%c0_12, %c0_13] : memref<1x384xf32, #tpu.memory_space<vmem>>, vector<1x384xf32>
      %20 = vector.broadcast %19 : vector<1x384xf32> to vector<8x384xf32>
      %21 = arith.addf %18, %20 : vector<8x384xf32>
      %22 = vector.extract_strided_slice %15 {offsets = [0, 0], sizes = [8, 128], strides = [1, 1]} : vector<8x384xf32> to vector<8x128xf32>
      %23 = vector.extract_strided_slice %21 {offsets = [0, 0], sizes = [8, 128], strides = [1, 1]} : vector<8x384xf32> to vector<8x128xf32>
      %24 = arith.addf %22, %23 : vector<8x128xf32>
      %25 = arith.negf %24 : vector<8x128xf32>
      %26 = math.exp %25 : vector<8x128xf32>
      %cst_14 = arith.constant 1.000000e+00 : f32
      %27 = vector.broadcast %cst_14 : f32 to vector<8x128xf32>
      %28 = arith.addf %27, %26 : vector<8x128xf32>
      %29 = arith.divf %27, %28 : vector<8x128xf32>
      %30 = vector.extract_strided_slice %15 {offsets = [0, 128], sizes = [8, 128], strides = [1, 1]} : vector<8x384xf32> to vector<8x128xf32>
      %31 = vector.extract_strided_slice %21 {offsets = [0, 128], sizes = [8, 128], strides = [1, 1]} : vector<8x384xf32> to vector<8x128xf32>
      %32 = arith.addf %30, %31 : vector<8x128xf32>
      %33 = arith.negf %32 : vector<8x128xf32>
      %34 = math.exp %33 : vector<8x128xf32>
      %cst_15 = arith.constant 1.000000e+00 : f32
      %35 = vector.broadcast %cst_15 : f32 to vector<8x128xf32>
      %36 = arith.addf %35, %34 : vector<8x128xf32>
      %37 = arith.divf %35, %36 : vector<8x128xf32>
      %38 = vector.extract_strided_slice %15 {offsets = [0, 256], sizes = [8, 128], strides = [1, 1]} : vector<8x384xf32> to vector<8x128xf32>
      %39 = vector.extract_strided_slice %21 {offsets = [0, 256], sizes = [8, 128], strides = [1, 1]} : vector<8x384xf32> to vector<8x128xf32>
      %40 = arith.mulf %29, %39 : vector<8x128xf32>
      %41 = arith.addf %38, %40 : vector<8x128xf32>
      %42 = math.tanh %41 : vector<8x128xf32>
      %cst_16 = arith.constant 1.000000e+00 : f32
      %43 = vector.broadcast %cst_16 : f32 to vector<8x128xf32>
      %44 = arith.subf %43, %37 : vector<8x128xf32>
      %45 = arith.mulf %44, %42 : vector<8x128xf32>
      %46 = arith.mulf %37, %arg11 : vector<8x128xf32>
      %47 = arith.addf %45, %46 : vector<8x128xf32>
      %48 = arith.truncf %47 : vector<8x128xf32> to vector<8x128xbf16>
      %c0_17 = arith.constant 0 : index
      %c0_18 = arith.constant 0 : index
      %49 = vector.load %arg7[%c0_17, %c0_18] : memref<128x128xbf16, #tpu.memory_space<vmem>>, vector<128x128xbf16>
      %cst_19 = arith.constant dense<0.000000e+00> : vector<8x128xf32>
      %50 = tpu.matmul %48, %49, %cst_19 {dimension_numbers = #tpu.dot_dimension_numbers<[1], [0], [0], [1], [0, 0, 1, 1], [], []>} : vector<8x128xbf16>, vector<128x128xbf16>, vector<8x128xf32> -> vector<8x128xf32>
      %c0_20 = arith.constant 0 : index
      %c0_21 = arith.constant 0 : index
      %51 = vector.load %arg8[%c0_20, %c0_21] : memref<1x128xf32, #tpu.memory_space<vmem>>, vector<1x128xf32>
      %52 = vector.broadcast %51 : vector<1x128xf32> to vector<8x128xf32>
      %53 = arith.addf %50, %52 : vector<8x128xf32>
      %54 = arith.index_cast %arg10 : i32 to index
      %c0_22 = arith.constant 0 : index
      %c0_23 = arith.constant 0 : index
      %55 = vector.load %arg9[%54, %c0_22, %c0_23] : memref<5x8x128xf32, #tpu.memory_space<vmem>>, vector<1x8x128xf32>
      %56 = vector.shape_cast %55 : vector<1x8x128xf32> to vector<8x128xf32>
      %57 = vector.shape_cast %53 : vector<8x128xf32> to vector<1x8x128xf32>
      tpu.vector_store %arg9[%54, %c0_22, %c0_23], %57 {strides = array<i32>} : memref<5x8x128xf32, #tpu.memory_space<vmem>>, vector<1x8x128xf32>,
      %c20_i32 = arith.constant 20 : i32
      %58 = vector.broadcast %c20_i32 : i32 to vector<8x128xi32>
      %59 = arith.cmpi slt, %0, %58 : vector<8x128xi32>
      %cst_24 = arith.constant -1.000000e+30 : f32
      %60 = vector.broadcast %cst_24 : f32 to vector<8x128xf32>
      %61 = arith.select %59, %53, %60 : vector<8x128xi1>, vector<8x128xf32>
      %cst_25 = arith.constant dense<0xFF800000> : vector<8xf32>
      %62 = vector.multi_reduction <maximumf>, %61, %cst_25 [1] : vector<8x128xf32> to vector<8xf32>
      %63 = vector.shape_cast %62 : vector<8xf32> to vector<8x1xf32>
      %64 = vector.broadcast %63 : vector<8x1xf32> to vector<8x128xf32>
      %65 = arith.cmpf oge, %61, %64 : vector<8x128xf32>
      %c128_i32 = arith.constant 128 : i32
      %66 = vector.broadcast %c128_i32 : i32 to vector<8x128xi32>
      %67 = arith.select %65, %0, %66 : vector<8x128xi1>, vector<8x128xi32>
      %cst_26 = arith.constant dense<2147483647> : vector<8xi32>
      %68 = vector.multi_reduction <minsi>, %67, %cst_26 [1] : vector<8x128xi32> to vector<8xi32>
      %69 = vector.shape_cast %68 : vector<8xi32> to vector<8x1xi32>
      %70 = arith.index_cast %arg10 : i32 to index
      %c0_27 = arith.constant 0 : index
      %c0_28 = arith.constant 0 : index
      %71 = vector.load %arg2[%70, %c0_27, %c0_28] : memref<5x8x1xi32, #tpu.memory_space<vmem>>, vector<1x8x1xi32>
      %72 = vector.shape_cast %71 : vector<1x8x1xi32> to vector<8x1xi32>
      %c1_i32_29 = arith.constant 1 : i32
      %73 = arith.addi %arg10, %c1_i32_29 : i32
      %74 = arith.index_cast %73 : i32 to index
      %c0_30 = arith.constant 0 : index
      %c0_31 = arith.constant 0 : index
      %75 = vector.load %arg1[%74, %c0_30, %c0_31] : memref<6x8x1xi32, #tpu.memory_space<vmem>>, vector<1x8x1xi32>
      %76 = vector.shape_cast %75 : vector<1x8x1xi32> to vector<8x1xi32>
      %c0_i32_32 = arith.constant 0 : i32
      %77 = vector.broadcast %c0_i32_32 : i32 to vector<8x1xi32>
      %78 = arith.cmpi sgt, %72, %77 : vector<8x1xi32>
      %79 = arith.select %78, %76, %69 : vector<8x1xi1>, vector<8x1xi32>
      scf.yield %47, %79 : vector<8x128xf32>, vector<8x1xi32>
    }
    %c5_i32_4 = arith.constant 5 : i32
    return
  }
}

</mosaic_0001>

<llo_original>
// kernel: dla_forward.5
$region0: #{dla_forward.5}
  #allocation0 [shape = 'u32[]', space=smem, size = 0x4, offset = 0x4, fixed_abs, tag = 'smem constant byte address 0x4 - core index']
  #allocation1 [shape = 'u32[72,128]{1,0:T(1,128)}', space=vmem, size = 0x9000, scoped, tag = 'internal scratch']
  %s0 = inlined_call_operand.vmem [shape: bf16[128,128], index: 0, kind: input, shape index: {}]
  %s1 = inlined_call_operand.vmem [shape: bf16[128,128], index: 1, kind: input, shape index: {}]
  %s2 = inlined_call_operand.vmem [shape: f32[1,128], index: 2, kind: input, shape index: {}]
  %s3 = inlined_call_operand.vmem [shape: bf16[128,128], index: 3, kind: output, shape index: {}]
  %s4 = sld [smem:[#allocation0]]
  $region45: #{dla_forward.5} parent=0
    _
  %s6 = ssub.s32 1, %s4
  %s7 = scalar_select 0, %s6, %s4
  loop: start=0, step=1, limit=4
  $region2: #{dla_forward.5} parent=0 // loop_pre_header
    _
  $region3: #{dla_forward.5} parent=0 // loop_header
    %s9 = sphi 0, %s13
    %p10 = scmp.ge.s32.totalorder %s9, 4
    %s19 = sphi 0, %s21
    %s22 = sphi 0, %s19
    %s23 = sphi 0, %s22
    %s39 = sphi 0, %s23
    %s43 = sphi 0, %s43
    %s45 = sphi 0, %s43
    %s46 = sphi 0, %s45
    %s60 = sphi 0, %s46
    %s64 = sphi 0, %s64
    %s66 = sphi 0, %s64
    %s67 = sphi 0, %s66
    %s81 = sphi 0, %s67
    %s87 = sphi 0, %s89
    %s90 = sphi 0, %s87
    %s91 = sphi 0, %s90
    %s107 = sphi 0, %s91
  $region4: #{dla_forward.5} parent=0 // loop_header_branch
    %12 = sbr.rel (%p10) target = $region8
  $region5: #{dla_forward.5} parent=0 // loop_body
    %s14 = ssub.s32 %s9, 1
    %s15 = ssub.s32 %s9, 2
    %s16 = sadd.s32 %s9, 1
    %s17 = ssub.s32 %s9, %s16
    %p18 = scmp.eq.s32.totalorder %s17, 0
    %s20 = sadd.s32 %s19, 1
    %s21 = scalar_select %p18, %s19, %s20
    %p24 = pneg %p18
    %p25 = scmp.eq.s32.totalorder %s9, 1
    %p26 = por %p24, %p25
    %p27 = scmp.ne.s32.totalorder %s19, %s22
    %p28 = scmp.eq.s32.totalorder %s9, 0
    %p29 = por %p27, %p28
    %p30 = scmp.ne.s32.totalorder %s19, %s22
    %p31 = scmp.eq.s32.totalorder %s14, 1
    %p32 = por %p30, %p31
    %p33 = scmp.ne.s32.totalorder %s22, %s23
    %p34 = scmp.eq.s32.totalorder %s14, 0
    %p35 = por %p33, %p34
    %p36 = scmp.ne.s32.totalorder %s22, %s23
    %p37 = scmp.eq.s32.totalorder %s15, 1
    %p38 = por %p36, %p37
    %p40 = scmp.ne.s32.totalorder %s23, %s39
    %p41 = scmp.eq.s32.totalorder %s15, 0
    %p42 = por %p40, %p41
    %s44 = sadd.s32 %s43, 1
    %p47 = scmp.eq.s32.totalorder %s9, 1
    %p48 = scmp.ne.s32.totalorder %s43, %s45
    %p49 = scmp.eq.s32.totalorder %s9, 0
    %p50 = por %p48, %p49
    %p51 = scmp.ne.s32.totalorder %s43, %s45
    %p52 = scmp.eq.s32.totalorder %s14, 1
    %p53 = por %p51, %p52
    %p54 = scmp.ne.s32.totalorder %s45, %s46
    %p55 = scmp.eq.s32.totalorder %s14, 0
    %p56 = por %p54, %p55
    %p57 = scmp.ne.s32.totalorder %s45, %s46
    %p58 = scmp.eq.s32.totalorder %s15, 1
    %p59 = por %p57, %p58
    %p61 = scmp.ne.s32.totalorder %s46, %s60
    %p62 = scmp.eq.s32.totalorder %s15, 0
    %p63 = por %p61, %p62
    %s65 = sadd.s32 %s64, 1
    %p68 = scmp.eq.s32.totalorder %s9, 1
    %p69 = scmp.ne.s32.totalorder %s64, %s66
    %p70 = scmp.eq.s32.totalorder %s9, 0
    %p71 = por %p69, %p70
    %p72 = scmp.ne.s32.totalorder %s64, %s66
    %p73 = scmp.eq.s32.totalorder %s14, 1
    %p74 = por %p72, %p73
    %p75 = scmp.ne.s32.totalorder %s66, %s67
    %p76 = scmp.eq.s32.totalorder %s14, 0
    %p77 = por %p75, %p76
    %p78 = scmp.ne.s32.totalorder %s66, %s67
    %p79 = scmp.eq.s32.totalorder %s15, 1
    %p80 = por %p78, %p79
    %p82 = scmp.ne.s32.totalorder %s67, %s81
    %p83 = scmp.eq.s32.totalorder %s15, 0
    %p84 = por %p82, %p83
    %s85 = ssub.s32 %s9, %s16
    %p86 = scmp.eq.s32.totalorder %s85, 0
    %s88 = sadd.s32 %s87, 1
    %s89 = scalar_select %p86, %s87, %s88
    %p92 = pneg %p86
    %p93 = scmp.eq.s32.totalorder %s9, 1
    %p94 = por %p92, %p93
    %p95 = scmp.ne.s32.totalorder %s87, %s90
    %p96 = scmp.eq.s32.totalorder %s9, 0
    %p97 = por %p95, %p96
    %p98 = scmp.ne.s32.totalorder %s87, %s90
    %p99 = scmp.eq.s32.totalorder %s14, 1
    %p100 = por %p98, %p99
    %p101 = scmp.ne.s32.totalorder %s90, %s91
    %p102 = scmp.eq.s32.totalorder %s14, 0
    %p103 = por %p101, %p102
    %p104 = scmp.ne.s32.totalorder %s90, %s91
    %p105 = scmp.eq.s32.totalorder %s15, 1
    %p106 = por %p104, %p105
    %p108 = scmp.ne.s32.totalorder %s91, %s107
    %p109 = scmp.eq.s32.totalorder %s15, 0
    %p110 = por %p108, %p109
    %p111 = scmp.le.s32.totalorder 1, %s9
    %p112 = scmp.lt.s32.totalorder %s9, 3
    %p113 = pnand %p111, %p112
    %p114 = pneg %p113
    // Predicated region
    $region9: #{dla_forward.5} parent=5 // pred_check
      _
    $region10: #{dla_forward.5} parent=5 // pred_check_branch
      %116 = sbr.rel (%p113) target = $region12
    $region11: #{dla_forward.5} parent=5 // pred_region
      %s117 = ssub.s32 %s9, 1
      // Predicated region
      $region13: #{dla_forward.5} parent=11 // pred_check
        %p118 = pneg %p56
      $region14: #{dla_forward.5} parent=11 // pred_check_branch
        %120 = sbr.rel (%p118) target = $region16
      $region15: #{dla_forward.5} parent=11 // pred_region
        _
      $region16: #{dla_forward.5} parent=11 // pred_fallthru
        _
      // Predicated region
      $region17: #{dla_forward.5} parent=11 // pred_check
        %p121 = pneg %p77
      $region18: #{dla_forward.5} parent=11 // pred_check_branch
        %123 = sbr.rel (%p121) target = $region20
      $region19: #{dla_forward.5} parent=11 // pred_region
        _
      $region20: #{dla_forward.5} parent=11 // pred_fallthru
        _
    $region12: #{dla_forward.5} parent=5 // pred_fallthru
      _
    %p124 = scmp.lt.s32.totalorder %s9, 2
    // Predicated region
    $region21: #{dla_forward.5} parent=5 // pred_check
      %p125 = pneg %p124
    $region22: #{dla_forward.5} parent=5 // pred_check_branch
      %127 = sbr.rel (%p125) target = $region24
    $region23: #{dla_forward.5} parent=5 // pred_region
      // Predicated region
      $region25: #{dla_forward.5} parent=23 // pred_check
        %p128 = pneg %p29
      $region26: #{dla_forward.5} parent=23 // pred_check_branch
        %130 = sbr.rel (%p128) target = $region28
      $region27: #{dla_forward.5} parent=23 // pred_region
        %s131 = smul.u32 8, %s9
        %p132 = scmp.lt.s32.totalorder %s131, 15
        %s133 = scalar_select %p132, %s131, 15
        %s134 = smul.addr %s133, 4
        %s135 = scalar_lea.vmem %s0, %s134
        %s136 = smul.u32 8, %s9
      $region28: #{dla_forward.5} parent=23 // pred_fallthru
        _
    $region24: #{dla_forward.5} parent=5 // pred_fallthru
      _
    %p137 = scmp.le.s32.totalorder 1, %s9
    %p138 = scmp.lt.s32.totalorder %s9, 3
    %p139 = pnand %p137, %p138
    %p140 = pneg %p139
    // Predicated region
    $region29: #{dla_forward.5} parent=5 // pred_check
      _
    $region30: #{dla_forward.5} parent=5 // pred_check_branch
      %142 = sbr.rel (%p139) target = $region32
    $region31: #{dla_forward.5} parent=5 // pred_region
      %s143 = ssub.s32 %s9, 1
      %s144 = smul.u32 8, %s14
      %p145 = scmp.lt.s32.totalorder %s144, 15
      %s146 = scalar_select %p145, %s144, 15
      %s147 = smul.addr %s146, 4
      %s148 = scalar_lea.vmem %s0, %s147
      %p149 = pneg %p35
      %p150 = pneg %p32
      %p151 = pneg %p56
      %p152 = pneg %p53
      %p153 = pneg %p77
      %p154 = pneg %p74
      %p155 = pneg %p103
      %p156 = pneg %p100
      %s157 = smul.u32 8, %s14
      %p158 = scmp.lt.s32.totalorder %s157, 15
      %s159 = scalar_select %p158, %s157, 15
      %s160 = smul.addr %s159, 4
      %s161 = scalar_lea.vmem %s3, %s160
      %s162 = smul.u32 8, %s14
      %p163 = scmp.lt.s32.totalorder %s162, 15
      %s164 = scalar_select %p163, %s162, 15
      %s165 = smul.addr %s164, 4
      %s166 = scalar_lea.vmem %s0, %s165
      %s167 = smul.u32 8, %s14
      %s168 = smul.u32 8, %s14
      %p169 = scmp.lt.s32.totalorder %s168, 15
      %s170 = scalar_select %p169, %s168, 15
      %s171 = smul.addr %s170, 4
      %s172 = scalar_lea.vmem %s3, %s171
      %s173 = smul.u32 8, %s14
      %v174 = vld [vmem:[%s166] sm:$0xf]
      %v175 = vld [vmem:[%s166 + $0x4] sm:$0xf]
      %v176 = vld [vmem:[%s166 + $0x8] sm:$0xf]
      %v177 = vld [vmem:[%s166 + $0xc] sm:$0xf]
      %v178 = vld [vmem:[%s166 + $0x10] sm:$0xf]
      %v179 = vld [vmem:[%s166 + $0x14] sm:$0xf]
      %v180 = vld [vmem:[%s166 + $0x18] sm:$0xf]
      %v181 = vld [vmem:[%s166 + $0x1c] sm:$0xf]
      %v182 = vld [vmem:[%s1] sm:$0xf]
      %v183 = vld [vmem:[%s1 + $0x4] sm:$0xf]
      %v184 = vld [vmem:[%s1 + $0x8] sm:$0xf]
      %v185 = vld [vmem:[%s1 + $0xc] sm:$0xf]
      %v186 = vld [vmem:[%s1 + $0x10] sm:$0xf]
      %v187 = vld [vmem:[%s1 + $0x14] sm:$0xf]
      %v188 = vld [vmem:[%s1 + $0x18] sm:$0xf]
      %v189 = vld [vmem:[%s1 + $0x1c] sm:$0xf]
      %v190 = vld [vmem:[%s1 + $0x20] sm:$0xf]
      %v191 = vld [vmem:[%s1 + $0x24] sm:$0xf]
      %v192 = vld [vmem:[%s1 + $0x28] sm:$0xf]
      %v193 = vld [vmem:[%s1 + $0x2c] sm:$0xf]
      %v194 = vld [vmem:[%s1 + $0x30] sm:$0xf]
      %v195 = vld [vmem:[%s1 + $0x34] sm:$0xf]
      %v196 = vld [vmem:[%s1 + $0x38] sm:$0xf]
      %v197 = vld [vmem:[%s1 + $0x3c] sm:$0xf]
      %v198 = vld [vmem:[%s2] sm:$0x1]
      %v200 = vperm.slane %v198, 0
      %v210 = vunpack.c.l.b16 %v174
      %v211 = vunpack.c.l.b16 %v175
      %v212 = vunpack.c.l.b16 %v176
      %v213 = vunpack.c.l.b16 %v177
      %v214 = vunpack.c.l.b16 %v178
      %v215 = vunpack.c.l.b16 %v179
      %v216 = vunpack.c.l.b16 %v180
      %v217 = vunpack.c.l.b16 %v181
      %v218 = vpack.c.b16 %v211, %v210
      %v219 = vpack.c.b16 %v213, %v212
      %v220 = vpack.c.b16 %v215, %v214
      %v221 = vpack.c.b16 %v217, %v216
      %v242 = vunpack.c.l.b16 %v182
      %v243 = vunpack.c.l.b16 %v183
      %v244 = vunpack.c.l.b16 %v184
      %v245 = vunpack.c.l.b16 %v185
      %v246 = vunpack.c.l.b16 %v186
      %v247 = vunpack.c.l.b16 %v187
      %v248 = vunpack.c.l.b16 %v188
      %v249 = vunpack.c.l.b16 %v189
      %v250 = vunpack.c.l.b16 %v190
      %v251 = vunpack.c.l.b16 %v191
      %v252 = vunpack.c.l.b16 %v192
      %v253 = vunpack.c.l.b16 %v193
      %v254 = vunpack.c.l.b16 %v194
      %v255 = vunpack.c.l.b16 %v195
      %v256 = vunpack.c.l.b16 %v196
      %v257 = vunpack.c.l.b16 %v197
      %v258 = vpack.c.b16 %v243, %v242
      %v259 = vpack.c.b16 %v245, %v244
      %v260 = vpack.c.b16 %v247, %v246
      %v261 = vpack.c.b16 %v249, %v248
      %v262 = vpack.c.b16 %v251, %v250
      %v263 = vpack.c.b16 %v253, %v252
      %v264 = vpack.c.b16 %v255, %v254
      %v265 = vpack.c.b16 %v257, %v256
      %274 = vmatpush.bf16.msra.mxu0 %v265
      %275 = vmatpush.bf16.msra.mxu0 %v264
      %276 = vmatpush.bf16.msra.mxu0 %v263
      %277 = vmatpush.bf16.msra.mxu0 %v262
      %278 = vmatpush.bf16.msra.mxu0 %v261
      %279 = vmatpush.bf16.msra.mxu0 %v260
      %280 = vmatpush.bf16.msra.mxu0 %v259
      %281 = vmatpush.bf16.msra.mxu0 %v258
      %282 = vmatmul.bf16.gmra.mxu0 %v218
      %v283 = vpop.f32.mrf.mxu0
      %v284 = vadd.f32 %v200, %v283
      %v285 = vpop.f32.mrf.mxu0
      %v286 = vadd.f32 %v200, %v285
      %287 = vmatmul.bf16.gmra.mxu0 %v219
      %v288 = vpop.f32.mrf.mxu0
      %v289 = vadd.f32 %v200, %v288
      %v290 = vpop.f32.mrf.mxu0
      %v291 = vadd.f32 %v200, %v290
      %292 = vmatmul.bf16.gmra.mxu0 %v220
      %v293 = vpop.f32.mrf.mxu0
      %v294 = vadd.f32 %v200, %v293
      %v295 = vpop.f32.mrf.mxu0
      %v296 = vadd.f32 %v200, %v295
      %297 = vmatmul.bf16.gmra.mxu0 %v221
      %v298 = vpop.f32.mrf.mxu0
      %v299 = vadd.f32 %v200, %v298
      %v300 = vpop.f32.mrf.mxu0
      %v301 = vadd.f32 %v200, %v300
      %302 = vdwg.mxu0
      %v303 = vmax.f32 %v284, 0.0
      %v304 = vmax.f32 %v286, 0.0
      %v305 = vmax.f32 %v289, 0.0
      %v306 = vmax.f32 %v291, 0.0
      %v307 = vmax.f32 %v294, 0.0
      %v308 = vmax.f32 %v296, 0.0
      %v309 = vmax.f32 %v299, 0.0
      %v310 = vmax.f32 %v301, 0.0
      %v311 = vpack.c.bf16 %v303, %v303
      %v312 = vpack.c.bf16 %v304, %v304
      %v313 = vpack.c.bf16 %v305, %v305
      %v314 = vpack.c.bf16 %v306, %v306
      %v315 = vpack.c.bf16 %v307, %v307
      %v316 = vpack.c.bf16 %v308, %v308
      %v317 = vpack.c.bf16 %v309, %v309
      %v318 = vpack.c.bf16 %v310, %v310
      %319 = vst [vmem:[%s172] sm:$0xf] %v311
      %320 = vst [vmem:[%s172 + $0x4] sm:$0xf] %v312
      %321 = vst [vmem:[%s172 + $0x8] sm:$0xf] %v313
      %322 = vst [vmem:[%s172 + $0xc] sm:$0xf] %v314
      %323 = vst [vmem:[%s172 + $0x10] sm:$0xf] %v315
      %324 = vst [vmem:[%s172 + $0x14] sm:$0xf] %v316
      %325 = vst [vmem:[%s172 + $0x18] sm:$0xf] %v317
      %326 = vst [vmem:[%s172 + $0x1c] sm:$0xf] %v318
      %s327 = smul.u32 8, %s14
      %p328 = scmp.lt.s32.totalorder %s327, 15
      %s329 = scalar_select %p328, %s327, 15
      %s330 = smul.addr %s329, 4
      %s331 = scalar_lea.vmem %s3, %s330
      // Predicated region
      $region33: #{dla_forward.5} parent=31 // pred_check
        %p332 = pneg %p100
      $region34: #{dla_forward.5} parent=31 // pred_check_branch
        %334 = sbr.rel (%p332) target = $region36
      $region35: #{dla_forward.5} parent=31 // pred_region
        %s335 = smul.u32 8, %s14
      $region36: #{dla_forward.5} parent=31 // pred_fallthru
        _
    $region32: #{dla_forward.5} parent=5 // pred_fallthru
      _
    %p336 = scmp.le.s32.totalorder 2, %s9
    // Predicated region
    $region37: #{dla_forward.5} parent=5 // pred_check
      %p337 = pneg %p336
    $region38: #{dla_forward.5} parent=5 // pred_check_branch
      %339 = sbr.rel (%p337) target = $region40
    $region39: #{dla_forward.5} parent=5 // pred_region
      %s340 = ssub.s32 %s9, 2
      // Predicated region
      $region41: #{dla_forward.5} parent=39 // pred_check
        %p341 = pneg %p106
      $region42: #{dla_forward.5} parent=39 // pred_check_branch
        %343 = sbr.rel (%p341) target = $region44
      $region43: #{dla_forward.5} parent=39 // pred_region
        %s344 = smul.u32 8, %s15
        %p345 = scmp.lt.s32.totalorder %s344, 15
        %s346 = scalar_select %p345, %s344, 15
        %s347 = smul.addr %s346, 4
        %s348 = scalar_lea.vmem %s3, %s347
      $region44: #{dla_forward.5} parent=39 // pred_fallthru
        _
    $region40: #{dla_forward.5} parent=5 // pred_fallthru
      _
  $region6: #{dla_forward.5} parent=0 // loop_footer
    %s13 = sadd.s32 1, %s9
  $region7: #{dla_forward.5} parent=0 // loop_footer_branch
    %8 = sbr.rel target = $region3
  $region8: #{dla_forward.5} parent=0 // loop_exit
    _

// kernel: dla_forward.7
$region0: #{dla_forward.7}
  #allocation0 [shape = 'u32[]', space=smem, size = 0x4, offset = 0x4, fixed_abs, tag = 'smem constant byte address 0x4 - core index']
  #allocation1 [shape = 'u32[72,128]{1,0:T(1,128)}', space=vmem, size = 0x9000, scoped, tag = 'internal scratch']
  %s0 = inlined_call_operand.vmem [shape: f32[8,128], index: 0, kind: input, shape index: {}]
  %s1 = inlined_call_operand.vmem [shape: s32[6,8,1], index: 1, kind: input, shape index: {}]
  %s2 = inlined_call_operand.vmem [shape: s32[5,8,1], index: 2, kind: input, shape index: {}]
  %s3 = inlined_call_operand.vmem [shape: bf16[128,384], index: 3, kind: input, shape index: {}]
  %s4 = inlined_call_operand.vmem [shape: bf16[128,384], index: 4, kind: input, shape index: {}]
  %s5 = inlined_call_operand.vmem [shape: f32[1,384], index: 5, kind: input, shape index: {}]
  %s6 = inlined_call_operand.vmem [shape: f32[1,384], index: 6, kind: input, shape index: {}]
  %s7 = inlined_call_operand.vmem [shape: bf16[128,128], index: 7, kind: input, shape index: {}]
  %s8 = inlined_call_operand.vmem [shape: f32[1,128], index: 8, kind: input, shape index: {}]
  %s9 = inlined_call_operand.vmem [shape: f32[5,8,128], index: 9, kind: output, shape index: {}]
  %s10 = sld [smem:[#allocation0]]
  $region53: #{dla_forward.7} parent=0
    _
  %s12 = ssub.s32 1, %s10
  %s13 = scalar_select 0, %s12, %s10
  // Predicated region
  $region2: #{dla_forward.7} parent=0 // pred_check
    _
  $region3: #{dla_forward.7} parent=0 // pred_check_branch
    %15 = sbr.rel (0) target = $region5
  $region4: #{dla_forward.7} parent=0 // pred_region
    _
  $region5: #{dla_forward.7} parent=0 // pred_fallthru
    _
  // Predicated region
  $region6: #{dla_forward.7} parent=0 // pred_check
    _
  $region7: #{dla_forward.7} parent=0 // pred_check_branch
    %17 = sbr.rel (0) target = $region9
  $region8: #{dla_forward.7} parent=0 // pred_region
    _
  $region9: #{dla_forward.7} parent=0 // pred_fallthru
    _
  // Predicated region
  $region10: #{dla_forward.7} parent=0 // pred_check
    _
  $region11: #{dla_forward.7} parent=0 // pred_check_branch
    %19 = sbr.rel (0) target = $region13
  $region12: #{dla_forward.7} parent=0 // pred_region
    _
  $region13: #{dla_forward.7} parent=0 // pred_fallthru
    _
  // Predicated region
  $region14: #{dla_forward.7} parent=0 // pred_check
    _
  $region15: #{dla_forward.7} parent=0 // pred_check_branch
    %21 = sbr.rel (0) target = $region17
  $region16: #{dla_forward.7} parent=0 // pred_region
    _
  $region17: #{dla_forward.7} parent=0 // pred_fallthru
    _
  // Predicated region
  $region18: #{dla_forward.7} parent=0 // pred_check
    _
  $region19: #{dla_forward.7} parent=0 // pred_check_branch
    %23 = sbr.rel (0) target = $region21
  $region20: #{dla_forward.7} parent=0 // pred_region
    _
  $region21: #{dla_forward.7} parent=0 // pred_fallthru
    _
  // Predicated region
  $region22: #{dla_forward.7} parent=0 // pred_check
    _
  $region23: #{dla_forward.7} parent=0 // pred_check_branch
    %25 = sbr.rel (0) target = $region25
  $region24: #{dla_forward.7} parent=0 // pred_region
    _
  $region25: #{dla_forward.7} parent=0 // pred_fallthru
    _
  // Predicated region
  $region26: #{dla_forward.7} parent=0 // pred_check
    _
  $region27: #{dla_forward.7} parent=0 // pred_check_branch
    %27 = sbr.rel (0) target = $region29
  $region28: #{dla_forward.7} parent=0 // pred_region
    _
  $region29: #{dla_forward.7} parent=0 // pred_fallthru
    _
  // Predicated region
  $region30: #{dla_forward.7} parent=0 // pred_check
    _
  $region31: #{dla_forward.7} parent=0 // pred_check_branch
    %29 = sbr.rel (0) target = $region33
  $region32: #{dla_forward.7} parent=0 // pred_region
    _
  $region33: #{dla_forward.7} parent=0 // pred_fallthru
    _
  // Predicated region
  $region34: #{dla_forward.7} parent=0 // pred_check
    _
  $region35: #{dla_forward.7} parent=0 // pred_check_branch
    %31 = sbr.rel (0) target = $region37
  $region36: #{dla_forward.7} parent=0 // pred_region
    _
  $region37: #{dla_forward.7} parent=0 // pred_fallthru
    _
  %v32 = vlaneseq
  %v33 = vand.u32 %v32, 127
  %v34 = vld [vmem:[%s0] sm:$0xff]
  %v35 = vld [vmem:[%s1] sm:$0xff]
  loop: start=0, step=1, limit=5
  $region38: #{dla_forward.7} parent=0 // loop_pre_header
    _
  $region39: #{dla_forward.7} parent=0 // loop_header
    %s37 = sphi 0, %s41
    %p38 = scmp.ge.s32.totalorder %s37, 5
    %v42 = vphi %v34, %v512
    %v43 = vphi %v35, %v625
  $region40: #{dla_forward.7} parent=0 // loop_header_branch
    %40 = sbr.rel (%p38) target = $region44
  $region41: #{dla_forward.7} parent=0 // loop_body
    %44 = vset.pattern.permute.xlu0 0
    %45 = vperm.xlu0 %44, %v43
    %v46 = vpop.permute.xlu0 %45
    %vm47 = vcmp.eq.s32.totalorder %v33, %v46
    %v48 = vsel %vm47, 1, 0
    %v49 = vcvt.s32.f32 %v48
    %v50 = vpack.c.bf16 %v49, %v49
    %v51 = vld [vmem:[%s3] sm:$0xff]
    %v52 = vld [vmem:[%s3 + $0x8] sm:$0xf]
    %v53 = vld [vmem:[%s3 + $0xc] sm:$0xff]
    %v54 = vld [vmem:[%s3 + $0x14] sm:$0xf]
    %v55 = vld [vmem:[%s3 + $0x18] sm:$0xff]
    %v56 = vld [vmem:[%s3 + $0x20] sm:$0xf]
    %v57 = vld [vmem:[%s3 + $0x24] sm:$0xff]
    %v58 = vld [vmem:[%s3 + $0x2c] sm:$0xf]
    %v59 = vld [vmem:[%s3 + $0x30] sm:$0xff]
    %v60 = vld [vmem:[%s3 + $0x38] sm:$0xf]
    %v61 = vld [vmem:[%s3 + $0x3c] sm:$0xff]
    %v62 = vld [vmem:[%s3 + $0x44] sm:$0xf]
    %v63 = vld [vmem:[%s3 + $0x48] sm:$0xff]
    %v64 = vld [vmem:[%s3 + $0x50] sm:$0xf]
    %v65 = vld [vmem:[%s3 + $0x54] sm:$0xff]
    %v66 = vld [vmem:[%s3 + $0x5c] sm:$0xf]
    %v67 = vld [vmem:[%s3 + $0x60] sm:$0xff]
    %v68 = vld [vmem:[%s3 + $0x68] sm:$0xf]
    %v69 = vld [vmem:[%s3 + $0x6c] sm:$0xff]
    %v70 = vld [vmem:[%s3 + $0x74] sm:$0xf]
    %v71 = vld [vmem:[%s3 + $0x78] sm:$0xff]
    %v72 = vld [vmem:[%s3 + $0x80] sm:$0xf]
    %v73 = vld [vmem:[%s3 + $0x84] sm:$0xff]
    %v74 = vld [vmem:[%s3 + $0x8c] sm:$0xf]
    %v75 = vld [vmem:[%s3 + $0x90] sm:$0xff]
    %v76 = vld [vmem:[%s3 + $0x98] sm:$0xf]
    %v77 = vld [vmem:[%s3 + $0x9c] sm:$0xff]
    %v78 = vld [vmem:[%s3 + $0xa4] sm:$0xf]
    %v79 = vld [vmem:[%s3 + $0xa8] sm:$0xff]
    %v80 = vld [vmem:[%s3 + $0xb0] sm:$0xf]
    %v81 = vld [vmem:[%s3 + $0xb4] sm:$0xff]
    %v82 = vld [vmem:[%s3 + $0xbc] sm:$0xf]
    %v83 = vld [vmem:[%s5] sm:$0x7]
    %v85 = vperm.slane %v83, 0
    %v86 = vperm.slane %v83, 1
    %v87 = vperm.slane %v83, 2
    %v123 = vunpack.c.l.b16 %v51
    %v124 = vunpack.c.h.b16 %v51
    %v125 = vunpack.c.l.b16 %v52
    %v126 = vunpack.c.l.b16 %v53
    %v127 = vunpack.c.h.b16 %v53
    %v128 = vunpack.c.l.b16 %v54
    %v129 = vunpack.c.l.b16 %v55
    %v130 = vunpack.c.h.b16 %v55
    %v131 = vunpack.c.l.b16 %v56
    %v132 = vunpack.c.l.b16 %v57
    %v133 = vunpack.c.h.b16 %v57
    %v134 = vunpack.c.l.b16 %v58
    %v135 = vunpack.c.l.b16 %v59
    %v136 = vunpack.c.h.b16 %v59
    %v137 = vunpack.c.l.b16 %v60
    %v138 = vunpack.c.l.b16 %v61
    %v139 = vunpack.c.h.b16 %v61
    %v140 = vunpack.c.l.b16 %v62
    %v141 = vunpack.c.l.b16 %v63
    %v142 = vunpack.c.h.b16 %v63
    %v143 = vunpack.c.l.b16 %v64
    %v144 = vunpack.c.l.b16 %v65
    %v145 = vunpack.c.h.b16 %v65
    %v146 = vunpack.c.l.b16 %v66
    %v147 = vunpack.c.l.b16 %v67
    %v148 = vunpack.c.h.b16 %v67
    %v149 = vunpack.c.l.b16 %v68
    %v150 = vunpack.c.l.b16 %v69
    %v151 = vunpack.c.h.b16 %v69
    %v152 = vunpack.c.l.b16 %v70
    %v153 = vunpack.c.l.b16 %v71
    %v154 = vunpack.c.h.b16 %v71
    %v155 = vunpack.c.l.b16 %v72
    %v156 = vunpack.c.l.b16 %v73
    %v157 = vunpack.c.h.b16 %v73
    %v158 = vunpack.c.l.b16 %v74
    %v159 = vunpack.c.l.b16 %v75
    %v160 = vunpack.c.h.b16 %v75
    %v161 = vunpack.c.l.b16 %v76
    %v162 = vunpack.c.l.b16 %v77
    %v163 = vunpack.c.h.b16 %v77
    %v164 = vunpack.c.l.b16 %v78
    %v165 = vunpack.c.l.b16 %v79
    %v166 = vunpack.c.h.b16 %v79
    %v167 = vunpack.c.l.b16 %v80
    %v168 = vunpack.c.l.b16 %v81
    %v169 = vunpack.c.h.b16 %v81
    %v170 = vunpack.c.l.b16 %v82
    %v171 = vpack.c.b16 %v126, %v123
    %v172 = vpack.c.b16 %v127, %v124
    %v173 = vpack.c.b16 %v128, %v125
    %v174 = vpack.c.b16 %v132, %v129
    %v175 = vpack.c.b16 %v133, %v130
    %v176 = vpack.c.b16 %v134, %v131
    %v177 = vpack.c.b16 %v138, %v135
    %v178 = vpack.c.b16 %v139, %v136
    %v179 = vpack.c.b16 %v140, %v137
    %v180 = vpack.c.b16 %v144, %v141
    %v181 = vpack.c.b16 %v145, %v142
    %v182 = vpack.c.b16 %v146, %v143
    %v183 = vpack.c.b16 %v150, %v147
    %v184 = vpack.c.b16 %v151, %v148
    %v185 = vpack.c.b16 %v152, %v149
    %v186 = vpack.c.b16 %v156, %v153
    %v187 = vpack.c.b16 %v157, %v154
    %v188 = vpack.c.b16 %v158, %v155
    %v189 = vpack.c.b16 %v162, %v159
    %v190 = vpack.c.b16 %v163, %v160
    %v191 = vpack.c.b16 %v164, %v161
    %v192 = vpack.c.b16 %v168, %v165
    %v193 = vpack.c.b16 %v169, %v166
    %v194 = vpack.c.b16 %v170, %v167
    %219 = vmatpush.bf16.msra.mxu0 %v192
    %220 = vmatpush.bf16.msra.mxu0 %v189
    %221 = vmatpush.bf16.msra.mxu0 %v186
    %222 = vmatpush.bf16.msra.mxu0 %v183
    %223 = vmatpush.bf16.msra.mxu0 %v180
    %224 = vmatpush.bf16.msra.mxu0 %v177
    %225 = vmatpush.bf16.msra.mxu0 %v174
    %226 = vmatpush.bf16.msra.mxu0 %v171
    %227 = vmatmul.bf16.gmra.mxu0 %v50
    %v228 = vpop.f32.mrf.mxu0
    %v229 = vadd.f32 %v85, %v228
    %v230 = vpop.f32.mrf.mxu0
    %231 = vdwg.mxu0
    %232 = vmatpush.bf16.msra.mxu0 %v193
    %233 = vmatpush.bf16.msra.mxu0 %v190
    %234 = vmatpush.bf16.msra.mxu0 %v187
    %235 = vmatpush.bf16.msra.mxu0 %v184
    %236 = vmatpush.bf16.msra.mxu0 %v181
    %237 = vmatpush.bf16.msra.mxu0 %v178
    %238 = vmatpush.bf16.msra.mxu0 %v175
    %239 = vmatpush.bf16.msra.mxu0 %v172
    %240 = vmatmul.bf16.gmra.mxu0 %v50
    %v241 = vpop.f32.mrf.mxu0
    %v242 = vadd.f32 %v86, %v241
    %v243 = vpop.f32.mrf.mxu0
    %244 = vdwg.mxu0
    %245 = vmatpush.bf16.msra.mxu0 %v194
    %246 = vmatpush.bf16.msra.mxu0 %v191
    %247 = vmatpush.bf16.msra.mxu0 %v188
    %248 = vmatpush.bf16.msra.mxu0 %v185
    %249 = vmatpush.bf16.msra.mxu0 %v182
    %250 = vmatpush.bf16.msra.mxu0 %v179
    %251 = vmatpush.bf16.msra.mxu0 %v176
    %252 = vmatpush.bf16.msra.mxu0 %v173
    %253 = vmatmul.bf16.gmra.mxu0 %v50
    %v254 = vpop.f32.mrf.mxu0
    %v255 = vadd.f32 %v87, %v254
    %v256 = vpop.f32.mrf.mxu0
    %257 = vdwg.mxu0
    %v258 = vpack.c.bf16 %v42, %v42
    %v259 = vld [vmem:[%s4] sm:$0xff]
    %v260 = vld [vmem:[%s4 + $0x8] sm:$0xf]
    %v261 = vld [vmem:[%s4 + $0xc] sm:$0xff]
    %v262 = vld [vmem:[%s4 + $0x14] sm:$0xf]
    %v263 = vld [vmem:[%s4 + $0x18] sm:$0xff]
    %v264 = vld [vmem:[%s4 + $0x20] sm:$0xf]
    %v265 = vld [vmem:[%s4 + $0x24] sm:$0xff]
    %v266 = vld [vmem:[%s4 + $0x2c] sm:$0xf]
    %v267 = vld [vmem:[%s4 + $0x30] sm:$0xff]
    %v268 = vld [vmem:[%s4 + $0x38] sm:$0xf]
    %v269 = vld [vmem:[%s4 + $0x3c] sm:$0xff]
    %v270 = vld [vmem:[%s4 + $0x44] sm:$0xf]
    %v271 = vld [vmem:[%s4 + $0x48] sm:$0xff]
    %v272 = vld [vmem:[%s4 + $0x50] sm:$0xf]
    %v273 = vld [vmem:[%s4 + $0x54] sm:$0xff]
    %v274 = vld [vmem:[%s4 + $0x5c] sm:$0xf]
    %v275 = vld [vmem:[%s4 + $0x60] sm:$0xff]
    %v276 = vld [vmem:[%s4 + $0x68] sm:$0xf]
    %v277 = vld [vmem:[%s4 + $0x6c] sm:$0xff]
    %v278 = vld [vmem:[%s4 + $0x74] sm:$0xf]
    %v279 = vld [vmem:[%s4 + $0x78] sm:$0xff]
    %v280 = vld [vmem:[%s4 + $0x80] sm:$0xf]
    %v281 = vld [vmem:[%s4 + $0x84] sm:$0xff]
    %v282 = vld [vmem:[%s4 + $0x8c] sm:$0xf]
    %v283 = vld [vmem:[%s4 + $0x90] sm:$0xff]
    %v284 = vld [vmem:[%s4 + $0x98] sm:$0xf]
    %v285 = vld [vmem:[%s4 + $0x9c] sm:$0xff]
    %v286 = vld [vmem:[%s4 + $0xa4] sm:$0xf]
    %v287 = vld [vmem:[%s4 + $0xa8] sm:$0xff]
    %v288 = vld [vmem:[%s4 + $0xb0] sm:$0xf]
    %v289 = vld [vmem:[%s4 + $0xb4] sm:$0xff]
    %v290 = vld [vmem:[%s4 + $0xbc] sm:$0xf]
    %v291 = vld [vmem:[%s6] sm:$0x7]
    %v293 = vperm.slane %v291, 0
    %v294 = vperm.slane %v291, 1
    %v295 = vperm.slane %v291, 2
    %v331 = vunpack.c.l.b16 %v259
    %v332 = vunpack.c.h.b16 %v259
    %v333 = vunpack.c.l.b16 %v260
    %v334 = vunpack.c.l.b16 %v261
    %v335 = vunpack.c.h.b16 %v261
    %v336 = vunpack.c.l.b16 %v262
    %v337 = vunpack.c.l.b16 %v263
    %v338 = vunpack.c.h.b16 %v263
    %v339 = vunpack.c.l.b16 %v264
    %v340 = vunpack.c.l.b16 %v265
    %v341 = vunpack.c.h.b16 %v265
    %v342 = vunpack.c.l.b16 %v266
    %v343 = vunpack.c.l.b16 %v267
    %v344 = vunpack.c.h.b16 %v267
    %v345 = vunpack.c.l.b16 %v268
    %v346 = vunpack.c.l.b16 %v269
    %v347 = vunpack.c.h.b16 %v269
    %v348 = vunpack.c.l.b16 %v270
    %v349 = vunpack.c.l.b16 %v271
    %v350 = vunpack.c.h.b16 %v271
    %v351 = vunpack.c.l.b16 %v272
    %v352 = vunpack.c.l.b16 %v273
    %v353 = vunpack.c.h.b16 %v273
    %v354 = vunpack.c.l.b16 %v274
    %v355 = vunpack.c.l.b16 %v275
    %v356 = vunpack.c.h.b16 %v275
    %v357 = vunpack.c.l.b16 %v276
    %v358 = vunpack.c.l.b16 %v277
    %v359 = vunpack.c.h.b16 %v277
    %v360 = vunpack.c.l.b16 %v278
    %v361 = vunpack.c.l.b16 %v279
    %v362 = vunpack.c.h.b16 %v279
    %v363 = vunpack.c.l.b16 %v280
    %v364 = vunpack.c.l.b16 %v281
    %v365 = vunpack.c.h.b16 %v281
    %v366 = vunpack.c.l.b16 %v282
    %v367 = vunpack.c.l.b16 %v283
    %v368 = vunpack.c.h.b16 %v283
    %v369 = vunpack.c.l.b16 %v284
    %v370 = vunpack.c.l.b16 %v285
    %v371 = vunpack.c.h.b16 %v285
    %v372 = vunpack.c.l.b16 %v286
    %v373 = vunpack.c.l.b16 %v287
    %v374 = vunpack.c.h.b16 %v287
    %v375 = vunpack.c.l.b16 %v288
    %v376 = vunpack.c.l.b16 %v289
    %v377 = vunpack.c.h.b16 %v289
    %v378 = vunpack.c.l.b16 %v290
    %v379 = vpack.c.b16 %v334, %v331
    %v380 = vpack.c.b16 %v335, %v332
    %v381 = vpack.c.b16 %v336, %v333
    %v382 = vpack.c.b16 %v340, %v337
    %v383 = vpack.c.b16 %v341, %v338
    %v384 = vpack.c.b16 %v342, %v339
    %v385 = vpack.c.b16 %v346, %v343
    %v386 = vpack.c.b16 %v347, %v344
    %v387 = vpack.c.b16 %v348, %v345
    %v388 = vpack.c.b16 %v352, %v349
    %v389 = vpack.c.b16 %v353, %v350
    %v390 = vpack.c.b16 %v354, %v351
    %v391 = vpack.c.b16 %v358, %v355
    %v392 = vpack.c.b16 %v359, %v356
    %v393 = vpack.c.b16 %v360, %v357
    %v394 = vpack.c.b16 %v364, %v361
    %v395 = vpack.c.b16 %v365, %v362
    %v396 = vpack.c.b16 %v366, %v363
    %v397 = vpack.c.b16 %v370, %v367
    %v398 = vpack.c.b16 %v371, %v368
    %v399 = vpack.c.b16 %v372, %v369
    %v400 = vpack.c.b16 %v376, %v373
    %v401 = vpack.c.b16 %v377, %v374
    %v402 = vpack.c.b16 %v378, %v375
    %427 = vmatpush.bf16.msra.mxu0 %v400
    %428 = vmatpush.bf16.msra.mxu0 %v397
    %429 = vmatpush.bf16.msra.mxu0 %v394
    %430 = vmatpush.bf16.msra.mxu0 %v391
    %431 = vmatpush.bf16.msra.mxu0 %v388
    %432 = vmatpush.bf16.msra.mxu0 %v385
    %433 = vmatpush.bf16.msra.mxu0 %v382
    %434 = vmatpush.bf16.msra.mxu0 %v379
    %435 = vmatmul.bf16.gmra.mxu0 %v258
    %v436 = vpop.f32.mrf.mxu0
    %v437 = vadd.f32 %v293, %v436
    %v438 = vpop.f32.mrf.mxu0
    %439 = vdwg.mxu0
    %440 = vmatpush.bf16.msra.mxu0 %v401
    %441 = vmatpush.bf16.msra.mxu0 %v398
    %442 = vmatpush.bf16.msra.mxu0 %v395
    %443 = vmatpush.bf16.msra.mxu0 %v392
    %444 = vmatpush.bf16.msra.mxu0 %v389
    %445 = vmatpush.bf16.msra.mxu0 %v386
    %446 = vmatpush.bf16.msra.mxu0 %v383
    %447 = vmatpush.bf16.msra.mxu0 %v380
    %448 = vmatmul.bf16.gmra.mxu0 %v258
    %v449 = vpop.f32.mrf.mxu0
    %v450 = vadd.f32 %v294, %v449
    %v451 = vpop.f32.mrf.mxu0
    %452 = vdwg.mxu0
    %453 = vmatpush.bf16.msra.mxu0 %v402
    %454 = vmatpush.bf16.msra.mxu0 %v399
    %455 = vmatpush.bf16.msra.mxu0 %v396
    %456 = vmatpush.bf16.msra.mxu0 %v393
    %457 = vmatpush.bf16.msra.mxu0 %v390
    %458 = vmatpush.bf16.msra.mxu0 %v387
    %459 = vmatpush.bf16.msra.mxu0 %v384
    %460 = vmatpush.bf16.msra.mxu0 %v381
    %461 = vmatmul.bf16.gmra.mxu0 %v258
    %v462 = vpop.f32.mrf.mxu0
    %v463 = vadd.f32 %v295, %v462
    %v464 = vpop.f32.mrf.mxu0
    %465 = vdwg.mxu0
    %v466 = vadd.f32 %v229, %v437
    %v467 = vxor.u32 %v466, 2147483648
    %v468 = vmul.f32 %v467, 1.442695
    %v469 = vpow.pop %v468
    %v470 = vadd.f32 %v469, 1.0
    %v471 = vrcp.pop %v470
    %v472 = vmul.f32 %v470, %v471
    %v473 = vsub.f32 1.0, %v472
    %v474 = vmul.f32 %v471, %v473
    %v475 = vadd.f32 %v471, %v474
    %vm476 = vweird.f32 %v470
    %vm477 = vweird.f32 %v471
    %vm478 = vmor %vm476, %vm477
    %v479 = vsel %vm478, %v471, %v475
    %v480 = vand.u32 2147483647, %v470
    %vm481 = vcmp.eq.f32.partialorder %v480, 8.507059e+37
    %v482 = vand.u32 %v470, 2147483648
    %v483 = vor.u32 1.1754944e-38, %v482
    %v484 = vsel %vm481, %v483, %v479
    %v485 = vmul.f32 1.0, %v484
    %v486 = vadd.f32 %v242, %v450
    %v487 = vxor.u32 %v486, 2147483648
    %v488 = vmul.f32 %v487, 1.442695
    %v489 = vpow.pop %v488
    %v490 = vadd.f32 %v489, 1.0
    %v491 = vrcp.pop %v490
    %v492 = vmul.f32 %v490, %v491
    %v493 = vsub.f32 1.0, %v492
    %v494 = vmul.f32 %v491, %v493
    %v495 = vadd.f32 %v491, %v494
    %vm496 = vweird.f32 %v490
    %vm497 = vweird.f32 %v491
    %vm498 = vmor %vm496, %vm497
    %v499 = vsel %vm498, %v491, %v495
    %v500 = vand.u32 2147483647, %v490
    %vm501 = vcmp.eq.f32.partialorder %v500, 8.507059e+37
    %v502 = vand.u32 %v490, 2147483648
    %v503 = vor.u32 1.1754944e-38, %v502
    %v504 = vsel %vm501, %v503, %v499
    %v505 = vmul.f32 1.0, %v504
    %v506 = vmul.f32 %v485, %v463
    %v507 = vadd.f32 %v255, %v506
    %v508 = vtanh.pop %v507
    %v509 = vsub.f32 1.0, %v505
    %v510 = vmul.f32 %v509, %v508
    %v511 = vmul.f32 %v505, %v42
    %v512 = vadd.f32 %v510, %v511
    %v513 = vpack.c.bf16 %v512, %v512
    %v514 = vld [vmem:[%s7] sm:$0xf]
    %v515 = vld [vmem:[%s7 + $0x4] sm:$0xf]
    %v516 = vld [vmem:[%s7 + $0x8] sm:$0xf]
    %v517 = vld [vmem:[%s7 + $0xc] sm:$0xf]
    %v518 = vld [vmem:[%s7 + $0x10] sm:$0xf]
    %v519 = vld [vmem:[%s7 + $0x14] sm:$0xf]
    %v520 = vld [vmem:[%s7 + $0x18] sm:$0xf]
    %v521 = vld [vmem:[%s7 + $0x1c] sm:$0xf]
    %v522 = vld [vmem:[%s7 + $0x20] sm:$0xf]
    %v523 = vld [vmem:[%s7 + $0x24] sm:$0xf]
    %v524 = vld [vmem:[%s7 + $0x28] sm:$0xf]
    %v525 = vld [vmem:[%s7 + $0x2c] sm:$0xf]
    %v526 = vld [vmem:[%s7 + $0x30] sm:$0xf]
    %v527 = vld [vmem:[%s7 + $0x34] sm:$0xf]
    %v528 = vld [vmem:[%s7 + $0x38] sm:$0xf]
    %v529 = vld [vmem:[%s7 + $0x3c] sm:$0xf]
    %v530 = vld [vmem:[%s8] sm:$0x1]
    %v532 = vperm.slane %v530, 0
    %v550 = vunpack.c.l.b16 %v514
    %v551 = vunpack.c.l.b16 %v515
    %v552 = vunpack.c.l.b16 %v516
    %v553 = vunpack.c.l.b16 %v517
    %v554 = vunpack.c.l.b16 %v518
    %v555 = vunpack.c.l.b16 %v519
    %v556 = vunpack.c.l.b16 %v520
    %v557 = vunpack.c.l.b16 %v521
    %v558 = vunpack.c.l.b16 %v522
    %v559 = vunpack.c.l.b16 %v523
    %v560 = vunpack.c.l.b16 %v524
    %v561 = vunpack.c.l.b16 %v525
    %v562 = vunpack.c.l.b16 %v526
    %v563 = vunpack.c.l.b16 %v527
    %v564 = vunpack.c.l.b16 %v528
    %v565 = vunpack.c.l.b16 %v529
    %v566 = vpack.c.b16 %v551, %v550
    %v567 = vpack.c.b16 %v553, %v552
    %v568 = vpack.c.b16 %v555, %v554
    %v569 = vpack.c.b16 %v557, %v556
    %v570 = vpack.c.b16 %v559, %v558
    %v571 = vpack.c.b16 %v561, %v560
    %v572 = vpack.c.b16 %v563, %v562
    %v573 = vpack.c.b16 %v565, %v564
    %582 = vmatpush.bf16.msra.mxu0 %v573
    %583 = vmatpush.bf16.msra.mxu0 %v572
    %584 = vmatpush.bf16.msra.mxu0 %v571
    %585 = vmatpush.bf16.msra.mxu0 %v570
    %586 = vmatpush.bf16.msra.mxu0 %v569
    %587 = vmatpush.bf16.msra.mxu0 %v568
    %588 = vmatpush.bf16.msra.mxu0 %v567
    %589 = vmatpush.bf16.msra.mxu0 %v566
    %590 = vmatmul.bf16.gmra.mxu0 %v513
    %v591 = vpop.f32.mrf.mxu0
    %v592 = vadd.f32 %v532, %v591
    %v593 = vpop.f32.mrf.mxu0
    %594 = vdwg.mxu0
    %s595 = smul.u32 %s37, 8
    %s596 = scalar_lea.vmem %s9, %s595
    %597 = vst [vmem:[%s596] sm:$0xff] %v592
    %vm598 = vcmp.lt.s32.totalorder %v33, 20
    %v599 = vsel %vm598, %v592, -1e+30
    %600 = vmax.xlane.f32.xlu0 %v599
    %v601 = vpop.xlane.xlu0 %600
    %vm602 = vcmp.ge.f32.partialorder %v599, %v601
    %v603 = vsel %vm602, %v33, 128
    %v604 = vand.u32 %v603, 65535
    %v605 = vshra.s32 %v603, 16
    %v606 = vcvt.s32.f32 %v604
    %v607 = vcvt.s32.f32 %v605
    %608 = vmin.xlane.f32.xlu0 %v607
    %v609 = vpop.xlane.xlu0 %608
    %vm610 = vcmp.eq.f32.partialorder %v607, %v609
    %v611 = vsel %vm610, %v606, inf
    %612 = vmin.xlane.f32.xlu0 %v611
    %v613 = vpop.xlane.xlu0 %612
    %v614 = vcvt.f32.s32 %v613
    %v615 = vcvt.f32.s32 %v609
    %v616 = vshll.u32 %v615, 16
    %v617 = vadd.s32 %v616, %v614
    %s618 = scalar_lea.vmem %s2, %s595
    %v619 = vld [vmem:[%s618] sm:$0xff]
    %s620 = sadd.s32 %s37, 1
    %s621 = smul.u32 %s620, 8
    %s622 = scalar_lea.vmem %s1, %s621
    %v623 = vld [vmem:[%s622] sm:$0xff]
    %vm624 = vcmp.gt.s32.totalorder %v619, 0
    %v625 = vsel %vm624, %v623, %v617
  $region42: #{dla_forward.7} parent=0 // loop_footer
    %s41 = sadd.s32 1, %s37
  $region43: #{dla_forward.7} parent=0 // loop_footer_branch
    %36 = sbr.rel target = $region39
  $region44: #{dla_forward.7} parent=0 // loop_exit
    _
  // Predicated region
  $region45: #{dla_forward.7} parent=0 // pred_check
    _
  $region46: #{dla_forward.7} parent=0 // pred_check_branch
    %627 = sbr.rel (0) target = $region48
  $region47: #{dla_forward.7} parent=0 // pred_region
    _
  $region48: #{dla_forward.7} parent=0 // pred_fallthru
    _
  // Predicated region
  $region49: #{dla_forward.7} parent=0 // pred_check
    _
  $region50: #{dla_forward.7} parent=0 // pred_check_branch
    %629 = sbr.rel (0) target = $region52
  $region51: #{dla_forward.7} parent=0 // pred_region
    _
  $region52: #{dla_forward.7} parent=0 // pred_fallthru
    _

// kernel: dla_forward.6
$region0: #{dla_forward.6}
  #allocation0 [shape = 'u32[]', space=smem, size = 0x4, offset = 0x4, fixed_abs, tag = 'smem constant byte address 0x4 - core index']
  #allocation1 [shape = 'u32[72,128]{1,0:T(1,128)}', space=vmem, size = 0x9000, scoped, tag = 'internal scratch']
  #allocation2 [shape = 'f32[4,128]{1,0:T(4,128)}', space=vmem, size = 0x800, scoped, tag = 'scratch operand']
  #allocation3 [shape = 'f32[4,128]{1,0:T(4,128)}', space=vmem, size = 0x800, scoped, tag = 'scratch operand']
  #allocation4 [shape = 'f32[4,128]{1,0:T(4,128)}', space=vmem, size = 0x800, scoped, tag = 'scratch operand']
  #allocation5 [shape = 'f32[4,1]{1,0:T(4,128)}', space=vmem, size = 0x800, scoped, tag = 'scratch operand']
  #allocation6 [shape = 'f32[4,1]{1,0:T(4,128)}', space=vmem, size = 0x800, scoped, tag = 'scratch operand']
  #allocation7 [shape = 'f32[4,128]{1,0:T(4,128)}', space=vmem, size = 0x800, scoped, tag = 'scratch operand']
  %s0 = inlined_call_operand.vmem [shape: bf16[2,64,128], index: 0, kind: input, shape index: {}]
  %s1 = inlined_call_operand.vmem [shape: bf16[2,64,128], index: 1, kind: input, shape index: {}]
  %s2 = inlined_call_operand.vmem [shape: bf16[128,128], index: 2, kind: input, shape index: {}]
  %s3 = inlined_call_operand.vmem [shape: f32[1,128], index: 3, kind: input, shape index: {}]
  %s4 = inlined_call_operand.vmem [shape: bf16[128,128], index: 4, kind: input, shape index: {}]
  %s5 = inlined_call_operand.vmem [shape: f32[1,128], index: 5, kind: input, shape index: {}]
  %s6 = inlined_call_operand.vmem [shape: bf16[128,128], index: 6, kind: input, shape index: {}]
  %s7 = inlined_call_operand.vmem [shape: f32[1,128], index: 7, kind: input, shape index: {}]
  %s8 = inlined_call_operand.hbm [shape: bf16[128,128], index: 8, kind: input, shape index: {}]
  %s9 = inlined_call_operand.vmem [shape: f32[1,128], index: 9, kind: input, shape index: {}]
  %s10 = inlined_call_operand.vmem [shape: bf16[128,256], index: 10, kind: input, shape index: {}]
  %s11 = inlined_call_operand.vmem [shape: f32[1,256], index: 11, kind: input, shape index: {}]
  %s12 = inlined_call_operand.vmem [shape: bf16[128,256], index: 12, kind: input, shape index: {}]
  %s13 = inlined_call_operand.vmem [shape: f32[1,256], index: 13, kind: input, shape index: {}]
  %s14 = inlined_call_operand.hbm [shape: bf16[128,128], index: 14, kind: input, shape index: {}]
  %s15 = inlined_call_operand.hbm [shape: bf16[128,128], index: 15, kind: input, shape index: {}]
  %s16 = inlined_call_operand.vmem [shape: f32[1,128], index: 16, kind: input, shape index: {}]
  %s17 = inlined_call_operand.vmem [shape: f32[8,128], index: 17, kind: output, shape index: {0}]
  %s18 = inlined_call_operand.vmem [shape: f32[8,128], index: 18, kind: output, shape index: {1}]
  %19 = xla_tuple %s17, %s18
  %s20 = sld [smem:[#allocation0]]
  $region141: #{dla_forward.6} parent=0
    _
  %s22 = ssub.s32 1, %s20
  %s23 = scalar_select 0, %s22, %s20
  $region1: #{dla_forward.6} parent=0
    #allocation8 [shape = 'u8[32768]{0}', space=vmem, size = 0x8000, scoped, tag = 'input window, operand 8, single buffered']
    #allocation9 [shape = 's32[2]{0}', space=sflag, size = 0x8, scoped, tag = 'scoped memory for dla_forward.6']
    #allocation10 [shape = 'u8[32768]{0}', space=vmem, size = 0x8000, scoped, tag = 'input window, operand 14, single buffered']
    #allocation11 [shape = 's32[1]{0}', space=sflag, size = 0x4, scoped, tag = 'scoped memory for dla_forward.6']
    #allocation12 [shape = 'u8[32768]{0}', space=vmem, size = 0x8000, scoped, tag = 'input window, operand 15, single buffered']
    %24 = vsyncpa [#allocation9], 0
    %25 = vsyncpa [#allocation11], 0
    loop: start=0, step=1, limit=4
    $region2: #{dla_forward.6} parent=1 // loop_pre_header
      _
    $region3: #{dla_forward.6} parent=1 // loop_header
      %s27 = sphi 0, %s31
      %p28 = scmp.ge.s32.totalorder %s27, 4
      %s34 = sphi 0, %s46
      %s35 = sphi 0, %s42
      %s36 = sphi 0, %s34
      %s37 = sphi 0, %s35
      %s38 = sphi 0, %s36
      %s39 = sphi 0, %s37
      %s49 = sphi 0, %s51
      %s52 = sphi 0, %s49
      %s53 = sphi 0, %s52
      %s69 = sphi 0, %s53
      %s75 = sphi 0, %s77
      %s78 = sphi 0, %s75
      %s79 = sphi 0, %s78
      %s95 = sphi 0, %s79
      %s99 = sphi 0, %s99
      %s101 = sphi 0, %s99
      %s102 = sphi 0, %s101
      %s116 = sphi 0, %s102
      %s120 = sphi 0, %s120
      %s122 = sphi 0, %s120
      %s123 = sphi 0, %s122
      %s137 = sphi 0, %s123
      %s141 = sphi 0, %s141
      %s143 = sphi 0, %s141
      %s144 = sphi 0, %s143
      %s158 = sphi 0, %s144
      %s162 = sphi 0, %s162
      %s164 = sphi 0, %s162
      %s165 = sphi 0, %s164
      %s179 = sphi 0, %s165
      %s183 = sphi 0, %s183
      %s185 = sphi 0, %s183
      %s186 = sphi 0, %s185
      %s200 = sphi 0, %s186
      %s204 = sphi 0, %s204
      %s206 = sphi 0, %s204
      %s207 = sphi 0, %s206
      %s221 = sphi 0, %s207
      %s225 = sphi 0, %s225
      %s227 = sphi 0, %s225
      %s228 = sphi 0, %s227
      %s242 = sphi 0, %s228
      %s246 = sphi 0, %s246
      %s248 = sphi 0, %s246
      %s249 = sphi 0, %s248
      %s263 = sphi 0, %s249
      %s267 = sphi 0, %s267
      %s269 = sphi 0, %s267
      %s270 = sphi 0, %s269
      %s284 = sphi 0, %s270
      %s288 = sphi 0, %s288
      %s290 = sphi 0, %s288
      %s291 = sphi 0, %s290
      %s305 = sphi 0, %s291
      %s309 = sphi 0, %s309
      %s311 = sphi 0, %s309
      %s312 = sphi 0, %s311
      %s326 = sphi 0, %s312
      %s330 = sphi 0, %s330
      %s332 = sphi 0, %s330
      %s333 = sphi 0, %s332
      %s347 = sphi 0, %s333
      %s351 = sphi 0, %s351
      %s353 = sphi 0, %s351
      %s354 = sphi 0, %s353
      %s368 = sphi 0, %s354
      %s372 = sphi 0, %s372
      %s374 = sphi 0, %s372
      %s375 = sphi 0, %s374
      %s389 = sphi 0, %s375
      %s393 = sphi 0, %s393
      %s395 = sphi 0, %s393
      %s396 = sphi 0, %s395
      %s410 = sphi 0, %s396
      %s414 = sphi 0, %s414
      %s416 = sphi 0, %s414
      %s417 = sphi 0, %s416
      %s431 = sphi 0, %s417
      %s435 = sphi 0, %s435
      %s437 = sphi 0, %s435
      %s438 = sphi 0, %s437
      %s452 = sphi 0, %s438
    $region4: #{dla_forward.6} parent=1 // loop_header_branch
      %30 = sbr.rel (%p28) target = $region8
    $region5: #{dla_forward.6} parent=1 // loop_body
      %s32 = ssub.s32 %s27, 1
      %s33 = ssub.s32 %s27, 2
      %s40 = sadd.s32 1, %s35
      %p41 = scmp.ge.s32.totalorder %s40, 1
      %s42 = scalar_select %p41, 0, %s40
      %s43 = sadd.s32 1, %s34
      %s44 = scalar_select %p41, %s43, %s34
      %p45 = scmp.ge.s32.totalorder %s44, 2
      %s46 = scalar_select %p45, 0, %s44
      %s47 = ssub.s32 %s35, %s42
      %p48 = scmp.eq.s32.totalorder %s47, 0
      %s50 = sadd.s32 %s49, 1
      %s51 = scalar_select %p48, %s49, %s50
      %p54 = pneg %p48
      %p55 = scmp.eq.s32.totalorder %s27, 1
      %p56 = por %p54, %p55
      %p57 = scmp.ne.s32.totalorder %s49, %s52
      %p58 = scmp.eq.s32.totalorder %s27, 0
      %p59 = por %p57, %p58
      %p60 = scmp.ne.s32.totalorder %s49, %s52
      %p61 = scmp.eq.s32.totalorder %s32, 1
      %p62 = por %p60, %p61
      %p63 = scmp.ne.s32.totalorder %s52, %s53
      %p64 = scmp.eq.s32.totalorder %s32, 0
      %p65 = por %p63, %p64
      %p66 = scmp.ne.s32.totalorder %s52, %s53
      %p67 = scmp.eq.s32.totalorder %s33, 1
      %p68 = por %p66, %p67
      %p70 = scmp.ne.s32.totalorder %s53, %s69
      %p71 = scmp.eq.s32.totalorder %s33, 0
      %p72 = por %p70, %p71
      %s73 = ssub.s32 %s35, %s42
      %p74 = scmp.eq.s32.totalorder %s73, 0
      %s76 = sadd.s32 %s75, 1
      %s77 = scalar_select %p74, %s75, %s76
      %p80 = pneg %p74
      %p81 = scmp.eq.s32.totalorder %s27, 1
      %p82 = por %p80, %p81
      %p83 = scmp.ne.s32.totalorder %s75, %s78
      %p84 = scmp.eq.s32.totalorder %s27, 0
      %p85 = por %p83, %p84
      %p86 = scmp.ne.s32.totalorder %s75, %s78
      %p87 = scmp.eq.s32.totalorder %s32, 1
      %p88 = por %p86, %p87
      %p89 = scmp.ne.s32.totalorder %s78, %s79
      %p90 = scmp.eq.s32.totalorder %s32, 0
      %p91 = por %p89, %p90
      %p92 = scmp.ne.s32.totalorder %s78, %s79
      %p93 = scmp.eq.s32.totalorder %s33, 1
      %p94 = por %p92, %p93
      %p96 = scmp.ne.s32.totalorder %s79, %s95
      %p97 = scmp.eq.s32.totalorder %s33, 0
      %p98 = por %p96, %p97
      %s100 = sadd.s32 %s99, 1
      %p103 = scmp.eq.s32.totalorder %s27, 1
      %p104 = scmp.ne.s32.totalorder %s99, %s101
      %p105 = scmp.eq.s32.totalorder %s27, 0
      %p106 = por %p104, %p105
      %p107 = scmp.ne.s32.totalorder %s99, %s101
      %p108 = scmp.eq.s32.totalorder %s32, 1
      %p109 = por %p107, %p108
      %p110 = scmp.ne.s32.totalorder %s101, %s102
      %p111 = scmp.eq.s32.totalorder %s32, 0
      %p112 = por %p110, %p111
      %p113 = scmp.ne.s32.totalorder %s101, %s102
      %p114 = scmp.eq.s32.totalorder %s33, 1
      %p115 = por %p113, %p114
      %p117 = scmp.ne.s32.totalorder %s102, %s116
      %p118 = scmp.eq.s32.totalorder %s33, 0
      %p119 = por %p117, %p118
      %s121 = sadd.s32 %s120, 1
      %p124 = scmp.eq.s32.totalorder %s27, 1
      %p125 = scmp.ne.s32.totalorder %s120, %s122
      %p126 = scmp.eq.s32.totalorder %s27, 0
      %p127 = por %p125, %p126
      %p128 = scmp.ne.s32.totalorder %s120, %s122
      %p129 = scmp.eq.s32.totalorder %s32, 1
      %p130 = por %p128, %p129
      %p131 = scmp.ne.s32.totalorder %s122, %s123
      %p132 = scmp.eq.s32.totalorder %s32, 0
      %p133 = por %p131, %p132
      %p134 = scmp.ne.s32.totalorder %s122, %s123
      %p135 = scmp.eq.s32.totalorder %s33, 1
      %p136 = por %p134, %p135
      %p138 = scmp.ne.s32.totalorder %s123, %s137
      %p139 = scmp.eq.s32.totalorder %s33, 0
      %p140 = por %p138, %p139
      %s142 = sadd.s32 %s141, 1
      %p145 = scmp.eq.s32.totalorder %s27, 1
      %p146 = scmp.ne.s32.totalorder %s141, %s143
      %p147 = scmp.eq.s32.totalorder %s27, 0
      %p148 = por %p146, %p147
      %p149 = scmp.ne.s32.totalorder %s141, %s143
      %p150 = scmp.eq.s32.totalorder %s32, 1
      %p151 = por %p149, %p150
      %p152 = scmp.ne.s32.totalorder %s143, %s144
      %p153 = scmp.eq.s32.totalorder %s32, 0
      %p154 = por %p152, %p153
      %p155 = scmp.ne.s32.totalorder %s143, %s144
      %p156 = scmp.eq.s32.totalorder %s33, 1
      %p157 = por %p155, %p156
      %p159 = scmp.ne.s32.totalorder %s144, %s158
      %p160 = scmp.eq.s32.totalorder %s33, 0
      %p161 = por %p159, %p160
      %s163 = sadd.s32 %s162, 1
      %p166 = scmp.eq.s32.totalorder %s27, 1
      %p167 = scmp.ne.s32.totalorder %s162, %s164
      %p168 = scmp.eq.s32.totalorder %s27, 0
      %p169 = por %p167, %p168
      %p170 = scmp.ne.s32.totalorder %s162, %s164
      %p171 = scmp.eq.s32.totalorder %s32, 1
      %p172 = por %p170, %p171
      %p173 = scmp.ne.s32.totalorder %s164, %s165
      %p174 = scmp.eq.s32.totalorder %s32, 0
      %p175 = por %p173, %p174
      %p176 = scmp.ne.s32.totalorder %s164, %s165
      %p177 = scmp.eq.s32.totalorder %s33, 1
      %p178 = por %p176, %p177
      %p180 = scmp.ne.s32.totalorder %s165, %s179
      %p181 = scmp.eq.s32.totalorder %s33, 0
      %p182 = por %p180, %p181
      %s184 = sadd.s32 %s183, 1
      %p187 = scmp.eq.s32.totalorder %s27, 1
      %p188 = scmp.ne.s32.totalorder %s183, %s185
      %p189 = scmp.eq.s32.totalorder %s27, 0
      %p190 = por %p188, %p189
      %p191 = scmp.ne.s32.totalorder %s183, %s185
      %p192 = scmp.eq.s32.totalorder %s32, 1
      %p193 = por %p191, %p192
      %p194 = scmp.ne.s32.totalorder %s185, %s186
      %p195 = scmp.eq.s32.totalorder %s32, 0
      %p196 = por %p194, %p195
      %p197 = scmp.ne.s32.totalorder %s185, %s186
      %p198 = scmp.eq.s32.totalorder %s33, 1
      %p199 = por %p197, %p198
      %p201 = scmp.ne.s32.totalorder %s186, %s200
      %p202 = scmp.eq.s32.totalorder %s33, 0
      %p203 = por %p201, %p202
      %s205 = sadd.s32 %s204, 1
      %p208 = scmp.eq.s32.totalorder %s27, 1
      %p209 = scmp.ne.s32.totalorder %s204, %s206
      %p210 = scmp.eq.s32.totalorder %s27, 0
      %p211 = por %p209, %p210
      %p212 = scmp.ne.s32.totalorder %s204, %s206
      %p213 = scmp.eq.s32.totalorder %s32, 1
      %p214 = por %p212, %p213
      %p215 = scmp.ne.s32.totalorder %s206, %s207
      %p216 = scmp.eq.s32.totalorder %s32, 0
      %p217 = por %p215, %p216
      %p218 = scmp.ne.s32.totalorder %s206, %s207
      %p219 = scmp.eq.s32.totalorder %s33, 1
      %p220 = por %p218, %p219
      %p222 = scmp.ne.s32.totalorder %s207, %s221
      %p223 = scmp.eq.s32.totalorder %s33, 0
      %p224 = por %p222, %p223
      %s226 = sadd.s32 %s225, 1
      %p229 = scmp.eq.s32.totalorder %s27, 1
      %p230 = scmp.ne.s32.totalorder %s225, %s227
      %p231 = scmp.eq.s32.totalorder %s27, 0
      %p232 = por %p230, %p231
      %p233 = scmp.ne.s32.totalorder %s225, %s227
      %p234 = scmp.eq.s32.totalorder %s32, 1
      %p235 = por %p233, %p234
      %p236 = scmp.ne.s32.totalorder %s227, %s228
      %p237 = scmp.eq.s32.totalorder %s32, 0
      %p238 = por %p236, %p237
      %p239 = scmp.ne.s32.totalorder %s227, %s228
      %p240 = scmp.eq.s32.totalorder %s33, 1
      %p241 = por %p239, %p240
      %p243 = scmp.ne.s32.totalorder %s228, %s242
      %p244 = scmp.eq.s32.totalorder %s33, 0
      %p245 = por %p243, %p244
      %s247 = sadd.s32 %s246, 1
      %p250 = scmp.eq.s32.totalorder %s27, 1
      %p251 = scmp.ne.s32.totalorder %s246, %s248
      %p252 = scmp.eq.s32.totalorder %s27, 0
      %p253 = por %p251, %p252
      %p254 = scmp.ne.s32.totalorder %s246, %s248
      %p255 = scmp.eq.s32.totalorder %s32, 1
      %p256 = por %p254, %p255
      %p257 = scmp.ne.s32.totalorder %s248, %s249
      %p258 = scmp.eq.s32.totalorder %s32, 0
      %p259 = por %p257, %p258
      %p260 = scmp.ne.s32.totalorder %s248, %s249
      %p261 = scmp.eq.s32.totalorder %s33, 1
      %p262 = por %p260, %p261
      %p264 = scmp.ne.s32.totalorder %s249, %s263
      %p265 = scmp.eq.s32.totalorder %s33, 0
      %p266 = por %p264, %p265
      %s268 = sadd.s32 %s267, 1
      %p271 = scmp.eq.s32.totalorder %s27, 1
      %p272 = scmp.ne.s32.totalorder %s267, %s269
      %p273 = scmp.eq.s32.totalorder %s27, 0
      %p274 = por %p272, %p273
      %p275 = scmp.ne.s32.totalorder %s267, %s269
      %p276 = scmp.eq.s32.totalorder %s32, 1
      %p277 = por %p275, %p276
      %p278 = scmp.ne.s32.totalorder %s269, %s270
      %p279 = scmp.eq.s32.totalorder %s32, 0
      %p280 = por %p278, %p279
      %p281 = scmp.ne.s32.totalorder %s269, %s270
      %p282 = scmp.eq.s32.totalorder %s33, 1
      %p283 = por %p281, %p282
      %p285 = scmp.ne.s32.totalorder %s270, %s284
      %p286 = scmp.eq.s32.totalorder %s33, 0
      %p287 = por %p285, %p286
      %s289 = sadd.s32 %s288, 1
      %p292 = scmp.eq.s32.totalorder %s27, 1
      %p293 = scmp.ne.s32.totalorder %s288, %s290
      %p294 = scmp.eq.s32.totalorder %s27, 0
      %p295 = por %p293, %p294
      %p296 = scmp.ne.s32.totalorder %s288, %s290
      %p297 = scmp.eq.s32.totalorder %s32, 1
      %p298 = por %p296, %p297
      %p299 = scmp.ne.s32.totalorder %s290, %s291
      %p300 = scmp.eq.s32.totalorder %s32, 0
      %p301 = por %p299, %p300
      %p302 = scmp.ne.s32.totalorder %s290, %s291
      %p303 = scmp.eq.s32.totalorder %s33, 1
      %p304 = por %p302, %p303
      %p306 = scmp.ne.s32.totalorder %s291, %s305
      %p307 = scmp.eq.s32.totalorder %s33, 0
      %p308 = por %p306, %p307
      %s310 = sadd.s32 %s309, 1
      %p313 = scmp.eq.s32.totalorder %s27, 1
      %p314 = scmp.ne.s32.totalorder %s309, %s311
      %p315 = scmp.eq.s32.totalorder %s27, 0
      %p316 = por %p314, %p315
      %p317 = scmp.ne.s32.totalorder %s309, %s311
      %p318 = scmp.eq.s32.totalorder %s32, 1
      %p319 = por %p317, %p318
      %p320 = scmp.ne.s32.totalorder %s311, %s312
      %p321 = scmp.eq.s32.totalorder %s32, 0
      %p322 = por %p320, %p321
      %p323 = scmp.ne.s32.totalorder %s311, %s312
      %p324 = scmp.eq.s32.totalorder %s33, 1
      %p325 = por %p323, %p324
      %p327 = scmp.ne.s32.totalorder %s312, %s326
      %p328 = scmp.eq.s32.totalorder %s33, 0
      %p329 = por %p327, %p328
      %s331 = sadd.s32 %s330, 1
      %p334 = scmp.eq.s32.totalorder %s27, 1
      %p335 = scmp.ne.s32.totalorder %s330, %s332
      %p336 = scmp.eq.s32.totalorder %s27, 0
      %p337 = por %p335, %p336
      %p338 = scmp.ne.s32.totalorder %s330, %s332
      %p339 = scmp.eq.s32.totalorder %s32, 1
      %p340 = por %p338, %p339
      %p341 = scmp.ne.s32.totalorder %s332, %s333
      %p342 = scmp.eq.s32.totalorder %s32, 0
      %p343 = por %p341, %p342
      %p344 = scmp.ne.s32.totalorder %s332, %s333
      %p345 = scmp.eq.s32.totalorder %s33, 1
      %p346 = por %p344, %p345
      %p348 = scmp.ne.s32.totalorder %s333, %s347
      %p349 = scmp.eq.s32.totalorder %s33, 0
      %p350 = por %p348, %p349
      %s352 = sadd.s32 %s351, 1
      %p355 = scmp.eq.s32.totalorder %s27, 1
      %p356 = scmp.ne.s32.totalorder %s351, %s353
      %p357 = scmp.eq.s32.totalorder %s27, 0
      %p358 = por %p356, %p357
      %p359 = scmp.ne.s32.totalorder %s351, %s353
      %p360 = scmp.eq.s32.totalorder %s32, 1
      %p361 = por %p359, %p360
      %p362 = scmp.ne.s32.totalorder %s353, %s354
      %p363 = scmp.eq.s32.totalorder %s32, 0
      %p364 = por %p362, %p363
      %p365 = scmp.ne.s32.totalorder %s353, %s354
      %p366 = scmp.eq.s32.totalorder %s33, 1
      %p367 = por %p365, %p366
      %p369 = scmp.ne.s32.totalorder %s354, %s368
      %p370 = scmp.eq.s32.totalorder %s33, 0
      %p371 = por %p369, %p370
      %s373 = sadd.s32 %s372, 1
      %p376 = scmp.eq.s32.totalorder %s27, 1
      %p377 = scmp.ne.s32.totalorder %s372, %s374
      %p378 = scmp.eq.s32.totalorder %s27, 0
      %p379 = por %p377, %p378
      %p380 = scmp.ne.s32.totalorder %s372, %s374
      %p381 = scmp.eq.s32.totalorder %s32, 1
      %p382 = por %p380, %p381
      %p383 = scmp.ne.s32.totalorder %s374, %s375
      %p384 = scmp.eq.s32.totalorder %s32, 0
      %p385 = por %p383, %p384
      %p386 = scmp.ne.s32.totalorder %s374, %s375
      %p387 = scmp.eq.s32.totalorder %s33, 1
      %p388 = por %p386, %p387
      %p390 = scmp.ne.s32.totalorder %s375, %s389
      %p391 = scmp.eq.s32.totalorder %s33, 0
      %p392 = por %p390, %p391
      %s394 = sadd.s32 %s393, 1
      %p397 = scmp.eq.s32.totalorder %s27, 1
      %p398 = scmp.ne.s32.totalorder %s393, %s395
      %p399 = scmp.eq.s32.totalorder %s27, 0
      %p400 = por %p398, %p399
      %p401 = scmp.ne.s32.totalorder %s393, %s395
      %p402 = scmp.eq.s32.totalorder %s32, 1
      %p403 = por %p401, %p402
      %p404 = scmp.ne.s32.totalorder %s395, %s396
      %p405 = scmp.eq.s32.totalorder %s32, 0
      %p406 = por %p404, %p405
      %p407 = scmp.ne.s32.totalorder %s395, %s396
      %p408 = scmp.eq.s32.totalorder %s33, 1
      %p409 = por %p407, %p408
      %p411 = scmp.ne.s32.totalorder %s396, %s410
      %p412 = scmp.eq.s32.totalorder %s33, 0
      %p413 = por %p411, %p412
      %s415 = sadd.s32 %s414, 1
      %p418 = scmp.eq.s32.totalorder %s27, 1
      %p419 = scmp.ne.s32.totalorder %s414, %s416
      %p420 = scmp.eq.s32.totalorder %s27, 0
      %p421 = por %p419, %p420
      %p422 = scmp.ne.s32.totalorder %s414, %s416
      %p423 = scmp.eq.s32.totalorder %s32, 1
      %p424 = por %p422, %p423
      %p425 = scmp.ne.s32.totalorder %s416, %s417
      %p426 = scmp.eq.s32.totalorder %s32, 0
      %p427 = por %p425, %p426
      %p428 = scmp.ne.s32.totalorder %s416, %s417
      %p429 = scmp.eq.s32.totalorder %s33, 1
      %p430 = por %p428, %p429
      %p432 = scmp.ne.s32.totalorder %s417, %s431
      %p433 = scmp.eq.s32.totalorder %s33, 0
      %p434 = por %p432, %p433
      %s436 = sadd.s32 %s435, 1
      %p439 = scmp.eq.s32.totalorder %s27, 1
      %p440 = scmp.ne.s32.totalorder %s435, %s437
      %p441 = scmp.eq.s32.totalorder %s27, 0
      %p442 = por %p440, %p441
      %p443 = scmp.ne.s32.totalorder %s435, %s437
      %p444 = scmp.eq.s32.totalorder %s32, 1
      %p445 = por %p443, %p444
      %p446 = scmp.ne.s32.totalorder %s437, %s438
      %p447 = scmp.eq.s32.totalorder %s32, 0
      %p448 = por %p446, %p447
      %p449 = scmp.ne.s32.totalorder %s437, %s438
      %p450 = scmp.eq.s32.totalorder %s33, 1
      %p451 = por %p449, %p450
      %p453 = scmp.ne.s32.totalorder %s438, %s452
      %p454 = scmp.eq.s32.totalorder %s33, 0
      %p455 = por %p453, %p454
      %p456 = scmp.le.s32.totalorder 1, %s27
      %p457 = scmp.lt.s32.totalorder %s27, 3
      %p458 = pnand %p456, %p457
      %p459 = pneg %p458
      // Predicated region
      $region9: #{dla_forward.6} parent=5 // pred_check
        _
      $region10: #{dla_forward.6} parent=5 // pred_check_branch
        %461 = sbr.rel (%p458) target = $region12
      $region11: #{dla_forward.6} parent=5 // pred_region
        %s462 = ssub.s32 %s27, 1
        // Predicated region
        $region13: #{dla_forward.6} parent=11 // pred_check
          %p463 = pneg %p65
        $region14: #{dla_forward.6} parent=11 // pred_check_branch
          %465 = sbr.rel (%p463) target = $region16
        $region15: #{dla_forward.6} parent=11 // pred_region
          %s466 = smul.u32 8, %s37
          %p467 = scmp.lt.s32.totalorder %s466, 7
          %s468 = scalar_select %p467, %s466, 7
          %s469 = smul.addr %s468, 4
          %s470 = scalar_lea.vmem %s0, %s469
          %s471 = smul.u32 8, %s37
        $region16: #{dla_forward.6} parent=11 // pred_fallthru
          _
        // Predicated region
        $region17: #{dla_forward.6} parent=11 // pred_check
          %p472 = pneg %p91
        $region18: #{dla_forward.6} parent=11 // pred_check_branch
          %474 = sbr.rel (%p472) target = $region20
        $region19: #{dla_forward.6} parent=11 // pred_region
          %s475 = smul.u32 8, %s37
          %p476 = scmp.lt.s32.totalorder %s475, 7
          %s477 = scalar_select %p476, %s475, 7
          %s478 = smul.addr %s477, 4
          %s479 = scalar_lea.vmem %s1, %s478
          %s480 = smul.u32 8, %s37
        $region20: #{dla_forward.6} parent=11 // pred_fallthru
          _
        // Predicated region
        $region21: #{dla_forward.6} parent=11 // pred_check
          %p481 = pneg %p112
        $region22: #{dla_forward.6} parent=11 // pred_check_branch
          %483 = sbr.rel (%p481) target = $region24
        $region23: #{dla_forward.6} parent=11 // pred_region
          _
        $region24: #{dla_forward.6} parent=11 // pred_fallthru
          _
        // Predicated region
        $region25: #{dla_forward.6} parent=11 // pred_check
          %p484 = pneg %p133
        $region26: #{dla_forward.6} parent=11 // pred_check_branch
          %486 = sbr.rel (%p484) target = $region28
        $region27: #{dla_forward.6} parent=11 // pred_region
          _
        $region28: #{dla_forward.6} parent=11 // pred_fallthru
          _
        // Predicated region
        $region29: #{dla_forward.6} parent=11 // pred_check
          %p487 = pneg %p154
        $region30: #{dla_forward.6} parent=11 // pred_check_branch
          %489 = sbr.rel (%p487) target = $region32
        $region31: #{dla_forward.6} parent=11 // pred_region
          _
        $region32: #{dla_forward.6} parent=11 // pred_fallthru
          _
        // Predicated region
        $region33: #{dla_forward.6} parent=11 // pred_check
          %p490 = pneg %p175
        $region34: #{dla_forward.6} parent=11 // pred_check_branch
          %492 = sbr.rel (%p490) target = $region36
        $region35: #{dla_forward.6} parent=11 // pred_region
          _
        $region36: #{dla_forward.6} parent=11 // pred_fallthru
          _
        // Predicated region
        $region37: #{dla_forward.6} parent=11 // pred_check
          %p493 = pneg %p196
        $region38: #{dla_forward.6} parent=11 // pred_check_branch
          %495 = sbr.rel (%p493) target = $region40
        $region39: #{dla_forward.6} parent=11 // pred_region
          _
        $region40: #{dla_forward.6} parent=11 // pred_fallthru
          _
        // Predicated region
        $region41: #{dla_forward.6} parent=11 // pred_check
          %p496 = pneg %p217
        $region42: #{dla_forward.6} parent=11 // pred_check_branch
          %498 = sbr.rel (%p496) target = $region44
        $region43: #{dla_forward.6} parent=11 // pred_region
          _
        $region44: #{dla_forward.6} parent=11 // pred_fallthru
          _
        // Predicated region
        $region45: #{dla_forward.6} parent=11 // pred_check
          %p499 = pneg %p238
        $region46: #{dla_forward.6} parent=11 // pred_check_branch
          %501 = sbr.rel (%p499) target = $region48
        $region47: #{dla_forward.6} parent=11 // pred_region
          %503 = vsyncadd [#allocation9], 0
          %s504 = sshll.u32 %s8, 4
          %s505 = int_to_ptr.hbm [resolvable:$true] %s504
          %s506 = sshll.u32 [#allocation8], 4
          %s507 = int_to_ptr.vmem [resolvable:$true] %s506
          %512 = dma.hbm_to_vmem [thread:$0]  %s505, 1024, %s507, [#allocation9], 64, 64, 4
        $region48: #{dla_forward.6} parent=11 // pred_fallthru
          _
        // Predicated region
        $region49: #{dla_forward.6} parent=11 // pred_check
          %p513 = pneg %p259
        $region50: #{dla_forward.6} parent=11 // pred_check_branch
          %515 = sbr.rel (%p513) target = $region52
        $region51: #{dla_forward.6} parent=11 // pred_region
          _
        $region52: #{dla_forward.6} parent=11 // pred_fallthru
          _
        // Predicated region
        $region53: #{dla_forward.6} parent=11 // pred_check
          %p516 = pneg %p280
        $region54: #{dla_forward.6} parent=11 // pred_check_branch
          %518 = sbr.rel (%p516) target = $region56
        $region55: #{dla_forward.6} parent=11 // pred_region
          _
        $region56: #{dla_forward.6} parent=11 // pred_fallthru
          _
        // Predicated region
        $region57: #{dla_forward.6} parent=11 // pred_check
          %p519 = pneg %p301
        $region58: #{dla_forward.6} parent=11 // pred_check_branch
          %521 = sbr.rel (%p519) target = $region60
        $region59: #{dla_forward.6} parent=11 // pred_region
          _
        $region60: #{dla_forward.6} parent=11 // pred_fallthru
          _
        // Predicated region
        $region61: #{dla_forward.6} parent=11 // pred_check
          %p522 = pneg %p322
        $region62: #{dla_forward.6} parent=11 // pred_check_branch
          %524 = sbr.rel (%p522) target = $region64
        $region63: #{dla_forward.6} parent=11 // pred_region
          _
        $region64: #{dla_forward.6} parent=11 // pred_fallthru
          _
        // Predicated region
        $region65: #{dla_forward.6} parent=11 // pred_check
          %p525 = pneg %p343
        $region66: #{dla_forward.6} parent=11 // pred_check_branch
          %527 = sbr.rel (%p525) target = $region68
        $region67: #{dla_forward.6} parent=11 // pred_region
          _
        $region68: #{dla_forward.6} parent=11 // pred_fallthru
          _
        // Predicated region
        $region69: #{dla_forward.6} parent=11 // pred_check
          %p528 = pneg %p364
        $region70: #{dla_forward.6} parent=11 // pred_check_branch
          %530 = sbr.rel (%p528) target = $region72
        $region71: #{dla_forward.6} parent=11 // pred_region
          %532 = vsyncadd [#allocation11], 0
          %s533 = sshll.u32 %s14, 4
          %s534 = int_to_ptr.hbm [resolvable:$true] %s533
          %s535 = sshll.u32 [#allocation10], 4
          %s536 = int_to_ptr.vmem [resolvable:$true] %s535
          %541 = dma.hbm_to_vmem [thread:$0]  %s534, 1024, %s536, [#allocation11], 64, 64, 4
        $region72: #{dla_forward.6} parent=11 // pred_fallthru
          _
        // Predicated region
        $region73: #{dla_forward.6} parent=11 // pred_check
          %p542 = pneg %p385
        $region74: #{dla_forward.6} parent=11 // pred_check_branch
          %544 = sbr.rel (%p542) target = $region76
        $region75: #{dla_forward.6} parent=11 // pred_region
          %546 = vsyncadd [#allocation11], 0
          %s547 = sshll.u32 %s15, 4
          %s548 = int_to_ptr.hbm [resolvable:$true] %s547
          %s549 = sshll.u32 [#allocation12], 4
          %s550 = int_to_ptr.vmem [resolvable:$true] %s549
          %555 = dma.hbm_to_vmem [thread:$0]  %s548, 1024, %s550, [#allocation11], 64, 64, 4
        $region76: #{dla_forward.6} parent=11 // pred_fallthru
          _
        // Predicated region
        $region77: #{dla_forward.6} parent=11 // pred_check
          %p556 = pneg %p406
        $region78: #{dla_forward.6} parent=11 // pred_check_branch
          %558 = sbr.rel (%p556) target = $region80
        $region79: #{dla_forward.6} parent=11 // pred_region
          _
        $region80: #{dla_forward.6} parent=11 // pred_fallthru
          _
      $region12: #{dla_forward.6} parent=5 // pred_fallthru
        _
      %p559 = scmp.lt.s32.totalorder %s27, 2
      // Predicated region
      $region81: #{dla_forward.6} parent=5 // pred_check
        %p560 = pneg %p559
      $region82: #{dla_forward.6} parent=5 // pred_check_branch
        %562 = sbr.rel (%p560) target = $region84
      $region83: #{dla_forward.6} parent=5 // pred_region
        _
      $region84: #{dla_forward.6} parent=5 // pred_fallthru
        _
      %p563 = scmp.le.s32.totalorder 1, %s27
      %p564 = scmp.lt.s32.totalorder %s27, 3
      %p565 = pnand %p563, %p564
      %p566 = pneg %p565
      // Predicated region
      $region85: #{dla_forward.6} parent=5 // pred_check
        _
      $region86: #{dla_forward.6} parent=5 // pred_check_branch
        %568 = sbr.rel (%p565) target = $region88
      $region87: #{dla_forward.6} parent=5 // pred_region
        %s569 = ssub.s32 %s27, 1
        // Predicated region
        $region89: #{dla_forward.6} parent=87 // pred_check
          %p570 = pneg %p238
        $region90: #{dla_forward.6} parent=87 // pred_check_branch
          %572 = sbr.rel (%p570) target = $region92
        $region91: #{dla_forward.6} parent=87 // pred_region
          %574 = dma.done [#allocation9], 1024
        $region92: #{dla_forward.6} parent=87 // pred_fallthru
          _
        // Predicated region
        $region93: #{dla_forward.6} parent=87 // pred_check
          %p575 = pneg %p364
        $region94: #{dla_forward.6} parent=87 // pred_check_branch
          %577 = sbr.rel (%p575) target = $region96
        $region95: #{dla_forward.6} parent=87 // pred_region
          %579 = dma.done [#allocation11], 1024
        $region96: #{dla_forward.6} parent=87 // pred_fallthru
          _
        // Predicated region
        $region97: #{dla_forward.6} parent=87 // pred_check
          %p580 = pneg %p385
        $region98: #{dla_forward.6} parent=87 // pred_check_branch
          %582 = sbr.rel (%p580) target = $region100
        $region99: #{dla_forward.6} parent=87 // pred_region
          %584 = dma.done [#allocation11], 1024
        $region100: #{dla_forward.6} parent=87 // pred_fallthru
          _
        %s585 = smul.u32 8, %s37
        %p586 = scmp.lt.s32.totalorder %s585, 7
        %s587 = scalar_select %p586, %s585, 7
        %s588 = smul.addr %s587, 4
        %s589 = scalar_lea.vmem %s0, %s588
        %p590 = pneg %p65
        %p591 = pneg %p62
        %s592 = smul.u32 8, %s37
        %p593 = scmp.lt.s32.totalorder %s592, 7
        %s594 = scalar_select %p593, %s592, 7
        %s595 = smul.addr %s594, 4
        %s596 = scalar_lea.vmem %s1, %s595
        %p597 = pneg %p91
        %p598 = pneg %p88
        %p599 = pneg %p112
        %p600 = pneg %p109
        %p601 = pneg %p133
        %p602 = pneg %p130
        %p603 = pneg %p154
        %p604 = pneg %p151
        %p605 = pneg %p175
        %p606 = pneg %p172
        %p607 = pneg %p196
        %p608 = pneg %p193
        %p609 = pneg %p217
        %p610 = pneg %p214
        %p611 = pneg %p238
        %p612 = pneg %p235
        %p613 = pneg %p259
        %p614 = pneg %p256
        %p615 = pneg %p280
        %p616 = pneg %p277
        %p617 = pneg %p301
        %p618 = pneg %p298
        %p619 = pneg %p322
        %p620 = pneg %p319
        %p621 = pneg %p343
        %p622 = pneg %p340
        %p623 = pneg %p364
        %p624 = pneg %p361
        %p625 = pneg %p385
        %p626 = pneg %p382
        %p627 = pneg %p406
        %p628 = pneg %p403
        %p629 = pneg %p427
        %p630 = pneg %p424
        %p631 = pneg %p448
        %p632 = pneg %p445
        %s633 = smul.u32 8, %s37
        %p634 = scmp.lt.s32.totalorder %s633, 7
        %s635 = scalar_select %p634, %s633, 7
        %s636 = smul.addr %s635, 4
        %s637 = scalar_lea.vmem %s0, %s636
        %s638 = smul.u32 8, %s37
        %s639 = smul.u32 8, %s37
        %p640 = scmp.lt.s32.totalorder %s639, 7
        %s641 = scalar_select %p640, %s639, 7
        %s642 = smul.addr %s641, 4
        %s643 = scalar_lea.vmem %s1, %s642
        %s644 = smul.u32 8, %s37
        %v646 = vld [vmem:[%s637] sm:$0xf]
        %v647 = vld [vmem:[%s637 + $0x4] sm:$0xf]
        %v648 = vld [vmem:[%s637 + $0x8] sm:$0xf]
        %v649 = vld [vmem:[%s637 + $0xc] sm:$0xf]
        %v650 = vld [vmem:[%s637 + $0x10] sm:$0xf]
        %v651 = vld [vmem:[%s637 + $0x14] sm:$0xf]
        %v652 = vld [vmem:[%s637 + $0x18] sm:$0xf]
        %v653 = vld [vmem:[%s637 + $0x1c] sm:$0xf]
        %v654 = vld [vmem:[%s637 + $0x20] sm:$0xf]
        %v655 = vld [vmem:[%s637 + $0x24] sm:$0xf]
        %v656 = vld [vmem:[%s637 + $0x28] sm:$0xf]
        %v657 = vld [vmem:[%s637 + $0x2c] sm:$0xf]
        %v658 = vld [vmem:[%s637 + $0x30] sm:$0xf]
        %v659 = vld [vmem:[%s637 + $0x34] sm:$0xf]
        %v660 = vld [vmem:[%s637 + $0x38] sm:$0xf]
        %v661 = vld [vmem:[%s637 + $0x3c] sm:$0xf]
        %v662 = vld [vmem:[%s643] sm:$0xf]
        %v663 = vld [vmem:[%s643 + $0x4] sm:$0xf]
        %v664 = vld [vmem:[%s643 + $0x8] sm:$0xf]
        %v665 = vld [vmem:[%s643 + $0xc] sm:$0xf]
        %v666 = vld [vmem:[%s643 + $0x10] sm:$0xf]
        %v667 = vld [vmem:[%s643 + $0x14] sm:$0xf]
        %v668 = vld [vmem:[%s643 + $0x18] sm:$0xf]
        %v669 = vld [vmem:[%s643 + $0x1c] sm:$0xf]
        %v670 = vld [vmem:[%s643 + $0x20] sm:$0xf]
        %v671 = vld [vmem:[%s643 + $0x24] sm:$0xf]
        %v672 = vld [vmem:[%s643 + $0x28] sm:$0xf]
        %v673 = vld [vmem:[%s643 + $0x2c] sm:$0xf]
        %v674 = vld [vmem:[%s643 + $0x30] sm:$0xf]
        %v675 = vld [vmem:[%s643 + $0x34] sm:$0xf]
        %v676 = vld [vmem:[%s643 + $0x38] sm:$0xf]
        %v677 = vld [vmem:[%s643 + $0x3c] sm:$0xf]
        %p678 = scmp.eq.s32.totalorder %s36, 0
        %p679 = scmp.eq.s32.totalorder %s37, 0
        %p680 = pnand %p678, %p679
        %p681 = pneg %p680
        // Predicated region
        $region101: #{dla_forward.6} parent=87 // pred_check
          _
        $region102: #{dla_forward.6} parent=87 // pred_check_branch
          %683 = sbr.rel (%p680) target = $region104
        $region103: #{dla_forward.6} parent=87 // pred_region
          %684 = vst [vmem:[#allocation2] sm:$0xf] 0.0
        $region104: #{dla_forward.6} parent=87 // pred_fallthru
          _
        // Predicated region
        $region105: #{dla_forward.6} parent=87 // pred_check
          %p685 = pneg %p678
        $region106: #{dla_forward.6} parent=87 // pred_check_branch
          %687 = sbr.rel (%p685) target = $region108
        $region107: #{dla_forward.6} parent=87 // pred_region
          %v688 = vunpack.c.l.bf16 %v646
          %v689 = vunpack.c.l.bf16 %v647
          %v690 = vunpack.c.l.bf16 %v648
          %v691 = vunpack.c.l.bf16 %v649
          %v692 = vunpack.c.l.bf16 %v650
          %v693 = vunpack.c.l.bf16 %v651
          %v694 = vunpack.c.l.bf16 %v652
          %v695 = vunpack.c.l.bf16 %v653
          %v696 = vunpack.c.l.bf16 %v654
          %v697 = vunpack.c.l.bf16 %v655
          %v698 = vunpack.c.l.bf16 %v656
          %v699 = vunpack.c.l.bf16 %v657
          %v700 = vunpack.c.l.bf16 %v658
          %v701 = vunpack.c.l.bf16 %v659
          %v702 = vunpack.c.l.bf16 %v660
          %v703 = vunpack.c.l.bf16 %v661
          %v704 = vadd.f32 %v688, %v689
          %v705 = vadd.f32 %v704, %v690
          %v706 = vadd.f32 %v705, %v691
          %v707 = vadd.f32 %v706, %v692
          %v708 = vadd.f32 %v707, %v693
          %v709 = vadd.f32 %v708, %v694
          %v710 = vadd.f32 %v709, %v695
          %v711 = vrot.slane %v710, 4
          %v712 = vadd.f32 %v710, %v711
          %v713 = vrot.slane %v712, 2
          %v714 = vadd.f32 %v712, %v713
          %v715 = vrot.slane %v714, 1
          %v716 = vadd.f32 %v714, %v715
          %v717 = vadd.f32 %v696, %v697
          %v718 = vadd.f32 %v717, %v698
          %v719 = vadd.f32 %v718, %v699
          %v720 = vadd.f32 %v719, %v700
          %v721 = vadd.f32 %v720, %v701
          %v722 = vadd.f32 %v721, %v702
          %v723 = vadd.f32 %v722, %v703
          %v724 = vrot.slane %v723, 4
          %v725 = vadd.f32 %v723, %v724
          %v726 = vrot.slane %v725, 2
          %v727 = vadd.f32 %v725, %v726
          %v728 = vrot.slane %v727, 1
          %v729 = vadd.f32 %v727, %v728
          %v730 = vunpack.c.l.bf16 %v662
          %v731 = vunpack.c.l.bf16 %v663
          %v732 = vunpack.c.l.bf16 %v664
          %v733 = vunpack.c.l.bf16 %v665
          %v734 = vunpack.c.l.bf16 %v666
          %v735 = vunpack.c.l.bf16 %v667
          %v736 = vunpack.c.l.bf16 %v668
          %v737 = vunpack.c.l.bf16 %v669
          %v738 = vunpack.c.l.bf16 %v670
          %v739 = vunpack.c.l.bf16 %v671
          %v740 = vunpack.c.l.bf16 %v672
          %v741 = vunpack.c.l.bf16 %v673
          %v742 = vunpack.c.l.bf16 %v674
          %v743 = vunpack.c.l.bf16 %v675
          %v744 = vunpack.c.l.bf16 %v676
          %v745 = vunpack.c.l.bf16 %v677
          %v746 = vadd.f32 %v730, %v731
          %v747 = vadd.f32 %v746, %v732
          %v748 = vadd.f32 %v747, %v733
          %v749 = vadd.f32 %v748, %v734
          %v750 = vadd.f32 %v749, %v735
          %v751 = vadd.f32 %v750, %v736
          %v752 = vadd.f32 %v751, %v737
          %v753 = vrot.slane %v752, 4
          %v754 = vadd.f32 %v752, %v753
          %v755 = vrot.slane %v754, 2
          %v756 = vadd.f32 %v754, %v755
          %v757 = vrot.slane %v756, 1
          %v758 = vadd.f32 %v756, %v757
          %v759 = vadd.f32 %v738, %v739
          %v760 = vadd.f32 %v759, %v740
          %v761 = vadd.f32 %v760, %v741
          %v762 = vadd.f32 %v761, %v742
          %v763 = vadd.f32 %v762, %v743
          %v764 = vadd.f32 %v763, %v744
          %v765 = vadd.f32 %v764, %v745
          %v766 = vrot.slane %v765, 4
          %v767 = vadd.f32 %v765, %v766
          %v768 = vrot.slane %v767, 2
          %v769 = vadd.f32 %v767, %v768
          %v770 = vrot.slane %v769, 1
          %v771 = vadd.f32 %v769, %v770
          %v772 = vld [vmem:[#allocation2] sm:$0xf]
          %vm775 = vcmask 1041409
          %v776 = vsel %vm775, %v729, %v716
          %vm780 = vcmask 1043459
          %v781 = vsel %vm780, %v771, %v758
          %vm783 = vcmask 1041408
          %v784 = vsel %vm783, %v776, %v781
          %v785 = vadd.f32 %v772, %v784
          %786 = vst [vmem:[#allocation2] sm:$0xf] %v785
        $region108: #{dla_forward.6} parent=87 // pred_fallthru
          _
        // Predicated region
        $region109: #{dla_forward.6} parent=87 // pred_check
          _
        $region110: #{dla_forward.6} parent=87 // pred_check_branch
          %788 = sbr.rel (%p680) target = $region112
        $region111: #{dla_forward.6} parent=87 // pred_region
          %v789 = vld [vmem:[#allocation2] sm:$0xf]
          %v790 = vmul.f32 %v789, 0.015625
          %v791 = vpack.c.bf16 %v790, %v790
          %v792 = vld [vmem:[%s6] sm:$0xf]
          %v793 = vld [vmem:[%s6 + $0x4] sm:$0xf]
          %v794 = vld [vmem:[%s6 + $0x8] sm:$0xf]
          %v795 = vld [vmem:[%s6 + $0xc] sm:$0xf]
          %v796 = vld [vmem:[%s6 + $0x10] sm:$0xf]
          %v797 = vld [vmem:[%s6 + $0x14] sm:$0xf]
          %v798 = vld [vmem:[%s6 + $0x18] sm:$0xf]
          %v799 = vld [vmem:[%s6 + $0x1c] sm:$0xf]
          %v800 = vld [vmem:[%s6 + $0x20] sm:$0xf]
          %v801 = vld [vmem:[%s6 + $0x24] sm:$0xf]
          %v802 = vld [vmem:[%s6 + $0x28] sm:$0xf]
          %v803 = vld [vmem:[%s6 + $0x2c] sm:$0xf]
          %v804 = vld [vmem:[%s6 + $0x30] sm:$0xf]
          %v805 = vld [vmem:[%s6 + $0x34] sm:$0xf]
          %v806 = vld [vmem:[%s6 + $0x38] sm:$0xf]
          %v807 = vld [vmem:[%s6 + $0x3c] sm:$0xf]
          %v808 = vld [vmem:[%s7] sm:$0x1]
          %v810 = vperm.slane %v808, 0
          %v828 = vunpack.c.l.b16 %v792
          %v829 = vunpack.c.l.b16 %v793
          %v830 = vunpack.c.l.b16 %v794
          %v831 = vunpack.c.l.b16 %v795
          %v832 = vunpack.c.l.b16 %v796
          %v833 = vunpack.c.l.b16 %v797
          %v834 = vunpack.c.l.b16 %v798
          %v835 = vunpack.c.l.b16 %v799
          %v836 = vunpack.c.l.b16 %v800
          %v837 = vunpack.c.l.b16 %v801
          %v838 = vunpack.c.l.b16 %v802
          %v839 = vunpack.c.l.b16 %v803
          %v840 = vunpack.c.l.b16 %v804
          %v841 = vunpack.c.l.b16 %v805
          %v842 = vunpack.c.l.b16 %v806
          %v843 = vunpack.c.l.b16 %v807
          %v844 = vpack.c.b16 %v829, %v828
          %v845 = vpack.c.b16 %v831, %v830
          %v846 = vpack.c.b16 %v833, %v832
          %v847 = vpack.c.b16 %v835, %v834
          %v848 = vpack.c.b16 %v837, %v836
          %v849 = vpack.c.b16 %v839, %v838
          %v850 = vpack.c.b16 %v841, %v840
          %v851 = vpack.c.b16 %v843, %v842
          %860 = vmatpush.bf16.msra.mxu0 %v851
          %861 = vmatpush.bf16.msra.mxu0 %v850
          %862 = vmatpush.bf16.msra.mxu0 %v849
          %863 = vmatpush.bf16.msra.mxu0 %v848
          %864 = vmatpush.bf16.msra.mxu0 %v847
          %865 = vmatpush.bf16.msra.mxu0 %v846
          %866 = vmatpush.bf16.msra.mxu0 %v845
          %867 = vmatpush.bf16.msra.mxu0 %v844
          %868 = vmatmul.bf16.gmra.mxu0 %v791
          %v869 = vpop.f32.mrf.mxu0
          %v870 = vadd.f32 %v810, %v869
          %v871 = vpop.f32.mrf.mxu0
          %872 = vdwg.mxu0
          %v873 = vld [vmem:[#allocation8] sm:$0xf]
          %v874 = vld [vmem:[#allocation8 + $0x4] sm:$0xf]
          %v875 = vld [vmem:[#allocation8 + $0x8] sm:$0xf]
          %v876 = vld [vmem:[#allocation8 + $0xc] sm:$0xf]
          %v877 = vld [vmem:[#allocation8 + $0x10] sm:$0xf]
          %v878 = vld [vmem:[#allocation8 + $0x14] sm:$0xf]
          %v879 = vld [vmem:[#allocation8 + $0x18] sm:$0xf]
          %v880 = vld [vmem:[#allocation8 + $0x1c] sm:$0xf]
          %v881 = vld [vmem:[#allocation8 + $0x20] sm:$0xf]
          %v882 = vld [vmem:[#allocation8 + $0x24] sm:$0xf]
          %v883 = vld [vmem:[#allocation8 + $0x28] sm:$0xf]
          %v884 = vld [vmem:[#allocation8 + $0x2c] sm:$0xf]
          %v885 = vld [vmem:[#allocation8 + $0x30] sm:$0xf]
          %v886 = vld [vmem:[#allocation8 + $0x34] sm:$0xf]
          %v887 = vld [vmem:[#allocation8 + $0x38] sm:$0xf]
          %v888 = vld [vmem:[#allocation8 + $0x3c] sm:$0xf]
          %v889 = vld [vmem:[%s9] sm:$0x1]
          %v891 = vperm.slane %v889, 0
          %v894 = vunpack.c.l.b16 %v791
          %v895 = vpack.c.b16 %v894, %v894
          %v896 = vrot.slane %v895, 1
          %v914 = vunpack.c.l.b16 %v873
          %v915 = vunpack.c.l.b16 %v874
          %v916 = vunpack.c.l.b16 %v875
          %v917 = vunpack.c.l.b16 %v876
          %v918 = vunpack.c.l.b16 %v877
          %v919 = vunpack.c.l.b16 %v878
          %v920 = vunpack.c.l.b16 %v879
          %v921 = vunpack.c.l.b16 %v880
          %v922 = vunpack.c.l.b16 %v881
          %v923 = vunpack.c.l.b16 %v882
          %v924 = vunpack.c.l.b16 %v883
          %v925 = vunpack.c.l.b16 %v884
          %v926 = vunpack.c.l.b16 %v885
          %v927 = vunpack.c.l.b16 %v886
          %v928 = vunpack.c.l.b16 %v887
          %v929 = vunpack.c.l.b16 %v888
          %v930 = vpack.c.b16 %v915, %v914
          %v931 = vpack.c.b16 %v917, %v916
          %v932 = vpack.c.b16 %v919, %v918
          %v933 = vpack.c.b16 %v921, %v920
          %v934 = vpack.c.b16 %v923, %v922
          %v935 = vpack.c.b16 %v925, %v924
          %v936 = vpack.c.b16 %v927, %v926
          %v937 = vpack.c.b16 %v929, %v928
          %946 = vmatpush.bf16.msra.mxu0 %v937
          %947 = vmatpush.bf16.msra.mxu0 %v936
          %948 = vmatpush.bf16.msra.mxu0 %v935
          %949 = vmatpush.bf16.msra.mxu0 %v934
          %950 = vmatpush.bf16.msra.mxu0 %v933
          %951 = vmatpush.bf16.msra.mxu0 %v932
          %952 = vmatpush.bf16.msra.mxu0 %v931
          %953 = vmatpush.bf16.msra.mxu0 %v930
          %954 = vmatmul.bf16.gmra.mxu0 %v896
          %v955 = vpop.f32.mrf.mxu0
          %v956 = vadd.f32 %v891, %v955
          %v957 = vpop.f32.mrf.mxu0
          %958 = vdwg.mxu0
          %v960 = vrot.slane %v956, 6
          %vm962 = vcmask 1041408
          %v963 = vsel %vm962, %v870, %v960
          %964 = vst [vmem:[#allocation3] sm:$0xf] %v963
          %v965 = vld [vmem:[%s2] sm:$0xf]
          %v966 = vld [vmem:[%s2 + $0x4] sm:$0xf]
          %v967 = vld [vmem:[%s2 + $0x8] sm:$0xf]
          %v968 = vld [vmem:[%s2 + $0xc] sm:$0xf]
          %v969 = vld [vmem:[%s2 + $0x10] sm:$0xf]
          %v970 = vld [vmem:[%s2 + $0x14] sm:$0xf]
          %v971 = vld [vmem:[%s2 + $0x18] sm:$0xf]
          %v972 = vld [vmem:[%s2 + $0x1c] sm:$0xf]
          %v973 = vld [vmem:[%s2 + $0x20] sm:$0xf]
          %v974 = vld [vmem:[%s2 + $0x24] sm:$0xf]
          %v975 = vld [vmem:[%s2 + $0x28] sm:$0xf]
          %v976 = vld [vmem:[%s2 + $0x2c] sm:$0xf]
          %v977 = vld [vmem:[%s2 + $0x30] sm:$0xf]
          %v978 = vld [vmem:[%s2 + $0x34] sm:$0xf]
          %v979 = vld [vmem:[%s2 + $0x38] sm:$0xf]
          %v980 = vld [vmem:[%s2 + $0x3c] sm:$0xf]
          %v981 = vld [vmem:[%s3] sm:$0x1]
          %v983 = vperm.slane %v981, 0
          %v1001 = vunpack.c.l.b16 %v965
          %v1002 = vunpack.c.l.b16 %v966
          %v1003 = vunpack.c.l.b16 %v967
          %v1004 = vunpack.c.l.b16 %v968
          %v1005 = vunpack.c.l.b16 %v969
          %v1006 = vunpack.c.l.b16 %v970
          %v1007 = vunpack.c.l.b16 %v971
          %v1008 = vunpack.c.l.b16 %v972
          %v1009 = vunpack.c.l.b16 %v973
          %v1010 = vunpack.c.l.b16 %v974
          %v1011 = vunpack.c.l.b16 %v975
          %v1012 = vunpack.c.l.b16 %v976
          %v1013 = vunpack.c.l.b16 %v977
          %v1014 = vunpack.c.l.b16 %v978
          %v1015 = vunpack.c.l.b16 %v979
          %v1016 = vunpack.c.l.b16 %v980
          %v1017 = vpack.c.b16 %v1002, %v1001
          %v1018 = vpack.c.b16 %v1004, %v1003
          %v1019 = vpack.c.b16 %v1006, %v1005
          %v1020 = vpack.c.b16 %v1008, %v1007
          %v1021 = vpack.c.b16 %v1010, %v1009
          %v1022 = vpack.c.b16 %v1012, %v1011
          %v1023 = vpack.c.b16 %v1014, %v1013
          %v1024 = vpack.c.b16 %v1016, %v1015
          %1033 = vmatpush.bf16.msra.mxu0 %v1024
          %1034 = vmatpush.bf16.msra.mxu0 %v1023
          %1035 = vmatpush.bf16.msra.mxu0 %v1022
          %1036 = vmatpush.bf16.msra.mxu0 %v1021
          %1037 = vmatpush.bf16.msra.mxu0 %v1020
          %1038 = vmatpush.bf16.msra.mxu0 %v1019
          %1039 = vmatpush.bf16.msra.mxu0 %v1018
          %1040 = vmatpush.bf16.msra.mxu0 %v1017
          %1041 = vmatmul.bf16.gmra.mxu0 %v791
          %v1042 = vpop.f32.mrf.mxu0
          %v1043 = vadd.f32 %v983, %v1042
          %v1044 = vpop.f32.mrf.mxu0
          %1045 = vdwg.mxu0
          %v1046 = vld [vmem:[%s4] sm:$0xf]
          %v1047 = vld [vmem:[%s4 + $0x4] sm:$0xf]
          %v1048 = vld [vmem:[%s4 + $0x8] sm:$0xf]
          %v1049 = vld [vmem:[%s4 + $0xc] sm:$0xf]
          %v1050 = vld [vmem:[%s4 + $0x10] sm:$0xf]
          %v1051 = vld [vmem:[%s4 + $0x14] sm:$0xf]
          %v1052 = vld [vmem:[%s4 + $0x18] sm:$0xf]
          %v1053 = vld [vmem:[%s4 + $0x1c] sm:$0xf]
          %v1054 = vld [vmem:[%s4 + $0x20] sm:$0xf]
          %v1055 = vld [vmem:[%s4 + $0x24] sm:$0xf]
          %v1056 = vld [vmem:[%s4 + $0x28] sm:$0xf]
          %v1057 = vld [vmem:[%s4 + $0x2c] sm:$0xf]
          %v1058 = vld [vmem:[%s4 + $0x30] sm:$0xf]
          %v1059 = vld [vmem:[%s4 + $0x34] sm:$0xf]
          %v1060 = vld [vmem:[%s4 + $0x38] sm:$0xf]
          %v1061 = vld [vmem:[%s4 + $0x3c] sm:$0xf]
          %v1062 = vld [vmem:[%s5] sm:$0x1]
          %v1064 = vperm.slane %v1062, 0
          %v1082 = vunpack.c.l.b16 %v1046
          %v1083 = vunpack.c.l.b16 %v1047
          %v1084 = vunpack.c.l.b16 %v1048
          %v1085 = vunpack.c.l.b16 %v1049
          %v1086 = vunpack.c.l.b16 %v1050
          %v1087 = vunpack.c.l.b16 %v1051
          %v1088 = vunpack.c.l.b16 %v1052
          %v1089 = vunpack.c.l.b16 %v1053
          %v1090 = vunpack.c.l.b16 %v1054
          %v1091 = vunpack.c.l.b16 %v1055
          %v1092 = vunpack.c.l.b16 %v1056
          %v1093 = vunpack.c.l.b16 %v1057
          %v1094 = vunpack.c.l.b16 %v1058
          %v1095 = vunpack.c.l.b16 %v1059
          %v1096 = vunpack.c.l.b16 %v1060
          %v1097 = vunpack.c.l.b16 %v1061
          %v1098 = vpack.c.b16 %v1083, %v1082
          %v1099 = vpack.c.b16 %v1085, %v1084
          %v1100 = vpack.c.b16 %v1087, %v1086
          %v1101 = vpack.c.b16 %v1089, %v1088
          %v1102 = vpack.c.b16 %v1091, %v1090
          %v1103 = vpack.c.b16 %v1093, %v1092
          %v1104 = vpack.c.b16 %v1095, %v1094
          %v1105 = vpack.c.b16 %v1097, %v1096
          %1114 = vmatpush.bf16.msra.mxu0 %v1105
          %1115 = vmatpush.bf16.msra.mxu0 %v1104
          %1116 = vmatpush.bf16.msra.mxu0 %v1103
          %1117 = vmatpush.bf16.msra.mxu0 %v1102
          %1118 = vmatpush.bf16.msra.mxu0 %v1101
          %1119 = vmatpush.bf16.msra.mxu0 %v1100
          %1120 = vmatpush.bf16.msra.mxu0 %v1099
          %1121 = vmatpush.bf16.msra.mxu0 %v1098
          %1122 = vmatmul.bf16.gmra.mxu0 %v896
          %v1123 = vpop.f32.mrf.mxu0
          %v1124 = vadd.f32 %v1064, %v1123
          %v1125 = vpop.f32.mrf.mxu0
          %1126 = vdwg.mxu0
          %v1128 = vrot.slane %v1124, 6
          %v1130 = vsel %vm962, %v1043, %v1128
          %1131 = vst [vmem:[#allocation4] sm:$0xf] %v1130
          %vm1132 = vcmask 3072
          %1133 = vst.msk [vmem:[#allocation5] sm:$0xf] %vm1132, -1e+30
          %1134 = vst.msk [vmem:[#allocation6] sm:$0xf] %vm1132, 0.0
          %1135 = vst [vmem:[#allocation7] sm:$0xf] 0.0
        $region112: #{dla_forward.6} parent=87 // pred_fallthru
          _
        %p1136 = scmp.eq.s32.totalorder %s36, 1
        // Predicated region
        $region113: #{dla_forward.6} parent=87 // pred_check
          %p1137 = pneg %p1136
        $region114: #{dla_forward.6} parent=87 // pred_check_branch
          %1139 = sbr.rel (%p1137) target = $region116
        $region115: #{dla_forward.6} parent=87 // pred_region
          %v1140 = vld [vmem:[%s10] sm:$0xff]
          %v1141 = vld [vmem:[%s10 + $0x8] sm:$0xff]
          %v1142 = vld [vmem:[%s10 + $0x10] sm:$0xff]
          %v1143 = vld [vmem:[%s10 + $0x18] sm:$0xff]
          %v1144 = vld [vmem:[%s10 + $0x20] sm:$0xff]
          %v1145 = vld [vmem:[%s10 + $0x28] sm:$0xff]
          %v1146 = vld [vmem:[%s10 + $0x30] sm:$0xff]
          %v1147 = vld [vmem:[%s10 + $0x38] sm:$0xff]
          %v1148 = vld [vmem:[%s10 + $0x40] sm:$0xff]
          %v1149 = vld [vmem:[%s10 + $0x48] sm:$0xff]
          %v1150 = vld [vmem:[%s10 + $0x50] sm:$0xff]
          %v1151 = vld [vmem:[%s10 + $0x58] sm:$0xff]
          %v1152 = vld [vmem:[%s10 + $0x60] sm:$0xff]
          %v1153 = vld [vmem:[%s10 + $0x68] sm:$0xff]
          %v1154 = vld [vmem:[%s10 + $0x70] sm:$0xff]
          %v1155 = vld [vmem:[%s10 + $0x78] sm:$0xff]
          %v1156 = vld [vmem:[%s11] sm:$0x3]
          %v1158 = vperm.slane %v1156, 0
          %v1159 = vperm.slane %v1156, 1
          %v1178 = vunpack.c.l.b16 %v662
          %v1179 = vunpack.c.l.b16 %v663
          %v1180 = vunpack.c.l.b16 %v664
          %v1181 = vunpack.c.l.b16 %v665
          %v1182 = vunpack.c.l.b16 %v666
          %v1183 = vunpack.c.l.b16 %v667
          %v1184 = vunpack.c.l.b16 %v668
          %v1185 = vunpack.c.l.b16 %v669
          %v1186 = vunpack.c.l.b16 %v670
          %v1187 = vunpack.c.l.b16 %v671
          %v1188 = vunpack.c.l.b16 %v672
          %v1189 = vunpack.c.l.b16 %v673
          %v1190 = vunpack.c.l.b16 %v674
          %v1191 = vunpack.c.l.b16 %v675
          %v1192 = vunpack.c.l.b16 %v676
          %v1193 = vunpack.c.l.b16 %v677
          %v1194 = vpack.c.b16 %v1179, %v1178
          %v1195 = vpack.c.b16 %v1181, %v1180
          %v1196 = vpack.c.b16 %v1183, %v1182
          %v1197 = vpack.c.b16 %v1185, %v1184
          %v1198 = vpack.c.b16 %v1187, %v1186
          %v1199 = vpack.c.b16 %v1189, %v1188
          %v1200 = vpack.c.b16 %v1191, %v1190
          %v1201 = vpack.c.b16 %v1193, %v1192
          %v1226 = vunpack.c.l.b16 %v1140
          %v1227 = vunpack.c.h.b16 %v1140
          %v1228 = vunpack.c.l.b16 %v1141
          %v1229 = vunpack.c.h.b16 %v1141
          %v1230 = vunpack.c.l.b16 %v1142
          %v1231 = vunpack.c.h.b16 %v1142
          %v1232 = vunpack.c.l.b16 %v1143
          %v1233 = vunpack.c.h.b16 %v1143
          %v1234 = vunpack.c.l.b16 %v1144
          %v1235 = vunpack.c.h.b16 %v1144
          %v1236 = vunpack.c.l.b16 %v1145
          %v1237 = vunpack.c.h.b16 %v1145
          %v1238 = vunpack.c.l.b16 %v1146
          %v1239 = vunpack.c.h.b16 %v1146
          %v1240 = vunpack.c.l.b16 %v1147
          %v1241 = vunpack.c.h.b16 %v1147
          %v1242 = vunpack.c.l.b16 %v1148
          %v1243 = vunpack.c.h.b16 %v1148
          %v1244 = vunpack.c.l.b16 %v1149
          %v1245 = vunpack.c.h.b16 %v1149
          %v1246 = vunpack.c.l.b16 %v1150
          %v1247 = vunpack.c.h.b16 %v1150
          %v1248 = vunpack.c.l.b16 %v1151
          %v1249 = vunpack.c.h.b16 %v1151
          %v1250 = vunpack.c.l.b16 %v1152
          %v1251 = vunpack.c.h.b16 %v1152
          %v1252 = vunpack.c.l.b16 %v1153
          %v1253 = vunpack.c.h.b16 %v1153
          %v1254 = vunpack.c.l.b16 %v1154
          %v1255 = vunpack.c.h.b16 %v1154
          %v1256 = vunpack.c.l.b16 %v1155
          %v1257 = vunpack.c.h.b16 %v1155
          %v1258 = vpack.c.b16 %v1228, %v1226
          %v1259 = vpack.c.b16 %v1229, %v1227
          %v1260 = vpack.c.b16 %v1232, %v1230
          %v1261 = vpack.c.b16 %v1233, %v1231
          %v1262 = vpack.c.b16 %v1236, %v1234
          %v1263 = vpack.c.b16 %v1237, %v1235
          %v1264 = vpack.c.b16 %v1240, %v1238
          %v1265 = vpack.c.b16 %v1241, %v1239
          %v1266 = vpack.c.b16 %v1244, %v1242
          %v1267 = vpack.c.b16 %v1245, %v1243
          %v1268 = vpack.c.b16 %v1248, %v1246
          %v1269 = vpack.c.b16 %v1249, %v1247
          %v1270 = vpack.c.b16 %v1252, %v1250
          %v1271 = vpack.c.b16 %v1253, %v1251
          %v1272 = vpack.c.b16 %v1256, %v1254
          %v1273 = vpack.c.b16 %v1257, %v1255
          %1290 = vmatpush.bf16.msra.mxu0 %v1272
          %1291 = vmatpush.bf16.msra.mxu0 %v1270
          %1292 = vmatpush.bf16.msra.mxu0 %v1268
          %1293 = vmatpush.bf16.msra.mxu0 %v1266
          %1294 = vmatpush.bf16.msra.mxu0 %v1264
          %1295 = vmatpush.bf16.msra.mxu0 %v1262
          %1296 = vmatpush.bf16.msra.mxu0 %v1260
          %1297 = vmatpush.bf16.msra.mxu0 %v1258
          %1298 = vmatmul.bf16.gmra.mxu0 %v1194
          %v1299 = vpop.f32.mrf.mxu0
          %v1300 = vadd.f32 %v1158, %v1299
          %v1301 = vpop.f32.mrf.mxu0
          %v1302 = vadd.f32 %v1158, %v1301
          %1303 = vmatmul.bf16.gmra.mxu0 %v1195
          %v1304 = vpop.f32.mrf.mxu0
          %v1305 = vadd.f32 %v1158, %v1304
          %v1306 = vpop.f32.mrf.mxu0
          %v1307 = vadd.f32 %v1158, %v1306
          %1308 = vmatmul.bf16.gmra.mxu0 %v1196
          %v1309 = vpop.f32.mrf.mxu0
          %v1310 = vadd.f32 %v1158, %v1309
          %v1311 = vpop.f32.mrf.mxu0
          %v1312 = vadd.f32 %v1158, %v1311
          %1313 = vmatmul.bf16.gmra.mxu0 %v1197
          %v1314 = vpop.f32.mrf.mxu0
          %v1315 = vadd.f32 %v1158, %v1314
          %v1316 = vpop.f32.mrf.mxu0
          %v1317 = vadd.f32 %v1158, %v1316
          %1318 = vmatmul.bf16.gmra.mxu0 %v1198
          %v1319 = vpop.f32.mrf.mxu0
          %v1320 = vadd.f32 %v1158, %v1319
          %v1321 = vpop.f32.mrf.mxu0
          %v1322 = vadd.f32 %v1158, %v1321
          %1323 = vmatmul.bf16.gmra.mxu0 %v1199
          %v1324 = vpop.f32.mrf.mxu0
          %v1325 = vadd.f32 %v1158, %v1324
          %v1326 = vpop.f32.mrf.mxu0
          %v1327 = vadd.f32 %v1158, %v1326
          %1328 = vmatmul.bf16.gmra.mxu0 %v1200
          %v1329 = vpop.f32.mrf.mxu0
          %v1330 = vadd.f32 %v1158, %v1329
          %v1331 = vpop.f32.mrf.mxu0
          %v1332 = vadd.f32 %v1158, %v1331
          %1333 = vmatmul.bf16.gmra.mxu0 %v1201
          %v1334 = vpop.f32.mrf.mxu0
          %v1335 = vadd.f32 %v1158, %v1334
          %v1336 = vpop.f32.mrf.mxu0
          %v1337 = vadd.f32 %v1158, %v1336
          %1338 = vdwg.mxu0
          %1339 = vmatpush.bf16.msra.mxu0 %v1273
          %1340 = vmatpush.bf16.msra.mxu0 %v1271
          %1341 = vmatpush.bf16.msra.mxu0 %v1269
          %1342 = vmatpush.bf16.msra.mxu0 %v1267
          %1343 = vmatpush.bf16.msra.mxu0 %v1265
          %1344 = vmatpush.bf16.msra.mxu0 %v1263
          %1345 = vmatpush.bf16.msra.mxu0 %v1261
          %1346 = vmatpush.bf16.msra.mxu0 %v1259
          %1347 = vmatmul.bf16.gmra.mxu0 %v1194
          %v1348 = vpop.f32.mrf.mxu0
          %v1349 = vadd.f32 %v1159, %v1348
          %v1350 = vpop.f32.mrf.mxu0
          %v1351 = vadd.f32 %v1159, %v1350
          %1352 = vmatmul.bf16.gmra.mxu0 %v1195
          %v1353 = vpop.f32.mrf.mxu0
          %v1354 = vadd.f32 %v1159, %v1353
          %v1355 = vpop.f32.mrf.mxu0
          %v1356 = vadd.f32 %v1159, %v1355
          %1357 = vmatmul.bf16.gmra.mxu0 %v1196
          %v1358 = vpop.f32.mrf.mxu0
          %v1359 = vadd.f32 %v1159, %v1358
          %v1360 = vpop.f32.mrf.mxu0
          %v1361 = vadd.f32 %v1159, %v1360
          %1362 = vmatmul.bf16.gmra.mxu0 %v1197
          %v1363 = vpop.f32.mrf.mxu0
          %v1364 = vadd.f32 %v1159, %v1363
          %v1365 = vpop.f32.mrf.mxu0
          %v1366 = vadd.f32 %v1159, %v1365
          %1367 = vmatmul.bf16.gmra.mxu0 %v1198
          %v1368 = vpop.f32.mrf.mxu0
          %v1369 = vadd.f32 %v1159, %v1368
          %v1370 = vpop.f32.mrf.mxu0
          %v1371 = vadd.f32 %v1159, %v1370
          %1372 = vmatmul.bf16.gmra.mxu0 %v1199
          %v1373 = vpop.f32.mrf.mxu0
          %v1374 = vadd.f32 %v1159, %v1373
          %v1375 = vpop.f32.mrf.mxu0
          %v1376 = vadd.f32 %v1159, %v1375
          %1377 = vmatmul.bf16.gmra.mxu0 %v1200
          %v1378 = vpop.f32.mrf.mxu0
          %v1379 = vadd.f32 %v1159, %v1378
          %v1380 = vpop.f32.mrf.mxu0
          %v1381 = vadd.f32 %v1159, %v1380
          %1382 = vmatmul.bf16.gmra.mxu0 %v1201
          %v1383 = vpop.f32.mrf.mxu0
          %v1384 = vadd.f32 %v1159, %v1383
          %v1385 = vpop.f32.mrf.mxu0
          %v1386 = vadd.f32 %v1159, %v1385
          %1387 = vdwg.mxu0
          %v1388 = vld [vmem:[%s12] sm:$0xff]
          %v1389 = vld [vmem:[%s12 + $0x8] sm:$0xff]
          %v1390 = vld [vmem:[%s12 + $0x10] sm:$0xff]
          %v1391 = vld [vmem:[%s12 + $0x18] sm:$0xff]
          %v1392 = vld [vmem:[%s12 + $0x20] sm:$0xff]
          %v1393 = vld [vmem:[%s12 + $0x28] sm:$0xff]
          %v1394 = vld [vmem:[%s12 + $0x30] sm:$0xff]
          %v1395 = vld [vmem:[%s12 + $0x38] sm:$0xff]
          %v1396 = vld [vmem:[%s12 + $0x40] sm:$0xff]
          %v1397 = vld [vmem:[%s12 + $0x48] sm:$0xff]
          %v1398 = vld [vmem:[%s12 + $0x50] sm:$0xff]
          %v1399 = vld [vmem:[%s12 + $0x58] sm:$0xff]
          %v1400 = vld [vmem:[%s12 + $0x60] sm:$0xff]
          %v1401 = vld [vmem:[%s12 + $0x68] sm:$0xff]
          %v1402 = vld [vmem:[%s12 + $0x70] sm:$0xff]
          %v1403 = vld [vmem:[%s12 + $0x78] sm:$0xff]
          %v1404 = vld [vmem:[%s13] sm:$0x3]
          %v1406 = vperm.slane %v1404, 0
          %v1407 = vperm.slane %v1404, 1
          %v1426 = vunpack.c.l.b16 %v646
          %v1427 = vunpack.c.l.b16 %v647
          %v1428 = vunpack.c.l.b16 %v648
          %v1429 = vunpack.c.l.b16 %v649
          %v1430 = vunpack.c.l.b16 %v650
          %v1431 = vunpack.c.l.b16 %v651
          %v1432 = vunpack.c.l.b16 %v652
          %v1433 = vunpack.c.l.b16 %v653
          %v1434 = vunpack.c.l.b16 %v654
          %v1435 = vunpack.c.l.b16 %v655
          %v1436 = vunpack.c.l.b16 %v656
          %v1437 = vunpack.c.l.b16 %v657
          %v1438 = vunpack.c.l.b16 %v658
          %v1439 = vunpack.c.l.b16 %v659
          %v1440 = vunpack.c.l.b16 %v660
          %v1441 = vunpack.c.l.b16 %v661
          %v1442 = vpack.c.b16 %v1427, %v1426
          %v1443 = vpack.c.b16 %v1429, %v1428
          %v1444 = vpack.c.b16 %v1431, %v1430
          %v1445 = vpack.c.b16 %v1433, %v1432
          %v1446 = vpack.c.b16 %v1435, %v1434
          %v1447 = vpack.c.b16 %v1437, %v1436
          %v1448 = vpack.c.b16 %v1439, %v1438
          %v1449 = vpack.c.b16 %v1441, %v1440
          %v1474 = vunpack.c.l.b16 %v1388
          %v1475 = vunpack.c.h.b16 %v1388
          %v1476 = vunpack.c.l.b16 %v1389
          %v1477 = vunpack.c.h.b16 %v1389
          %v1478 = vunpack.c.l.b16 %v1390
          %v1479 = vunpack.c.h.b16 %v1390
          %v1480 = vunpack.c.l.b16 %v1391
          %v1481 = vunpack.c.h.b16 %v1391
          %v1482 = vunpack.c.l.b16 %v1392
          %v1483 = vunpack.c.h.b16 %v1392
          %v1484 = vunpack.c.l.b16 %v1393
          %v1485 = vunpack.c.h.b16 %v1393
          %v1486 = vunpack.c.l.b16 %v1394
          %v1487 = vunpack.c.h.b16 %v1394
          %v1488 = vunpack.c.l.b16 %v1395
          %v1489 = vunpack.c.h.b16 %v1395
          %v1490 = vunpack.c.l.b16 %v1396
          %v1491 = vunpack.c.h.b16 %v1396
          %v1492 = vunpack.c.l.b16 %v1397
          %v1493 = vunpack.c.h.b16 %v1397
          %v1494 = vunpack.c.l.b16 %v1398
          %v1495 = vunpack.c.h.b16 %v1398
          %v1496 = vunpack.c.l.b16 %v1399
          %v1497 = vunpack.c.h.b16 %v1399
          %v1498 = vunpack.c.l.b16 %v1400
          %v1499 = vunpack.c.h.b16 %v1400
          %v1500 = vunpack.c.l.b16 %v1401
          %v1501 = vunpack.c.h.b16 %v1401
          %v1502 = vunpack.c.l.b16 %v1402
          %v1503 = vunpack.c.h.b16 %v1402
          %v1504 = vunpack.c.l.b16 %v1403
          %v1505 = vunpack.c.h.b16 %v1403
          %v1506 = vpack.c.b16 %v1476, %v1474
          %v1507 = vpack.c.b16 %v1477, %v1475
          %v1508 = vpack.c.b16 %v1480, %v1478
          %v1509 = vpack.c.b16 %v1481, %v1479
          %v1510 = vpack.c.b16 %v1484, %v1482
          %v1511 = vpack.c.b16 %v1485, %v1483
          %v1512 = vpack.c.b16 %v1488, %v1486
          %v1513 = vpack.c.b16 %v1489, %v1487
          %v1514 = vpack.c.b16 %v1492, %v1490
          %v1515 = vpack.c.b16 %v1493, %v1491
          %v1516 = vpack.c.b16 %v1496, %v1494
          %v1517 = vpack.c.b16 %v1497, %v1495
          %v1518 = vpack.c.b16 %v1500, %v1498
          %v1519 = vpack.c.b16 %v1501, %v1499
          %v1520 = vpack.c.b16 %v1504, %v1502
          %v1521 = vpack.c.b16 %v1505, %v1503
          %1538 = vmatpush.bf16.msra.mxu0 %v1520
          %1539 = vmatpush.bf16.msra.mxu0 %v1518
          %1540 = vmatpush.bf16.msra.mxu0 %v1516
          %1541 = vmatpush.bf16.msra.mxu0 %v1514
          %1542 = vmatpush.bf16.msra.mxu0 %v1512
          %1543 = vmatpush.bf16.msra.mxu0 %v1510
          %1544 = vmatpush.bf16.msra.mxu0 %v1508
          %1545 = vmatpush.bf16.msra.mxu0 %v1506
          %1546 = vmatmul.bf16.gmra.mxu0 %v1442
          %v1547 = vpop.f32.mrf.mxu0
          %v1548 = vadd.f32 %v1406, %v1547
          %v1549 = vpop.f32.mrf.mxu0
          %v1550 = vadd.f32 %v1406, %v1549
          %1551 = vmatmul.bf16.gmra.mxu0 %v1443
          %v1552 = vpop.f32.mrf.mxu0
          %v1553 = vadd.f32 %v1406, %v1552
          %v1554 = vpop.f32.mrf.mxu0
          %v1555 = vadd.f32 %v1406, %v1554
          %1556 = vmatmul.bf16.gmra.mxu0 %v1444
          %v1557 = vpop.f32.mrf.mxu0
          %v1558 = vadd.f32 %v1406, %v1557
          %v1559 = vpop.f32.mrf.mxu0
          %v1560 = vadd.f32 %v1406, %v1559
          %1561 = vmatmul.bf16.gmra.mxu0 %v1445
          %v1562 = vpop.f32.mrf.mxu0
          %v1563 = vadd.f32 %v1406, %v1562
          %v1564 = vpop.f32.mrf.mxu0
          %v1565 = vadd.f32 %v1406, %v1564
          %1566 = vmatmul.bf16.gmra.mxu0 %v1446
          %v1567 = vpop.f32.mrf.mxu0
          %v1568 = vadd.f32 %v1406, %v1567
          %v1569 = vpop.f32.mrf.mxu0
          %v1570 = vadd.f32 %v1406, %v1569
          %1571 = vmatmul.bf16.gmra.mxu0 %v1447
          %v1572 = vpop.f32.mrf.mxu0
          %v1573 = vadd.f32 %v1406, %v1572
          %v1574 = vpop.f32.mrf.mxu0
          %v1575 = vadd.f32 %v1406, %v1574
          %1576 = vmatmul.bf16.gmra.mxu0 %v1448
          %v1577 = vpop.f32.mrf.mxu0
          %v1578 = vadd.f32 %v1406, %v1577
          %v1579 = vpop.f32.mrf.mxu0
          %v1580 = vadd.f32 %v1406, %v1579
          %1581 = vmatmul.bf16.gmra.mxu0 %v1449
          %v1582 = vpop.f32.mrf.mxu0
          %v1583 = vadd.f32 %v1406, %v1582
          %v1584 = vpop.f32.mrf.mxu0
          %v1585 = vadd.f32 %v1406, %v1584
          %1586 = vdwg.mxu0
          %1587 = vmatpush.bf16.msra.mxu0 %v1521
          %1588 = vmatpush.bf16.msra.mxu0 %v1519
          %1589 = vmatpush.bf16.msra.mxu0 %v1517
          %1590 = vmatpush.bf16.msra.mxu0 %v1515
          %1591 = vmatpush.bf16.msra.mxu0 %v1513
          %1592 = vmatpush.bf16.msra.mxu0 %v1511
          %1593 = vmatpush.bf16.msra.mxu0 %v1509
          %1594 = vmatpush.bf16.msra.mxu0 %v1507
          %1595 = vmatmul.bf16.gmra.mxu0 %v1442
          %v1596 = vpop.f32.mrf.mxu0
          %v1597 = vadd.f32 %v1407, %v1596
          %v1598 = vpop.f32.mrf.mxu0
          %v1599 = vadd.f32 %v1407, %v1598
          %1600 = vmatmul.bf16.gmra.mxu0 %v1443
          %v1601 = vpop.f32.mrf.mxu0
          %v1602 = vadd.f32 %v1407, %v1601
          %v1603 = vpop.f32.mrf.mxu0
          %v1604 = vadd.f32 %v1407, %v1603
          %1605 = vmatmul.bf16.gmra.mxu0 %v1444
          %v1606 = vpop.f32.mrf.mxu0
          %v1607 = vadd.f32 %v1407, %v1606
          %v1608 = vpop.f32.mrf.mxu0
          %v1609 = vadd.f32 %v1407, %v1608
          %1610 = vmatmul.bf16.gmra.mxu0 %v1445
          %v1611 = vpop.f32.mrf.mxu0
          %v1612 = vadd.f32 %v1407, %v1611
          %v1613 = vpop.f32.mrf.mxu0
          %v1614 = vadd.f32 %v1407, %v1613
          %1615 = vmatmul.bf16.gmra.mxu0 %v1446
          %v1616 = vpop.f32.mrf.mxu0
          %v1617 = vadd.f32 %v1407, %v1616
          %v1618 = vpop.f32.mrf.mxu0
          %v1619 = vadd.f32 %v1407, %v1618
          %1620 = vmatmul.bf16.gmra.mxu0 %v1447
          %v1621 = vpop.f32.mrf.mxu0
          %v1622 = vadd.f32 %v1407, %v1621
          %v1623 = vpop.f32.mrf.mxu0
          %v1624 = vadd.f32 %v1407, %v1623
          %1625 = vmatmul.bf16.gmra.mxu0 %v1448
          %v1626 = vpop.f32.mrf.mxu0
          %v1627 = vadd.f32 %v1407, %v1626
          %v1628 = vpop.f32.mrf.mxu0
          %v1629 = vadd.f32 %v1407, %v1628
          %1630 = vmatmul.bf16.gmra.mxu0 %v1449
          %v1631 = vpop.f32.mrf.mxu0
          %v1632 = vadd.f32 %v1407, %v1631
          %v1633 = vpop.f32.mrf.mxu0
          %v1634 = vadd.f32 %v1407, %v1633
          %1635 = vdwg.mxu0
          %v1636 = vld [vmem:[#allocation3] sm:$0xf]
          %v1637 = vpack.c.bf16 %v1636, %v1636
          %v1639 = vrot.slane %v1637, 3
          %vm1640 = vcmask 1040384
          %v1643 = vsel %vm1640, %v1637, %v1639
          %vm1645 = vcmask 1041409
          %v1646 = vsel %vm1645, %v1637, %v1639
          %v1648 = vrot.slane %v1646, 1
          %v1649 = vunpack.i.l.s16 %v1643
          %v1650 = vunpack.i.h.s16 %v1643
          %v1651 = vunpack.i.l.s16 %v1648
          %v1652 = vunpack.i.h.s16 %v1648
          %v1653 = vpack.c.bf16 %v1300, %v1300
          %v1654 = vpack.c.bf16 %v1302, %v1302
          %v1655 = vpack.c.bf16 %v1305, %v1305
          %v1656 = vpack.c.bf16 %v1307, %v1307
          %v1657 = vpack.c.bf16 %v1310, %v1310
          %v1658 = vpack.c.bf16 %v1312, %v1312
          %v1659 = vpack.c.bf16 %v1315, %v1315
          %v1660 = vpack.c.bf16 %v1317, %v1317
          %v1661 = vpack.c.bf16 %v1320, %v1320
          %v1662 = vpack.c.bf16 %v1322, %v1322
          %v1663 = vpack.c.bf16 %v1325, %v1325
          %v1664 = vpack.c.bf16 %v1327, %v1327
          %v1665 = vpack.c.bf16 %v1330, %v1330
          %v1666 = vpack.c.bf16 %v1332, %v1332
          %v1667 = vpack.c.bf16 %v1335, %v1335
          %v1668 = vpack.c.bf16 %v1337, %v1337
          %v1669 = vpack.c.bf16 %v1548, %v1548
          %v1670 = vpack.c.bf16 %v1550, %v1550
          %v1671 = vpack.c.bf16 %v1553, %v1553
          %v1672 = vpack.c.bf16 %v1555, %v1555
          %v1673 = vpack.c.bf16 %v1558, %v1558
          %v1674 = vpack.c.bf16 %v1560, %v1560
          %v1675 = vpack.c.bf16 %v1563, %v1563
          %v1676 = vpack.c.bf16 %v1565, %v1565
          %v1677 = vpack.c.bf16 %v1568, %v1568
          %v1678 = vpack.c.bf16 %v1570, %v1570
          %v1679 = vpack.c.bf16 %v1573, %v1573
          %v1680 = vpack.c.bf16 %v1575, %v1575
          %v1681 = vpack.c.bf16 %v1578, %v1578
          %v1682 = vpack.c.bf16 %v1580, %v1580
          %v1683 = vpack.c.bf16 %v1583, %v1583
          %v1684 = vpack.c.bf16 %v1585, %v1585
          %v1685 = vpack.i.b16 %v1649, %v1649
          %v1686 = vperm.slane %v1685, 0
          %v1696 = vunpack.c.l.b16 %v1653
          %v1697 = vunpack.c.l.b16 %v1654
          %v1698 = vunpack.c.l.b16 %v1655
          %v1699 = vunpack.c.l.b16 %v1656
          %v1700 = vunpack.c.l.b16 %v1657
          %v1701 = vunpack.c.l.b16 %v1658
          %v1702 = vunpack.c.l.b16 %v1659
          %v1703 = vunpack.c.l.b16 %v1660
          %v1704 = vpack.c.b16 %v1697, %v1696
          %v1705 = vpack.c.b16 %v1699, %v1698
          %v1706 = vpack.c.b16 %v1701, %v1700
          %v1707 = vpack.c.b16 %v1703, %v1702
          %1712 = vmatpush.bf16.xpose.msra.mxu0 0
          %1713 = vmatpush.bf16.xpose.msra.mxu0 0
          %1714 = vmatpush.bf16.xpose.msra.mxu0 0
          %1715 = vmatpush.bf16.xpose.msra.mxu0 0
          %1716 = vmatpush.bf16.xpose.msra.mxu0 %v1707
          %1717 = vmatpush.bf16.xpose.msra.mxu0 %v1706
          %1718 = vmatpush.bf16.xpose.msra.mxu0 %v1705
          %1719 = vmatpush.bf16.xpose.msra.mxu0 %v1704
          %1720 = vmatmul.bf16.gmra.mxu0 %v1686
          %v1721 = vpop.f32.mrf.mxu0
          %v1722 = vadd.f32 0.0, %v1721
          %v1723 = vpop.f32.mrf.mxu0
          %1724 = vdwg.mxu0
          %v1725 = vpack.i.b16 %v1650, %v1650
          %v1726 = vperm.slane %v1725, 0
          %v1736 = vunpack.c.l.b16 %v1661
          %v1737 = vunpack.c.l.b16 %v1662
          %v1738 = vunpack.c.l.b16 %v1663
          %v1739 = vunpack.c.l.b16 %v1664
          %v1740 = vunpack.c.l.b16 %v1665
          %v1741 = vunpack.c.l.b16 %v1666
          %v1742 = vunpack.c.l.b16 %v1667
          %v1743 = vunpack.c.l.b16 %v1668
          %v1744 = vpack.c.b16 %v1737, %v1736
          %v1745 = vpack.c.b16 %v1739, %v1738
          %v1746 = vpack.c.b16 %v1741, %v1740
          %v1747 = vpack.c.b16 %v1743, %v1742
          %1752 = vmatpush.bf16.xpose.msra.mxu0 0
          %1753 = vmatpush.bf16.xpose.msra.mxu0 0
          %1754 = vmatpush.bf16.xpose.msra.mxu0 0
          %1755 = vmatpush.bf16.xpose.msra.mxu0 0
          %1756 = vmatpush.bf16.xpose.msra.mxu0 %v1747
          %1757 = vmatpush.bf16.xpose.msra.mxu0 %v1746
          %1758 = vmatpush.bf16.xpose.msra.mxu0 %v1745
          %1759 = vmatpush.bf16.xpose.msra.mxu0 %v1744
          %1760 = vmatmul.bf16.gmra.mxu0 %v1726
          %v1761 = vpop.f32.mrf.mxu0
          %v1762 = vadd.f32 0.0, %v1761
          %v1763 = vpop.f32.mrf.mxu0
          %1764 = vdwg.mxu0
          %v1765 = vpack.i.b16 %v1651, %v1651
          %v1766 = vperm.slane %v1765, 0
          %v1776 = vunpack.c.l.b16 %v1669
          %v1777 = vunpack.c.l.b16 %v1670
          %v1778 = vunpack.c.l.b16 %v1671
          %v1779 = vunpack.c.l.b16 %v1672
          %v1780 = vunpack.c.l.b16 %v1673
          %v1781 = vunpack.c.l.b16 %v1674
          %v1782 = vunpack.c.l.b16 %v1675
          %v1783 = vunpack.c.l.b16 %v1676
          %v1784 = vpack.c.b16 %v1777, %v1776
          %v1785 = vpack.c.b16 %v1779, %v1778
          %v1786 = vpack.c.b16 %v1781, %v1780
          %v1787 = vpack.c.b16 %v1783, %v1782
          %1792 = vmatpush.bf16.xpose.msra.mxu0 0
          %1793 = vmatpush.bf16.xpose.msra.mxu0 0
          %1794 = vmatpush.bf16.xpose.msra.mxu0 0
          %1795 = vmatpush.bf16.xpose.msra.mxu0 0
          %1796 = vmatpush.bf16.xpose.msra.mxu0 %v1787
          %1797 = vmatpush.bf16.xpose.msra.mxu0 %v1786
          %1798 = vmatpush.bf16.xpose.msra.mxu0 %v1785
          %1799 = vmatpush.bf16.xpose.msra.mxu0 %v1784
          %1800 = vmatmul.bf16.gmra.mxu0 %v1766
          %v1801 = vpop.f32.mrf.mxu0
          %v1802 = vadd.f32 0.0, %v1801
          %v1803 = vpop.f32.mrf.mxu0
          %1804 = vdwg.mxu0
          %v1805 = vpack.i.b16 %v1652, %v1652
          %v1806 = vperm.slane %v1805, 0
          %v1816 = vunpack.c.l.b16 %v1677
          %v1817 = vunpack.c.l.b16 %v1678
          %v1818 = vunpack.c.l.b16 %v1679
          %v1819 = vunpack.c.l.b16 %v1680
          %v1820 = vunpack.c.l.b16 %v1681
          %v1821 = vunpack.c.l.b16 %v1682
          %v1822 = vunpack.c.l.b16 %v1683
          %v1823 = vunpack.c.l.b16 %v1684
          %v1824 = vpack.c.b16 %v1817, %v1816
          %v1825 = vpack.c.b16 %v1819, %v1818
          %v1826 = vpack.c.b16 %v1821, %v1820
          %v1827 = vpack.c.b16 %v1823, %v1822
          %1832 = vmatpush.bf16.xpose.msra.mxu0 0
          %1833 = vmatpush.bf16.xpose.msra.mxu0 0
          %1834 = vmatpush.bf16.xpose.msra.mxu0 0
          %1835 = vmatpush.bf16.xpose.msra.mxu0 0
          %1836 = vmatpush.bf16.xpose.msra.mxu0 %v1827
          %1837 = vmatpush.bf16.xpose.msra.mxu0 %v1826
          %1838 = vmatpush.bf16.xpose.msra.mxu0 %v1825
          %1839 = vmatpush.bf16.xpose.msra.mxu0 %v1824
          %1840 = vmatmul.bf16.gmra.mxu0 %v1806
          %v1841 = vpop.f32.mrf.mxu0
          %v1842 = vadd.f32 0.0, %v1841
          %v1843 = vpop.f32.mrf.mxu0
          %1844 = vdwg.mxu0
          %v1845 = vmul.f32 %v1722, 0.17677669
          %v1846 = vmul.f32 %v1762, 0.17677669
          %v1847 = vmul.f32 %v1802, 0.17677669
          %v1848 = vmul.f32 %v1842, 0.17677669
          %v1849 = vld [vmem:[#allocation5] sm:$0xf]
          %v1854 = vrot.slane %v1846, 7
          %v1855 = vsel %vm1645, %v1854, %v1845
          %v1856 = vrot.slane %v1847, 6
          %vm1857 = vcmask 1042434
          %v1858 = vsel %vm1857, %v1856, %v1855
          %v1859 = vrot.slane %v1848, 5
          %vm1860 = vcmask 1043459
          %v1861 = vsel %vm1860, %v1859, %v1858
          %vm1863 = vcmask 519168
          %v1864 = vsel %vm1863, %v1861, -inf
          %1865 = vmax.xlane.f32.xlu0 %v1864
          %v1866 = vpop.xlane.xlu0 %1865
          %v1867 = vmax.f32 %v1849, %v1866
          %v1868 = vsub.f32 %v1849, %v1867
          %v1869 = vmul.f32 %v1868, 1.442695
          %v1870 = vpow.pop %v1869
          %1872 = vset.pattern.permute.xlu0 0
          %1873 = vperm.xlu0 %1872, %v1867
          %v1874 = vpop.permute.xlu0 %1873
          %v1875 = vrot.slane %v1874, 1
          %v1876 = vrot.slane %v1874, 2
          %v1877 = vrot.slane %v1874, 3
          %v1882 = vsub.f32 %v1845, %v1874
          %v1883 = vsub.f32 %v1846, %v1875
          %v1884 = vsub.f32 %v1847, %v1876
          %v1885 = vsub.f32 %v1848, %v1877
          %v1886 = vmul.f32 %v1882, 1.442695
          %v1887 = vpow.pop %v1886
          %v1888 = vmul.f32 %v1883, 1.442695
          %v1889 = vpow.pop %v1888
          %v1890 = vmul.f32 %v1884, 1.442695
          %v1891 = vpow.pop %v1890
          %v1892 = vmul.f32 %v1885, 1.442695
          %v1893 = vpow.pop %v1892
          %v1894 = vld [vmem:[#allocation6] sm:$0xf]
          %v1895 = vmul.f32 %v1870, %v1894
          %v1900 = vrot.slane %v1889, 7
          %v1901 = vsel %vm1645, %v1900, %v1887
          %v1902 = vrot.slane %v1891, 6
          %v1903 = vsel %vm1857, %v1902, %v1901
          %v1904 = vrot.slane %v1893, 5
          %v1905 = vsel %vm1860, %v1904, %v1903
          %v1907 = vsel %vm1863, %v1905, 0.0
          %1908 = vadd.xlane.f32.xlu0 %v1907
          %v1909 = vpop.xlane.xlu0 %1908
          %v1910 = vadd.f32 %v1895, %v1909
          %vm1911 = vcmask 3072
          %1912 = vst.msk [vmem:[#allocation6] sm:$0xf] %vm1911, %v1910
          %v1913 = vpack.c.bf16 %v1887, %v1887
          %v1914 = vpack.c.bf16 %v1889, %v1889
          %v1915 = vpack.c.bf16 %v1891, %v1891
          %v1916 = vpack.c.bf16 %v1893, %v1893
          %v1917 = vpack.c.bf16 %v1349, %v1349
          %v1918 = vpack.c.bf16 %v1351, %v1351
          %v1919 = vpack.c.bf16 %v1354, %v1354
          %v1920 = vpack.c.bf16 %v1356, %v1356
          %v1921 = vpack.c.bf16 %v1359, %v1359
          %v1922 = vpack.c.bf16 %v1361, %v1361
          %v1923 = vpack.c.bf16 %v1364, %v1364
          %v1924 = vpack.c.bf16 %v1366, %v1366
          %v1925 = vpack.c.bf16 %v1369, %v1369
          %v1926 = vpack.c.bf16 %v1371, %v1371
          %v1927 = vpack.c.bf16 %v1374, %v1374
          %v1928 = vpack.c.bf16 %v1376, %v1376
          %v1929 = vpack.c.bf16 %v1379, %v1379
          %v1930 = vpack.c.bf16 %v1381, %v1381
          %v1931 = vpack.c.bf16 %v1384, %v1384
          %v1932 = vpack.c.bf16 %v1386, %v1386
          %v1933 = vpack.c.bf16 %v1597, %v1597
          %v1934 = vpack.c.bf16 %v1599, %v1599
          %v1935 = vpack.c.bf16 %v1602, %v1602
          %v1936 = vpack.c.bf16 %v1604, %v1604
          %v1937 = vpack.c.bf16 %v1607, %v1607
          %v1938 = vpack.c.bf16 %v1609, %v1609
          %v1939 = vpack.c.bf16 %v1612, %v1612
          %v1940 = vpack.c.bf16 %v1614, %v1614
          %v1941 = vpack.c.bf16 %v1617, %v1617
          %v1942 = vpack.c.bf16 %v1619, %v1619
          %v1943 = vpack.c.bf16 %v1622, %v1622
          %v1944 = vpack.c.bf16 %v1624, %v1624
          %v1945 = vpack.c.bf16 %v1627, %v1627
          %v1946 = vpack.c.bf16 %v1629, %v1629
          %v1947 = vpack.c.bf16 %v1632, %v1632
          %v1948 = vpack.c.bf16 %v1634, %v1634
          %v1957 = vunpack.c.l.b16 %v1917
          %v1958 = vunpack.c.l.b16 %v1918
          %v1959 = vunpack.c.l.b16 %v1919
          %v1960 = vunpack.c.l.b16 %v1920
          %v1961 = vunpack.c.l.b16 %v1921
          %v1962 = vunpack.c.l.b16 %v1922
          %v1963 = vunpack.c.l.b16 %v1923
          %v1964 = vunpack.c.l.b16 %v1924
          %v1965 = vpack.c.b16 %v1958, %v1957
          %v1966 = vpack.c.b16 %v1960, %v1959
          %v1967 = vpack.c.b16 %v1962, %v1961
          %v1968 = vpack.c.b16 %v1964, %v1963
          %vm1973 = vcmask 523264
          %v1975 = vsel %vm1973, %v1913, 0
          %1977 = vmatpush.bf16.msra.mxu0 0
          %1978 = vmatpush.bf16.msra.mxu0 0
          %1979 = vmatpush.bf16.msra.mxu0 0
          %1980 = vmatpush.bf16.msra.mxu0 0
          %1981 = vmatpush.bf16.msra.mxu0 %v1968
          %1982 = vmatpush.bf16.msra.mxu0 %v1967
          %1983 = vmatpush.bf16.msra.mxu0 %v1966
          %1984 = vmatpush.bf16.msra.mxu0 %v1965
          %1985 = vmatmul.bf16.gmra.mxu0 %v1975
          %v1986 = vpop.f32.mrf.mxu0
          %v1987 = vadd.f32 0.0, %v1986
          %v1988 = vpop.f32.mrf.mxu0
          %1989 = vdwg.mxu0
          %v1998 = vunpack.c.l.b16 %v1925
          %v1999 = vunpack.c.l.b16 %v1926
          %v2000 = vunpack.c.l.b16 %v1927
          %v2001 = vunpack.c.l.b16 %v1928
          %v2002 = vunpack.c.l.b16 %v1929
          %v2003 = vunpack.c.l.b16 %v1930
          %v2004 = vunpack.c.l.b16 %v1931
          %v2005 = vunpack.c.l.b16 %v1932
          %v2006 = vpack.c.b16 %v1999, %v1998
          %v2007 = vpack.c.b16 %v2001, %v2000
          %v2008 = vpack.c.b16 %v2003, %v2002
          %v2009 = vpack.c.b16 %v2005, %v2004
          %v2015 = vsel %vm1973, %v1914, 0
          %2017 = vmatpush.bf16.msra.mxu0 0
          %2018 = vmatpush.bf16.msra.mxu0 0
          %2019 = vmatpush.bf16.msra.mxu0 0
          %2020 = vmatpush.bf16.msra.mxu0 0
          %2021 = vmatpush.bf16.msra.mxu0 %v2009
          %2022 = vmatpush.bf16.msra.mxu0 %v2008
          %2023 = vmatpush.bf16.msra.mxu0 %v2007
          %2024 = vmatpush.bf16.msra.mxu0 %v2006
          %2025 = vmatmul.bf16.gmra.mxu0 %v2015
          %v2026 = vpop.f32.mrf.mxu0
          %v2027 = vadd.f32 0.0, %v2026
          %v2028 = vpop.f32.mrf.mxu0
          %2029 = vdwg.mxu0
          %v2038 = vunpack.c.l.b16 %v1933
          %v2039 = vunpack.c.l.b16 %v1934
          %v2040 = vunpack.c.l.b16 %v1935
          %v2041 = vunpack.c.l.b16 %v1936
          %v2042 = vunpack.c.l.b16 %v1937
          %v2043 = vunpack.c.l.b16 %v1938
          %v2044 = vunpack.c.l.b16 %v1939
          %v2045 = vunpack.c.l.b16 %v1940
          %v2046 = vpack.c.b16 %v2039, %v2038
          %v2047 = vpack.c.b16 %v2041, %v2040
          %v2048 = vpack.c.b16 %v2043, %v2042
          %v2049 = vpack.c.b16 %v2045, %v2044
          %v2055 = vsel %vm1973, %v1915, 0
          %2057 = vmatpush.bf16.msra.mxu0 0
          %2058 = vmatpush.bf16.msra.mxu0 0
          %2059 = vmatpush.bf16.msra.mxu0 0
          %2060 = vmatpush.bf16.msra.mxu0 0
          %2061 = vmatpush.bf16.msra.mxu0 %v2049
          %2062 = vmatpush.bf16.msra.mxu0 %v2048
          %2063 = vmatpush.bf16.msra.mxu0 %v2047
          %2064 = vmatpush.bf16.msra.mxu0 %v2046
          %2065 = vmatmul.bf16.gmra.mxu0 %v2055
          %v2066 = vpop.f32.mrf.mxu0
          %v2067 = vadd.f32 0.0, %v2066
          %v2068 = vpop.f32.mrf.mxu0
          %2069 = vdwg.mxu0
          %v2078 = vunpack.c.l.b16 %v1941
          %v2079 = vunpack.c.l.b16 %v1942
          %v2080 = vunpack.c.l.b16 %v1943
          %v2081 = vunpack.c.l.b16 %v1944
          %v2082 = vunpack.c.l.b16 %v1945
          %v2083 = vunpack.c.l.b16 %v1946
          %v2084 = vunpack.c.l.b16 %v1947
          %v2085 = vunpack.c.l.b16 %v1948
          %v2086 = vpack.c.b16 %v2079, %v2078
          %v2087 = vpack.c.b16 %v2081, %v2080
          %v2088 = vpack.c.b16 %v2083, %v2082
          %v2089 = vpack.c.b16 %v2085, %v2084
          %v2095 = vsel %vm1973, %v1916, 0
          %2097 = vmatpush.bf16.msra.mxu0 0
          %2098 = vmatpush.bf16.msra.mxu0 0
          %2099 = vmatpush.bf16.msra.mxu0 0
          %2100 = vmatpush.bf16.msra.mxu0 0
          %2101 = vmatpush.bf16.msra.mxu0 %v2089
          %2102 = vmatpush.bf16.msra.mxu0 %v2088
          %2103 = vmatpush.bf16.msra.mxu0 %v2087
          %2104 = vmatpush.bf16.msra.mxu0 %v2086
          %2105 = vmatmul.bf16.gmra.mxu0 %v2095
          %v2106 = vpop.f32.mrf.mxu0
          %v2107 = vadd.f32 0.0, %v2106
          %v2108 = vpop.f32.mrf.mxu0
          %2109 = vdwg.mxu0
          %v2110 = vld [vmem:[#allocation7] sm:$0xf]
          %2112 = vset.pattern.permute.xlu0 0
          %2113 = vperm.xlu0 %2112, %v1870
          %v2114 = vpop.permute.xlu0 %2113
          %v2116 = vmul.f32 %v2114, %v2110
          %v2121 = vrot.slane %v2027, 7
          %v2122 = vsel %vm1645, %v2121, %v1987
          %v2123 = vrot.slane %v2067, 6
          %v2124 = vsel %vm1857, %v2123, %v2122
          %v2125 = vrot.slane %v2107, 5
          %v2126 = vsel %vm1860, %v2125, %v2124
          %v2128 = vadd.f32 %v2116, %v2126
          %2129 = vst [vmem:[#allocation7] sm:$0xf] %v2128
          %2130 = vst.msk [vmem:[#allocation5] sm:$0xf] %vm1911, %v1867
        $region116: #{dla_forward.6} parent=87 // pred_fallthru
          _
        %p2131 = pnand %p1136, %p679
        %p2132 = pneg %p2131
        // Predicated region
        $region117: #{dla_forward.6} parent=87 // pred_check
          _
        $region118: #{dla_forward.6} parent=87 // pred_check_branch
          %2134 = sbr.rel (%p2131) target = $region120
        $region119: #{dla_forward.6} parent=87 // pred_region
          %v2135 = vld [vmem:[#allocation7] sm:$0xf]
          %v2136 = vld [vmem:[#allocation6] sm:$0xf]
          %v2137 = vrcp.pop %v2136
          %2139 = vset.pattern.permute.xlu0 0
          %2140 = vperm.xlu0 %2139, %v2137
          %v2141 = vpop.permute.xlu0 %2140
          %v2143 = vmul.f32 %v2135, %v2141
          %v2144 = vld [vmem:[#allocation4] sm:$0xf]
          %v2145 = vpack.c.bf16 %v2144, %v2144
          %v2146 = vld [vmem:[#allocation10] sm:$0xf]
          %v2147 = vld [vmem:[#allocation10 + $0x4] sm:$0xf]
          %v2148 = vld [vmem:[#allocation10 + $0x8] sm:$0xf]
          %v2149 = vld [vmem:[#allocation10 + $0xc] sm:$0xf]
          %v2150 = vld [vmem:[#allocation10 + $0x10] sm:$0xf]
          %v2151 = vld [vmem:[#allocation10 + $0x14] sm:$0xf]
          %v2152 = vld [vmem:[#allocation10 + $0x18] sm:$0xf]
          %v2153 = vld [vmem:[#allocation10 + $0x1c] sm:$0xf]
          %v2154 = vld [vmem:[#allocation10 + $0x20] sm:$0xf]
          %v2155 = vld [vmem:[#allocation10 + $0x24] sm:$0xf]
          %v2156 = vld [vmem:[#allocation10 + $0x28] sm:$0xf]
          %v2157 = vld [vmem:[#allocation10 + $0x2c] sm:$0xf]
          %v2158 = vld [vmem:[#allocation10 + $0x30] sm:$0xf]
          %v2159 = vld [vmem:[#allocation10 + $0x34] sm:$0xf]
          %v2160 = vld [vmem:[#allocation10 + $0x38] sm:$0xf]
          %v2161 = vld [vmem:[#allocation10 + $0x3c] sm:$0xf]
          %v2162 = vpack.c.bf16 %v2143, %v2143
          %v2163 = vld [vmem:[#allocation12] sm:$0xf]
          %v2164 = vld [vmem:[#allocation12 + $0x4] sm:$0xf]
          %v2165 = vld [vmem:[#allocation12 + $0x8] sm:$0xf]
          %v2166 = vld [vmem:[#allocation12 + $0xc] sm:$0xf]
          %v2167 = vld [vmem:[#allocation12 + $0x10] sm:$0xf]
          %v2168 = vld [vmem:[#allocation12 + $0x14] sm:$0xf]
          %v2169 = vld [vmem:[#allocation12 + $0x18] sm:$0xf]
          %v2170 = vld [vmem:[#allocation12 + $0x1c] sm:$0xf]
          %v2171 = vld [vmem:[#allocation12 + $0x20] sm:$0xf]
          %v2172 = vld [vmem:[#allocation12 + $0x24] sm:$0xf]
          %v2173 = vld [vmem:[#allocation12 + $0x28] sm:$0xf]
          %v2174 = vld [vmem:[#allocation12 + $0x2c] sm:$0xf]
          %v2175 = vld [vmem:[#allocation12 + $0x30] sm:$0xf]
          %v2176 = vld [vmem:[#allocation12 + $0x34] sm:$0xf]
          %v2177 = vld [vmem:[#allocation12 + $0x38] sm:$0xf]
          %v2178 = vld [vmem:[#allocation12 + $0x3c] sm:$0xf]
          %v2195 = vunpack.c.l.b16 %v2163
          %v2196 = vunpack.c.l.b16 %v2164
          %v2197 = vunpack.c.l.b16 %v2165
          %v2198 = vunpack.c.l.b16 %v2166
          %v2199 = vunpack.c.l.b16 %v2167
          %v2200 = vunpack.c.l.b16 %v2168
          %v2201 = vunpack.c.l.b16 %v2169
          %v2202 = vunpack.c.l.b16 %v2170
          %v2203 = vunpack.c.l.b16 %v2171
          %v2204 = vunpack.c.l.b16 %v2172
          %v2205 = vunpack.c.l.b16 %v2173
          %v2206 = vunpack.c.l.b16 %v2174
          %v2207 = vunpack.c.l.b16 %v2175
          %v2208 = vunpack.c.l.b16 %v2176
          %v2209 = vunpack.c.l.b16 %v2177
          %v2210 = vunpack.c.l.b16 %v2178
          %v2211 = vpack.c.b16 %v2196, %v2195
          %v2212 = vpack.c.b16 %v2198, %v2197
          %v2213 = vpack.c.b16 %v2200, %v2199
          %v2214 = vpack.c.b16 %v2202, %v2201
          %v2215 = vpack.c.b16 %v2204, %v2203
          %v2216 = vpack.c.b16 %v2206, %v2205
          %v2217 = vpack.c.b16 %v2208, %v2207
          %v2218 = vpack.c.b16 %v2210, %v2209
          %2227 = vmatpush.bf16.msra.mxu0 %v2218
          %2228 = vmatpush.bf16.msra.mxu0 %v2217
          %2229 = vmatpush.bf16.msra.mxu0 %v2216
          %2230 = vmatpush.bf16.msra.mxu0 %v2215
          %2231 = vmatpush.bf16.msra.mxu0 %v2214
          %2232 = vmatpush.bf16.msra.mxu0 %v2213
          %2233 = vmatpush.bf16.msra.mxu0 %v2212
          %2234 = vmatpush.bf16.msra.mxu0 %v2211
          %2235 = vmatmul.bf16.gmra.mxu0 %v2162
          %v2236 = vpop.f32.mrf.mxu0
          %v2237 = vadd.f32 0.0, %v2236
          %v2238 = vpop.f32.mrf.mxu0
          %2239 = vdwg.mxu0
          %v2256 = vunpack.c.l.b16 %v2146
          %v2257 = vunpack.c.l.b16 %v2147
          %v2258 = vunpack.c.l.b16 %v2148
          %v2259 = vunpack.c.l.b16 %v2149
          %v2260 = vunpack.c.l.b16 %v2150
          %v2261 = vunpack.c.l.b16 %v2151
          %v2262 = vunpack.c.l.b16 %v2152
          %v2263 = vunpack.c.l.b16 %v2153
          %v2264 = vunpack.c.l.b16 %v2154
          %v2265 = vunpack.c.l.b16 %v2155
          %v2266 = vunpack.c.l.b16 %v2156
          %v2267 = vunpack.c.l.b16 %v2157
          %v2268 = vunpack.c.l.b16 %v2158
          %v2269 = vunpack.c.l.b16 %v2159
          %v2270 = vunpack.c.l.b16 %v2160
          %v2271 = vunpack.c.l.b16 %v2161
          %v2272 = vpack.c.b16 %v2257, %v2256
          %v2273 = vpack.c.b16 %v2259, %v2258
          %v2274 = vpack.c.b16 %v2261, %v2260
          %v2275 = vpack.c.b16 %v2263, %v2262
          %v2276 = vpack.c.b16 %v2265, %v2264
          %v2277 = vpack.c.b16 %v2267, %v2266
          %v2278 = vpack.c.b16 %v2269, %v2268
          %v2279 = vpack.c.b16 %v2271, %v2270
          %2288 = vmatpush.bf16.msra.mxu0 %v2279
          %2289 = vmatpush.bf16.msra.mxu0 %v2278
          %2290 = vmatpush.bf16.msra.mxu0 %v2277
          %2291 = vmatpush.bf16.msra.mxu0 %v2276
          %2292 = vmatpush.bf16.msra.mxu0 %v2275
          %2293 = vmatpush.bf16.msra.mxu0 %v2274
          %2294 = vmatpush.bf16.msra.mxu0 %v2273
          %2295 = vmatpush.bf16.msra.mxu0 %v2272
          %2296 = vmatmul.bf16.gmra.mxu0 %v2145
          %v2297 = vpop.f32.mrf.mxu0
          %v2298 = vadd.f32 %v2237, %v2297
          %v2299 = vpop.f32.mrf.mxu0
          %2300 = vdwg.mxu0
          %v2301 = vld [vmem:[%s16] sm:$0x1]
          %v2303 = vperm.slane %v2301, 0
          %v2305 = vadd.f32 %v2298, %v2303
          %vm2306 = vcmask 1043456
          %v2307 = vsel %vm2306, %v2305, 0.0
          %v2308 = vsel %vm2306, %v2143, 0.0
          %2309 = vst [vmem:[%s17] sm:$0xff] %v2307
          %2310 = vst [vmem:[%s18] sm:$0xff] %v2308
        $region120: #{dla_forward.6} parent=87 // pred_fallthru
          _
        // Predicated region
        $region121: #{dla_forward.6} parent=87 // pred_check
          %p2311 = pneg %p424
        $region122: #{dla_forward.6} parent=87 // pred_check_branch
          %2313 = sbr.rel (%p2311) target = $region124
        $region123: #{dla_forward.6} parent=87 // pred_region
          _
        $region124: #{dla_forward.6} parent=87 // pred_fallthru
          _
        // Predicated region
        $region125: #{dla_forward.6} parent=87 // pred_check
          %p2314 = pneg %p445
        $region126: #{dla_forward.6} parent=87 // pred_check_branch
          %2316 = sbr.rel (%p2314) target = $region128
        $region127: #{dla_forward.6} parent=87 // pred_region
          _
        $region128: #{dla_forward.6} parent=87 // pred_fallthru
          _
        // Predicated region
        $region129: #{dla_forward.6} parent=87 // pred_check
          %p2317 = pneg %p424
        $region130: #{dla_forward.6} parent=87 // pred_check_branch
          %2319 = sbr.rel (%p2317) target = $region132
        $region131: #{dla_forward.6} parent=87 // pred_region
          _
        $region132: #{dla_forward.6} parent=87 // pred_fallthru
          _
        // Predicated region
        $region133: #{dla_forward.6} parent=87 // pred_check
          %p2320 = pneg %p445
        $region134: #{dla_forward.6} parent=87 // pred_check_branch
          %2322 = sbr.rel (%p2320) target = $region136
        $region135: #{dla_forward.6} parent=87 // pred_region
          _
        $region136: #{dla_forward.6} parent=87 // pred_fallthru
          _
      $region88: #{dla_forward.6} parent=5 // pred_fallthru
        _
      %p2323 = scmp.le.s32.totalorder 2, %s27
      // Predicated region
      $region137: #{dla_forward.6} parent=5 // pred_check
        %p2324 = pneg %p2323
      $region138: #{dla_forward.6} parent=5 // pred_check_branch
        %2326 = sbr.rel (%p2324) target = $region140
      $region139: #{dla_forward.6} parent=5 // pred_region
        %s2327 = ssub.s32 %s27, 2
      $region140: #{dla_forward.6} parent=5 // pred_fallthru
        _
    $region6: #{dla_forward.6} parent=1 // loop_footer
      %s31 = sadd.s32 1, %s27
    $region7: #{dla_forward.6} parent=1 // loop_footer_branch
      %26 = sbr.rel target = $region3
    $region8: #{dla_forward.6} parent=1 // loop_exit
      _
    %2328 = vsyncpa [#allocation9], 1
    %s2329 = scalar_lea.sflag [#allocation9], 1
    %2330 = vsyncpa %s2329, 1
    %2331 = vsyncpa [#allocation11], 1

</llo_original>
